<compile_context>
chip_gen: v7x
topology: tpu7x:2x2x1
jax: 0.10.0
libtpu: 0.0.40
codegen_flags: <defaults>
</compile_context>

<pallas_src>
import jax
import jax.numpy as jnp
from jax.experimental import pallas as pl
from jax.experimental.pallas import tpu as pltpu

CLASS_SIZE = 10
IN_FEATURES = 28 * 28          # 784 (used as a full-extent K block; no padding)
HIDDEN = 512
OUT_PAD = 128                  # lane-dense padded output width (>= CLASS_SIZE)
TM_MAX = 1024                  # max batch tile (multiple of 256)


def _round_up(x, m):
    return ((x + m - 1) // m) * m


def _pick_tm(batch):
    """Batch tile: big enough to amortize per-step overhead, small enough that the
    batch grid has >= 4 steps (>= 2 per TensorCore on v7x) when B is large."""
    if batch <= TM_MAX:
        return _round_up(batch, 16)          # bf16 packs 2 rows/sublane -> 16-row align
    return min(TM_MAX, _round_up(pl.cdiv(batch, 4), 256))


def mlp_kernel(x_ref, w1_ref, b1_ref, w2_ref, b2_ref, w3_ref, b3_ref,
               w4_ref, b4_ref, out_ref):
    """Fused 4-layer MLP forward: (Linear+ReLU) x3 -> Linear.

    x_ref: [TM, 784] f32 (cast to bf16 in-body), weights bf16 (resident in VMEM),
    biases f32, out f32 [TM, OUT_PAD].  MXU operands bf16, accumulation f32;
    bias adds / ReLU stay f32 on the VPU.
    """
    x = x_ref[...].astype(jnp.bfloat16)

    h = jnp.dot(x, w1_ref[...], preferred_element_type=jnp.float32) + b1_ref[...]
    h = jnp.maximum(h, 0.0)

    h = jnp.dot(h.astype(jnp.bfloat16), w2_ref[...],
                preferred_element_type=jnp.float32) + b2_ref[...]
    h = jnp.maximum(h, 0.0)

    h = jnp.dot(h.astype(jnp.bfloat16), w3_ref[...],
                preferred_element_type=jnp.float32) + b3_ref[...]
    h = jnp.maximum(h, 0.0)

    logits = jnp.dot(h.astype(jnp.bfloat16), w4_ref[...],
                     preferred_element_type=jnp.float32) + b4_ref[...]
    out_ref[...] = logits  # lane-dense [TM, 128] f32 store


def medium_mlp_forward(x_nchw, kernel_params):
    """x_nchw: [B, 1, 28, 28] float32 -> logits [B, CLASS_SIZE] float32."""
    B = x_nchw.shape[0]
    x_flat = x_nchw.reshape(B, -1).astype(jnp.float32)   # nn.Flatten: [B, 784]
    assert x_flat.shape[1] == IN_FEATURES

    TM = _pick_tm(B)
    B_pad = _round_up(B, TM)
    if B_pad != B:
        # Padded rows are independent (row-wise MLP) and sliced off below.
        x_flat = jnp.pad(x_flat, ((0, B_pad - B), (0, 0)))

    w1, b1, w2, b2, w3, b3, w4, b4 = kernel_params

    # x / out tiles stream over the batch grid; weights/biases have a constant
    # block index so they stay resident in VMEM across all grid steps.
    x_spec = pl.BlockSpec((TM, IN_FEATURES), lambda i: (i, 0))
    out_spec = pl.BlockSpec((TM, OUT_PAD), lambda i: (i, 0))

    def _resident(shape):
        return pl.BlockSpec(shape, lambda i: (0, 0))

    grid = (B_pad // TM,)

    flops = 2 * B_pad * (IN_FEATURES * HIDDEN + 2 * HIDDEN * HIDDEN + HIDDEN * OUT_PAD)
    weight_bytes = 2 * (IN_FEATURES * HIDDEN + 2 * HIDDEN * HIDDEN + HIDDEN * OUT_PAD) \
        + 4 * (3 * HIDDEN + OUT_PAD)
    bytes_accessed = B_pad * (IN_FEATURES * 4 + OUT_PAD * 4) + weight_bytes

    out = pl.pallas_call(
        mlp_kernel,
        out_shape=jax.ShapeDtypeStruct((B_pad, OUT_PAD), jnp.float32),
        grid=grid,
        in_specs=[
            x_spec,
            _resident((IN_FEATURES, HIDDEN)), _resident((1, HIDDEN)),
            _resident((HIDDEN, HIDDEN)), _resident((1, HIDDEN)),
            _resident((HIDDEN, HIDDEN)), _resident((1, HIDDEN)),
            _resident((HIDDEN, OUT_PAD)), _resident((1, OUT_PAD)),
        ],
        out_specs=out_spec,
        compiler_params=pltpu.CompilerParams(
            dimension_semantics=("parallel",),
            vmem_limit_bytes=48 * 1024 * 1024),
        cost_estimate=pl.CostEstimate(
            flops=flops, transcendentals=0, bytes_accessed=bytes_accessed),
    )(x_flat, w1, b1, w2, b2, w3, b3, w4, b4)

    return out[:B, :CLASS_SIZE]


def init_params(key):
    """Deterministic init mimicking PyTorch's default (uniform +/- 1/sqrt(fan_in)).

    Returns logical-shape f32 params; weights transposed vs. PyTorch
    ([in_features, out_features]), biases [1, out_features].
    """
    dims = [(IN_FEATURES, HIDDEN), (HIDDEN, HIDDEN), (HIDDEN, HIDDEN), (HIDDEN, CLASS_SIZE)]
    params = []
    for (fan_in, fan_out) in dims:
        key, kw, kb = jax.random.split(key, 3)
        bound = 1.0 / jnp.sqrt(jnp.float32(fan_in))
        w = jax.random.uniform(kw, (fan_in, fan_out), jnp.float32, -bound, bound)
        b = jax.random.uniform(kb, (1, fan_out), jnp.float32, -bound, bound)
        params.extend([w, b])
    return params


def prepare_kernel_params(params):
    """Pad w4/b4 output dim with zeros to OUT_PAD and cast weights to bf16.

    Biases stay f32 (added post-accumulation on the VPU).  Zero weight columns +
    zero bias in the padded logit slots can't contaminate the real classes.
    """
    w1, b1, w2, b2, w3, b3, w4, b4 = params
    w4p = jnp.pad(w4, ((0, 0), (0, OUT_PAD - CLASS_SIZE)))
    b4p = jnp.pad(b4, ((0, 0), (0, OUT_PAD - CLASS_SIZE)))
    return (
        w1.astype(jnp.bfloat16), b1,
        w2.astype(jnp.bfloat16), b2,
        w3.astype(jnp.bfloat16), b3,
        w4p.astype(jnp.bfloat16), b4p,
    )


if __name__ == "__main__":
    key = jax.random.PRNGKey(0)
    key, kx = jax.random.split(key)

    B = 16  # small batch, multiple of 16 -> no batch padding, no sublane masking
    x = jax.random.normal(kx, (B, 1, 28, 28), jnp.float32)  # NCHW image input

    params = init_params(key)
    kernel_params = prepare_kernel_params(params)

    fwd = jax.jit(medium_mlp_forward)
    logits = fwd(x, kernel_params)
    jax.block_until_ready(logits)

    # Pure-JAX reference with the same bf16-operand / f32-accumulate numerics.
    def ref_forward(x_nchw, params):
        xf = x_nchw.reshape(x_nchw.shape[0], -1).astype(jnp.bfloat16)
        w1, b1, w2, b2, w3, b3, w4, b4 = params
        w1, w2, w3, w4 = (w.astype(jnp.bfloat16) for w in (w1, w2, w3, w4))
        h = jnp.maximum(jnp.dot(xf, w1, preferred_element_type=jnp.float32) + b1, 0.0)
        h = jnp.maximum(jnp.dot(h.astype(jnp.bfloat16), w2,
                                preferred_element_type=jnp.float32) + b2, 0.0)
        h = jnp.maximum(jnp.dot(h.astype(jnp.bfloat16), w3,
                                preferred_element_type=jnp.float32) + b3, 0.0)
        return jnp.dot(h.astype(jnp.bfloat16), w4,
                       preferred_element_type=jnp.float32) + b4

    ref = ref_forward(x, params)
    assert logits.shape == (B, CLASS_SIZE)
    assert jnp.allclose(logits, ref, atol=1e-2, rtol=1e-2), (
        float(jnp.max(jnp.abs(logits - ref))))

    print("KERNEL_OK")
</pallas_src>

<mosaic_0001>
module attributes {stable_mosaic.version = 11 : i64} {
  func.func @mlp_kernel(%arg0: i32, %arg1: memref<16x784xf32, #tpu.memory_space<vmem>>, %arg2: memref<784x512xbf16, #tpu.memory_space<vmem>>, %arg3: memref<1x512xf32, #tpu.memory_space<vmem>>, %arg4: memref<512x512xbf16, #tpu.memory_space<vmem>>, %arg5: memref<1x512xf32, #tpu.memory_space<vmem>>, %arg6: memref<512x512xbf16, #tpu.memory_space<vmem>>, %arg7: memref<1x512xf32, #tpu.memory_space<vmem>>, %arg8: memref<512x128xbf16, #tpu.memory_space<vmem>>, %arg9: memref<1x128xf32, #tpu.memory_space<vmem>>, %arg10: memref<16x128xf32, #tpu.memory_space<vmem>>) attributes {dimension_semantics = [#tpu.dimension_semantics<parallel>], iteration_bounds = array<i64: 1>, scalar_prefetch = 0 : i64, scratch_operands = 0 : i64, tpu.core_type = #tpu.core_type<tc>, window_params = [{transform_indices = @transform_0, window_bounds = array<i64: 16, 784>}, {pipeline_mode = #tpu.pipeline_mode<synchronous>, transform_indices = @transform_1, window_bounds = array<i64: 784, 512>}, {pipeline_mode = #tpu.pipeline_mode<synchronous>, transform_indices = @transform_2, window_bounds = array<i64: 1, 512>}, {pipeline_mode = #tpu.pipeline_mode<synchronous>, transform_indices = @transform_3, window_bounds = array<i64: 512, 512>}, {pipeline_mode = #tpu.pipeline_mode<synchronous>, transform_indices = @transform_4, window_bounds = array<i64: 1, 512>}, {pipeline_mode = #tpu.pipeline_mode<synchronous>, transform_indices = @transform_5, window_bounds = array<i64: 512, 512>}, {pipeline_mode = #tpu.pipeline_mode<synchronous>, transform_indices = @transform_6, window_bounds = array<i64: 1, 512>}, {pipeline_mode = #tpu.pipeline_mode<synchronous>, transform_indices = @transform_7, window_bounds = array<i64: 512, 128>}, {pipeline_mode = #tpu.pipeline_mode<synchronous>, transform_indices = @transform_8, window_bounds = array<i64: 1, 128>}, {transform_indices = @transform_9, window_bounds = array<i64: 16, 128>}]} {
    %c0 = arith.constant 0 : index
    %c0_0 = arith.constant 0 : index
    %0 = vector.load %arg1[%c0, %c0_0] : memref<16x784xf32, #tpu.memory_space<vmem>>, vector<16x784xf32>
    %1 = arith.truncf %0 : vector<16x784xf32> to vector<16x784xbf16>
    %c0_1 = arith.constant 0 : index
    %c0_2 = arith.constant 0 : index
    %2 = vector.load %arg2[%c0_1, %c0_2] : memref<784x512xbf16, #tpu.memory_space<vmem>>, vector<784x512xbf16>
    %cst = arith.constant dense<0.000000e+00> : vector<16x512xf32>
    %3 = tpu.matmul %1, %2, %cst {dimension_numbers = #tpu.dot_dimension_numbers<[1], [0], [0], [1], [0, 0, 1, 1], [], []>} : vector<16x784xbf16>, vector<784x512xbf16>, vector<16x512xf32> -> vector<16x512xf32>
    %c0_3 = arith.constant 0 : index
    %c0_4 = arith.constant 0 : index
    %4 = vector.load %arg3[%c0_3, %c0_4] : memref<1x512xf32, #tpu.memory_space<vmem>>, vector<1x512xf32>
    %5 = vector.broadcast %4 : vector<1x512xf32> to vector<16x512xf32>
    %6 = arith.addf %3, %5 : vector<16x512xf32>
    %cst_5 = arith.constant 0.000000e+00 : f32
    %7 = vector.broadcast %cst_5 : f32 to vector<16x512xf32>
    %8 = arith.maximumf %6, %7 : vector<16x512xf32>
    %9 = arith.truncf %8 : vector<16x512xf32> to vector<16x512xbf16>
    %c0_6 = arith.constant 0 : index
    %c0_7 = arith.constant 0 : index
    %10 = vector.load %arg4[%c0_6, %c0_7] : memref<512x512xbf16, #tpu.memory_space<vmem>>, vector<512x512xbf16>
    %cst_8 = arith.constant dense<0.000000e+00> : vector<16x512xf32>
    %11 = tpu.matmul %9, %10, %cst_8 {dimension_numbers = #tpu.dot_dimension_numbers<[1], [0], [0], [1], [0, 0, 1, 1], [], []>} : vector<16x512xbf16>, vector<512x512xbf16>, vector<16x512xf32> -> vector<16x512xf32>
    %c0_9 = arith.constant 0 : index
    %c0_10 = arith.constant 0 : index
    %12 = vector.load %arg5[%c0_9, %c0_10] : memref<1x512xf32, #tpu.memory_space<vmem>>, vector<1x512xf32>
    %13 = vector.broadcast %12 : vector<1x512xf32> to vector<16x512xf32>
    %14 = arith.addf %11, %13 : vector<16x512xf32>
    %cst_11 = arith.constant 0.000000e+00 : f32
    %15 = vector.broadcast %cst_11 : f32 to vector<16x512xf32>
    %16 = arith.maximumf %14, %15 : vector<16x512xf32>
    %17 = arith.truncf %16 : vector<16x512xf32> to vector<16x512xbf16>
    %c0_12 = arith.constant 0 : index
    %c0_13 = arith.constant 0 : index
    %18 = vector.load %arg6[%c0_12, %c0_13] : memref<512x512xbf16, #tpu.memory_space<vmem>>, vector<512x512xbf16>
    %cst_14 = arith.constant dense<0.000000e+00> : vector<16x512xf32>
    %19 = tpu.matmul %17, %18, %cst_14 {dimension_numbers = #tpu.dot_dimension_numbers<[1], [0], [0], [1], [0, 0, 1, 1], [], []>} : vector<16x512xbf16>, vector<512x512xbf16>, vector<16x512xf32> -> vector<16x512xf32>
    %c0_15 = arith.constant 0 : index
    %c0_16 = arith.constant 0 : index
    %20 = vector.load %arg7[%c0_15, %c0_16] : memref<1x512xf32, #tpu.memory_space<vmem>>, vector<1x512xf32>
    %21 = vector.broadcast %20 : vector<1x512xf32> to vector<16x512xf32>
    %22 = arith.addf %19, %21 : vector<16x512xf32>
    %cst_17 = arith.constant 0.000000e+00 : f32
    %23 = vector.broadcast %cst_17 : f32 to vector<16x512xf32>
    %24 = arith.maximumf %22, %23 : vector<16x512xf32>
    %25 = arith.truncf %24 : vector<16x512xf32> to vector<16x512xbf16>
    %c0_18 = arith.constant 0 : index
    %c0_19 = arith.constant 0 : index
    %26 = vector.load %arg8[%c0_18, %c0_19] : memref<512x128xbf16, #tpu.memory_space<vmem>>, vector<512x128xbf16>
    %cst_20 = arith.constant dense<0.000000e+00> : vector<16x128xf32>
    %27 = tpu.matmul %25, %26, %cst_20 {dimension_numbers = #tpu.dot_dimension_numbers<[1], [0], [0], [1], [0, 0, 1, 1], [], []>} : vector<16x512xbf16>, vector<512x128xbf16>, vector<16x128xf32> -> vector<16x128xf32>
    %c0_21 = arith.constant 0 : index
    %c0_22 = arith.constant 0 : index
    %28 = vector.load %arg9[%c0_21, %c0_22] : memref<1x128xf32, #tpu.memory_space<vmem>>, vector<1x128xf32>
    %29 = vector.broadcast %28 : vector<1x128xf32> to vector<16x128xf32>
    %30 = arith.addf %27, %29 : vector<16x128xf32>
    %c0_23 = arith.constant 0 : index
    %c0_24 = arith.constant 0 : index
    %31 = vector.load %arg10[%c0_23, %c0_24] : memref<16x128xf32, #tpu.memory_space<vmem>>, vector<16x128xf32>
    tpu.vector_store %arg10[%c0_23, %c0_24], %30 {strides = array<i32>} : memref<16x128xf32, #tpu.memory_space<vmem>>, vector<16x128xf32>,
    return
  }
  func.func @transform_0(%arg0: i32) -> (i32, i32) {
    %c0_i32 = arith.constant 0 : i32
    %c0_i32_0 = arith.constant 0 : i32
    return %arg0, %c0_i32 : i32, i32
  }
  func.func @transform_1(%arg0: i32) -> (i32, i32) {
    %c0_i32 = arith.constant 0 : i32
    %c0_i32_0 = arith.constant 0 : i32
    %c0_i32_1 = arith.constant 0 : i32
    return %c0_i32, %c0_i32_0 : i32, i32
  }
  func.func @transform_2(%arg0: i32) -> (i32, i32) {
    %c0_i32 = arith.constant 0 : i32
    %c0_i32_0 = arith.constant 0 : i32
    %c0_i32_1 = arith.constant 0 : i32
    return %c0_i32, %c0_i32_0 : i32, i32
  }
  func.func @transform_3(%arg0: i32) -> (i32, i32) {
    %c0_i32 = arith.constant 0 : i32
    %c0_i32_0 = arith.constant 0 : i32
    %c0_i32_1 = arith.constant 0 : i32
    return %c0_i32, %c0_i32_0 : i32, i32
  }
  func.func @transform_4(%arg0: i32) -> (i32, i32) {
    %c0_i32 = arith.constant 0 : i32
    %c0_i32_0 = arith.constant 0 : i32
    %c0_i32_1 = arith.constant 0 : i32
    return %c0_i32, %c0_i32_0 : i32, i32
  }
  func.func @transform_5(%arg0: i32) -> (i32, i32) {
    %c0_i32 = arith.constant 0 : i32
    %c0_i32_0 = arith.constant 0 : i32
    %c0_i32_1 = arith.constant 0 : i32
    return %c0_i32, %c0_i32_0 : i32, i32
  }
  func.func @transform_6(%arg0: i32) -> (i32, i32) {
    %c0_i32 = arith.constant 0 : i32
    %c0_i32_0 = arith.constant 0 : i32
    %c0_i32_1 = arith.constant 0 : i32
    return %c0_i32, %c0_i32_0 : i32, i32
  }
  func.func @transform_7(%arg0: i32) -> (i32, i32) {
    %c0_i32 = arith.constant 0 : i32
    %c0_i32_0 = arith.constant 0 : i32
    %c0_i32_1 = arith.constant 0 : i32
    return %c0_i32, %c0_i32_0 : i32, i32
  }
  func.func @transform_8(%arg0: i32) -> (i32, i32) {
    %c0_i32 = arith.constant 0 : i32
    %c0_i32_0 = arith.constant 0 : i32
    %c0_i32_1 = arith.constant 0 : i32
    return %c0_i32, %c0_i32_0 : i32, i32
  }
  func.func @transform_9(%arg0: i32) -> (i32, i32) {
    %c0_i32 = arith.constant 0 : i32
    %c0_i32_0 = arith.constant 0 : i32
    return %arg0, %c0_i32 : i32, i32
  }
}

</mosaic_0001>

<llo_original>
// kernel: medium_mlp_forward.1
$region0: #{medium_mlp_forward.1}
  #allocation0 [shape = 'u32[]', space=smem, size = 0x4, offset = 0x4, fixed_abs, tag = 'smem constant byte address 0x4 - core index']
  #allocation1 [shape = 'u32[144,128]{1,0:T(1,128)}', space=vmem, size = 0x12000, scoped, tag = 'internal scratch']
  %s0 = inlined_call_operand.vmem [shape: f32[16,784], index: 0, kind: input, shape index: {}]
  %s1 = inlined_call_operand.vmem [shape: bf16[784,512], index: 1, kind: input, shape index: {}]
  %s2 = inlined_call_operand.vmem [shape: f32[1,512], index: 2, kind: input, shape index: {}]
  %s3 = inlined_call_operand.hbm [shape: bf16[512,512], index: 3, kind: input, shape index: {}]
  %s4 = inlined_call_operand.vmem [shape: f32[1,512], index: 4, kind: input, shape index: {}]
  %s5 = inlined_call_operand.hbm [shape: bf16[512,512], index: 5, kind: input, shape index: {}]
  %s6 = inlined_call_operand.vmem [shape: f32[1,512], index: 6, kind: input, shape index: {}]
  %s7 = inlined_call_operand.hbm [shape: bf16[512,128], index: 7, kind: input, shape index: {}]
  %s8 = inlined_call_operand.vmem [shape: f32[1,128], index: 8, kind: input, shape index: {}]
  %s9 = inlined_call_operand.hbm [shape: f32[16,128], index: 9, kind: output, shape index: {}]
  %s10 = sld [smem:[#allocation0]]
  $region58: #{medium_mlp_forward.1} parent=0
    _
  %s12 = ssub.s32 1, %s10
  %s13 = scalar_select 0, %s12, %s10
  $region1: #{medium_mlp_forward.1} parent=0
    #allocation2 [shape = 'u8[524288]{0}', space=vmem, size = 0x80000, scoped, tag = 'input window, operand 3, single buffered']
    #allocation3 [shape = 's32[1]{0}', space=sflag, size = 0x4, scoped, tag = 'scoped memory for medium_mlp_forward.1']
    #allocation4 [shape = 's32[1]{0}', space=sflag, size = 0x4, scoped, tag = 'scoped memory for medium_mlp_forward.1']
    #allocation5 [shape = 'u8[524288]{0}', space=vmem, size = 0x80000, scoped, tag = 'input window, operand 5, single buffered']
    #allocation6 [shape = 's32[1]{0}', space=sflag, size = 0x4, scoped, tag = 'scoped memory for medium_mlp_forward.1']
    #allocation7 [shape = 'u8[131072]{0}', space=vmem, size = 0x20000, scoped, tag = 'input window, operand 7, single buffered']
    #allocation8 [shape = 'u8[8192]{0}', space=vmem, size = 0x2000, scoped, tag = 'output window, operand 0, single buffered']
    %14 = vsyncpa [#allocation3], 0
    %15 = vsyncpa [#allocation6], 0
    %16 = vsyncpa [#allocation4], 0
    // Predicated region
    $region2: #{medium_mlp_forward.1} parent=1 // pred_check
      _
    $region3: #{medium_mlp_forward.1} parent=1 // pred_check_branch
      %18 = sbr.rel (0) target = $region5
    $region4: #{medium_mlp_forward.1} parent=1 // pred_region
      _
    $region5: #{medium_mlp_forward.1} parent=1 // pred_fallthru
      _
    // Predicated region
    $region6: #{medium_mlp_forward.1} parent=1 // pred_check
      _
    $region7: #{medium_mlp_forward.1} parent=1 // pred_check_branch
      %20 = sbr.rel (0) target = $region9
    $region8: #{medium_mlp_forward.1} parent=1 // pred_region
      _
    $region9: #{medium_mlp_forward.1} parent=1 // pred_fallthru
      _
    // Predicated region
    $region10: #{medium_mlp_forward.1} parent=1 // pred_check
      _
    $region11: #{medium_mlp_forward.1} parent=1 // pred_check_branch
      %22 = sbr.rel (0) target = $region13
    $region12: #{medium_mlp_forward.1} parent=1 // pred_region
      _
    $region13: #{medium_mlp_forward.1} parent=1 // pred_fallthru
      _
    // Predicated region
    $region14: #{medium_mlp_forward.1} parent=1 // pred_check
      _
    $region15: #{medium_mlp_forward.1} parent=1 // pred_check_branch
      %24 = sbr.rel (0) target = $region17
    $region16: #{medium_mlp_forward.1} parent=1 // pred_region
      %s26 = ssub.s32 16384, 16384
      %27 = vsyncadd [#allocation3], %s26
      %s28 = sshll.u32 [#allocation2], 4
      %s29 = int_to_ptr.vmem [resolvable:$true] %s28
      %34 = dma.hbm_to_vmem [thread:$0]  %s3, 16384, %s29, [#allocation3], 256, 256, 16
    $region17: #{medium_mlp_forward.1} parent=1 // pred_fallthru
      _
    // Predicated region
    $region18: #{medium_mlp_forward.1} parent=1 // pred_check
      _
    $region19: #{medium_mlp_forward.1} parent=1 // pred_check_branch
      %36 = sbr.rel (0) target = $region21
    $region20: #{medium_mlp_forward.1} parent=1 // pred_region
      _
    $region21: #{medium_mlp_forward.1} parent=1 // pred_fallthru
      _
    // Predicated region
    $region22: #{medium_mlp_forward.1} parent=1 // pred_check
      _
    $region23: #{medium_mlp_forward.1} parent=1 // pred_check_branch
      %38 = sbr.rel (0) target = $region25
    $region24: #{medium_mlp_forward.1} parent=1 // pred_region
      %s40 = ssub.s32 16384, 16384
      %41 = vsyncadd [#allocation6], %s40
      %s42 = sshll.u32 [#allocation5], 4
      %s43 = int_to_ptr.vmem [resolvable:$true] %s42
      %48 = dma.hbm_to_vmem [thread:$0]  %s5, 16384, %s43, [#allocation6], 256, 256, 16
    $region25: #{medium_mlp_forward.1} parent=1 // pred_fallthru
      _
    // Predicated region
    $region26: #{medium_mlp_forward.1} parent=1 // pred_check
      _
    $region27: #{medium_mlp_forward.1} parent=1 // pred_check_branch
      %50 = sbr.rel (0) target = $region29
    $region28: #{medium_mlp_forward.1} parent=1 // pred_region
      _
    $region29: #{medium_mlp_forward.1} parent=1 // pred_fallthru
      _
    // Predicated region
    $region30: #{medium_mlp_forward.1} parent=1 // pred_check
      _
    $region31: #{medium_mlp_forward.1} parent=1 // pred_check_branch
      %52 = sbr.rel (0) target = $region33
    $region32: #{medium_mlp_forward.1} parent=1 // pred_region
      %s54 = ssub.s32 4096, 4096
      %55 = vsyncadd [#allocation6], %s54
      %s56 = sshll.u32 [#allocation7], 4
      %s57 = int_to_ptr.vmem [resolvable:$true] %s56
      %62 = dma.hbm_to_vmem [thread:$0]  %s7, 4096, %s57, [#allocation6], 64, 64, 4
    $region33: #{medium_mlp_forward.1} parent=1 // pred_fallthru
      _
    // Predicated region
    $region34: #{medium_mlp_forward.1} parent=1 // pred_check
      _
    $region35: #{medium_mlp_forward.1} parent=1 // pred_check_branch
      %64 = sbr.rel (0) target = $region37
    $region36: #{medium_mlp_forward.1} parent=1 // pred_region
      _
    $region37: #{medium_mlp_forward.1} parent=1 // pred_fallthru
      _
    // Predicated region
    $region38: #{medium_mlp_forward.1} parent=1 // pred_check
      _
    $region39: #{medium_mlp_forward.1} parent=1 // pred_check_branch
      %66 = sbr.rel (0) target = $region41
    $region40: #{medium_mlp_forward.1} parent=1 // pred_region
      %67 = dma.done [#allocation3], 16384
    $region41: #{medium_mlp_forward.1} parent=1 // pred_fallthru
      _
    // Predicated region
    $region42: #{medium_mlp_forward.1} parent=1 // pred_check
      _
    $region43: #{medium_mlp_forward.1} parent=1 // pred_check_branch
      %69 = sbr.rel (0) target = $region45
    $region44: #{medium_mlp_forward.1} parent=1 // pred_region
      %70 = dma.done [#allocation6], 16384
    $region45: #{medium_mlp_forward.1} parent=1 // pred_fallthru
      _
    // Predicated region
    $region46: #{medium_mlp_forward.1} parent=1 // pred_check
      _
    $region47: #{medium_mlp_forward.1} parent=1 // pred_check_branch
      %72 = sbr.rel (0) target = $region49
    $region48: #{medium_mlp_forward.1} parent=1 // pred_region
      %73 = dma.done [#allocation6], 4096
    $region49: #{medium_mlp_forward.1} parent=1 // pred_fallthru
      _
    %v75 = vld [vmem:[%s0] sm:$0xff]
    %v76 = vld [vmem:[%s0 + $0x8] sm:$0xff]
    %v77 = vld [vmem:[%s0 + $0x10] sm:$0xff]
    %v78 = vld [vmem:[%s0 + $0x18] sm:$0xff]
    %v79 = vld [vmem:[%s0 + $0x20] sm:$0xff]
    %v80 = vld [vmem:[%s0 + $0x28] sm:$0xff]
    %v81 = vld [vmem:[%s0 + $0x30] sm:$0xff]
    %v82 = vld [vmem:[%s0 + $0x38] sm:$0xff]
    %v83 = vld [vmem:[%s0 + $0x40] sm:$0xff]
    %v84 = vld [vmem:[%s0 + $0x48] sm:$0xff]
    %v85 = vld [vmem:[%s0 + $0x50] sm:$0xff]
    %v86 = vld [vmem:[%s0 + $0x58] sm:$0xff]
    %v87 = vld [vmem:[%s0 + $0x60] sm:$0xff]
    %v88 = vld [vmem:[%s0 + $0x68] sm:$0xff]
    %v89 = vpack.c.bf16 %v82, %v75
    %v90 = vpack.c.bf16 %v83, %v76
    %v91 = vpack.c.bf16 %v84, %v77
    %v92 = vpack.c.bf16 %v85, %v78
    %v93 = vpack.c.bf16 %v86, %v79
    %v94 = vpack.c.bf16 %v87, %v80
    %v95 = vpack.c.bf16 %v88, %v81
    %v96 = vld [vmem:[%s1] sm:$0xff]
    %v97 = vld [vmem:[%s1 + $0x8] sm:$0xff]
    %v98 = vld [vmem:[%s1 + $0x10] sm:$0xff]
    %v99 = vld [vmem:[%s1 + $0x18] sm:$0xff]
    %v100 = vld [vmem:[%s1 + $0x20] sm:$0xff]
    %v101 = vld [vmem:[%s1 + $0x28] sm:$0xff]
    %v102 = vld [vmem:[%s1 + $0x30] sm:$0xff]
    %v103 = vld [vmem:[%s1 + $0x38] sm:$0xff]
    %v104 = vld [vmem:[%s1 + $0x40] sm:$0xff]
    %v105 = vld [vmem:[%s1 + $0x48] sm:$0xff]
    %v106 = vld [vmem:[%s1 + $0x50] sm:$0xff]
    %v107 = vld [vmem:[%s1 + $0x58] sm:$0xff]
    %v108 = vld [vmem:[%s1 + $0x60] sm:$0xff]
    %v109 = vld [vmem:[%s1 + $0x68] sm:$0xff]
    %v110 = vld [vmem:[%s1 + $0x70] sm:$0xff]
    %v111 = vld [vmem:[%s1 + $0x78] sm:$0xff]
    %v112 = vld [vmem:[%s1 + $0x80] sm:$0xff]
    %v113 = vld [vmem:[%s1 + $0x88] sm:$0xff]
    %v114 = vld [vmem:[%s1 + $0x90] sm:$0xff]
    %v115 = vld [vmem:[%s1 + $0x98] sm:$0xff]
    %v116 = vld [vmem:[%s1 + $0xa0] sm:$0xff]
    %v117 = vld [vmem:[%s1 + $0xa8] sm:$0xff]
    %v118 = vld [vmem:[%s1 + $0xb0] sm:$0xff]
    %v119 = vld [vmem:[%s1 + $0xb8] sm:$0xff]
    %v120 = vld [vmem:[%s1 + $0xc0] sm:$0xff]
    %v121 = vld [vmem:[%s1 + $0xc8] sm:$0xff]
    %v122 = vld [vmem:[%s1 + $0xd0] sm:$0xff]
    %v123 = vld [vmem:[%s1 + $0xd8] sm:$0xff]
    %v124 = vld [vmem:[%s1 + $0xe0] sm:$0xff]
    %v125 = vld [vmem:[%s1 + $0xe8] sm:$0xff]
    %v126 = vld [vmem:[%s1 + $0xf0] sm:$0xff]
    %v127 = vld [vmem:[%s1 + $0xf8] sm:$0xff]
    %v128 = vld [vmem:[%s1 + $0x100] sm:$0xff]
    %v129 = vld [vmem:[%s1 + $0x108] sm:$0xff]
    %v130 = vld [vmem:[%s1 + $0x110] sm:$0xff]
    %v131 = vld [vmem:[%s1 + $0x118] sm:$0xff]
    %v132 = vld [vmem:[%s1 + $0x120] sm:$0xff]
    %v133 = vld [vmem:[%s1 + $0x128] sm:$0xff]
    %v134 = vld [vmem:[%s1 + $0x130] sm:$0xff]
    %v135 = vld [vmem:[%s1 + $0x138] sm:$0xff]
    %v136 = vld [vmem:[%s1 + $0x140] sm:$0xff]
    %v137 = vld [vmem:[%s1 + $0x148] sm:$0xff]
    %v138 = vld [vmem:[%s1 + $0x150] sm:$0xff]
    %v139 = vld [vmem:[%s1 + $0x158] sm:$0xff]
    %v140 = vld [vmem:[%s1 + $0x160] sm:$0xff]
    %v141 = vld [vmem:[%s1 + $0x168] sm:$0xff]
    %v142 = vld [vmem:[%s1 + $0x170] sm:$0xff]
    %v143 = vld [vmem:[%s1 + $0x178] sm:$0xff]
    %v144 = vld [vmem:[%s1 + $0x180] sm:$0xff]
    %v145 = vld [vmem:[%s1 + $0x188] sm:$0xff]
    %v146 = vld [vmem:[%s1 + $0x190] sm:$0xff]
    %v147 = vld [vmem:[%s1 + $0x198] sm:$0xff]
    %v148 = vld [vmem:[%s1 + $0x1a0] sm:$0xff]
    %v149 = vld [vmem:[%s1 + $0x1a8] sm:$0xff]
    %v150 = vld [vmem:[%s1 + $0x1b0] sm:$0xff]
    %v151 = vld [vmem:[%s1 + $0x1b8] sm:$0xff]
    %v152 = vld [vmem:[%s1 + $0x1c0] sm:$0xff]
    %v153 = vld [vmem:[%s1 + $0x1c8] sm:$0xff]
    %v154 = vld [vmem:[%s1 + $0x1d0] sm:$0xff]
    %v155 = vld [vmem:[%s1 + $0x1d8] sm:$0xff]
    %v156 = vld [vmem:[%s1 + $0x1e0] sm:$0xff]
    %v157 = vld [vmem:[%s1 + $0x1e8] sm:$0xff]
    %v158 = vld [vmem:[%s1 + $0x1f0] sm:$0xff]
    %v159 = vld [vmem:[%s1 + $0x1f8] sm:$0xff]
    %v160 = vld [vmem:[%s1 + $0x200] sm:$0xff]
    %v161 = vld [vmem:[%s1 + $0x208] sm:$0xff]
    %v162 = vld [vmem:[%s1 + $0x210] sm:$0xff]
    %v163 = vld [vmem:[%s1 + $0x218] sm:$0xff]
    %v164 = vld [vmem:[%s1 + $0x220] sm:$0xff]
    %v165 = vld [vmem:[%s1 + $0x228] sm:$0xff]
    %v166 = vld [vmem:[%s1 + $0x230] sm:$0xff]
    %v167 = vld [vmem:[%s1 + $0x238] sm:$0xff]
    %v168 = vld [vmem:[%s1 + $0x240] sm:$0xff]
    %v169 = vld [vmem:[%s1 + $0x248] sm:$0xff]
    %v170 = vld [vmem:[%s1 + $0x250] sm:$0xff]
    %v171 = vld [vmem:[%s1 + $0x258] sm:$0xff]
    %v172 = vld [vmem:[%s1 + $0x260] sm:$0xff]
    %v173 = vld [vmem:[%s1 + $0x268] sm:$0xff]
    %v174 = vld [vmem:[%s1 + $0x270] sm:$0xff]
    %v175 = vld [vmem:[%s1 + $0x278] sm:$0xff]
    %v176 = vld [vmem:[%s1 + $0x280] sm:$0xff]
    %v177 = vld [vmem:[%s1 + $0x288] sm:$0xff]
    %v178 = vld [vmem:[%s1 + $0x290] sm:$0xff]
    %v179 = vld [vmem:[%s1 + $0x298] sm:$0xff]
    %v180 = vld [vmem:[%s1 + $0x2a0] sm:$0xff]
    %v181 = vld [vmem:[%s1 + $0x2a8] sm:$0xff]
    %v182 = vld [vmem:[%s1 + $0x2b0] sm:$0xff]
    %v183 = vld [vmem:[%s1 + $0x2b8] sm:$0xff]
    %v184 = vld [vmem:[%s1 + $0x2c0] sm:$0xff]
    %v185 = vld [vmem:[%s1 + $0x2c8] sm:$0xff]
    %v186 = vld [vmem:[%s1 + $0x2d0] sm:$0xff]
    %v187 = vld [vmem:[%s1 + $0x2d8] sm:$0xff]
    %v188 = vld [vmem:[%s1 + $0x2e0] sm:$0xff]
    %v189 = vld [vmem:[%s1 + $0x2e8] sm:$0xff]
    %v190 = vld [vmem:[%s1 + $0x2f0] sm:$0xff]
    %v191 = vld [vmem:[%s1 + $0x2f8] sm:$0xff]
    %v192 = vld [vmem:[%s1 + $0x300] sm:$0xff]
    %v193 = vld [vmem:[%s1 + $0x308] sm:$0xff]
    %v194 = vld [vmem:[%s1 + $0x310] sm:$0xff]
    %v195 = vld [vmem:[%s1 + $0x318] sm:$0xff]
    %v196 = vld [vmem:[%s1 + $0x320] sm:$0xff]
    %v197 = vld [vmem:[%s1 + $0x328] sm:$0xff]
    %v198 = vld [vmem:[%s1 + $0x330] sm:$0xff]
    %v199 = vld [vmem:[%s1 + $0x338] sm:$0xff]
    %v200 = vld [vmem:[%s1 + $0x340] sm:$0xff]
    %v201 = vld [vmem:[%s1 + $0x348] sm:$0xff]
    %v202 = vld [vmem:[%s1 + $0x350] sm:$0xff]
    %v203 = vld [vmem:[%s1 + $0x358] sm:$0xff]
    %v204 = vld [vmem:[%s1 + $0x360] sm:$0xff]
    %v205 = vld [vmem:[%s1 + $0x368] sm:$0xff]
    %v206 = vld [vmem:[%s1 + $0x370] sm:$0xff]
    %v207 = vld [vmem:[%s1 + $0x378] sm:$0xff]
    %v208 = vld [vmem:[%s1 + $0x380] sm:$0xff]
    %v209 = vld [vmem:[%s1 + $0x388] sm:$0xff]
    %v210 = vld [vmem:[%s1 + $0x390] sm:$0xff]
    %v211 = vld [vmem:[%s1 + $0x398] sm:$0xff]
    %v212 = vld [vmem:[%s1 + $0x3a0] sm:$0xff]
    %v213 = vld [vmem:[%s1 + $0x3a8] sm:$0xff]
    %v214 = vld [vmem:[%s1 + $0x3b0] sm:$0xff]
    %v215 = vld [vmem:[%s1 + $0x3b8] sm:$0xff]
    %v216 = vld [vmem:[%s1 + $0x3c0] sm:$0xff]
    %v217 = vld [vmem:[%s1 + $0x3c8] sm:$0xff]
    %v218 = vld [vmem:[%s1 + $0x3d0] sm:$0xff]
    %v219 = vld [vmem:[%s1 + $0x3d8] sm:$0xff]
    %v220 = vld [vmem:[%s1 + $0x3e0] sm:$0xff]
    %v221 = vld [vmem:[%s1 + $0x3e8] sm:$0xff]
    %v222 = vld [vmem:[%s1 + $0x3f0] sm:$0xff]
    %v223 = vld [vmem:[%s1 + $0x3f8] sm:$0xff]
    %v224 = vld [vmem:[%s1 + $0x400] sm:$0xff]
    %v225 = vld [vmem:[%s1 + $0x408] sm:$0xff]
    %v226 = vld [vmem:[%s1 + $0x410] sm:$0xff]
    %v227 = vld [vmem:[%s1 + $0x418] sm:$0xff]
    %v228 = vld [vmem:[%s1 + $0x420] sm:$0xff]
    %v229 = vld [vmem:[%s1 + $0x428] sm:$0xff]
    %v230 = vld [vmem:[%s1 + $0x430] sm:$0xff]
    %v231 = vld [vmem:[%s1 + $0x438] sm:$0xff]
    %v232 = vld [vmem:[%s1 + $0x440] sm:$0xff]
    %v233 = vld [vmem:[%s1 + $0x448] sm:$0xff]
    %v234 = vld [vmem:[%s1 + $0x450] sm:$0xff]
    %v235 = vld [vmem:[%s1 + $0x458] sm:$0xff]
    %v236 = vld [vmem:[%s1 + $0x460] sm:$0xff]
    %v237 = vld [vmem:[%s1 + $0x468] sm:$0xff]
    %v238 = vld [vmem:[%s1 + $0x470] sm:$0xff]
    %v239 = vld [vmem:[%s1 + $0x478] sm:$0xff]
    %v240 = vld [vmem:[%s1 + $0x480] sm:$0xff]
    %v241 = vld [vmem:[%s1 + $0x488] sm:$0xff]
    %v242 = vld [vmem:[%s1 + $0x490] sm:$0xff]
    %v243 = vld [vmem:[%s1 + $0x498] sm:$0xff]
    %v244 = vld [vmem:[%s1 + $0x4a0] sm:$0xff]
    %v245 = vld [vmem:[%s1 + $0x4a8] sm:$0xff]
    %v246 = vld [vmem:[%s1 + $0x4b0] sm:$0xff]
    %v247 = vld [vmem:[%s1 + $0x4b8] sm:$0xff]
    %v248 = vld [vmem:[%s1 + $0x4c0] sm:$0xff]
    %v249 = vld [vmem:[%s1 + $0x4c8] sm:$0xff]
    %v250 = vld [vmem:[%s1 + $0x4d0] sm:$0xff]
    %v251 = vld [vmem:[%s1 + $0x4d8] sm:$0xff]
    %v252 = vld [vmem:[%s1 + $0x4e0] sm:$0xff]
    %v253 = vld [vmem:[%s1 + $0x4e8] sm:$0xff]
    %v254 = vld [vmem:[%s1 + $0x4f0] sm:$0xff]
    %v255 = vld [vmem:[%s1 + $0x4f8] sm:$0xff]
    %v256 = vld [vmem:[%s1 + $0x500] sm:$0xff]
    %v257 = vld [vmem:[%s1 + $0x508] sm:$0xff]
    %v258 = vld [vmem:[%s1 + $0x510] sm:$0xff]
    %v259 = vld [vmem:[%s1 + $0x518] sm:$0xff]
    %v260 = vld [vmem:[%s1 + $0x520] sm:$0xff]
    %v261 = vld [vmem:[%s1 + $0x528] sm:$0xff]
    %v262 = vld [vmem:[%s1 + $0x530] sm:$0xff]
    %v263 = vld [vmem:[%s1 + $0x538] sm:$0xff]
    %v264 = vld [vmem:[%s1 + $0x540] sm:$0xff]
    %v265 = vld [vmem:[%s1 + $0x548] sm:$0xff]
    %v266 = vld [vmem:[%s1 + $0x550] sm:$0xff]
    %v267 = vld [vmem:[%s1 + $0x558] sm:$0xff]
    %v268 = vld [vmem:[%s1 + $0x560] sm:$0xff]
    %v269 = vld [vmem:[%s1 + $0x568] sm:$0xff]
    %v270 = vld [vmem:[%s1 + $0x570] sm:$0xff]
    %v271 = vld [vmem:[%s1 + $0x578] sm:$0xff]
    %v272 = vld [vmem:[%s1 + $0x580] sm:$0xff]
    %v273 = vld [vmem:[%s1 + $0x588] sm:$0xff]
    %v274 = vld [vmem:[%s1 + $0x590] sm:$0xff]
    %v275 = vld [vmem:[%s1 + $0x598] sm:$0xff]
    %v276 = vld [vmem:[%s1 + $0x5a0] sm:$0xff]
    %v277 = vld [vmem:[%s1 + $0x5a8] sm:$0xff]
    %v278 = vld [vmem:[%s1 + $0x5b0] sm:$0xff]
    %v279 = vld [vmem:[%s1 + $0x5b8] sm:$0xff]
    %v280 = vld [vmem:[%s1 + $0x5c0] sm:$0xff]
    %v281 = vld [vmem:[%s1 + $0x5c8] sm:$0xff]
    %v282 = vld [vmem:[%s1 + $0x5d0] sm:$0xff]
    %v283 = vld [vmem:[%s1 + $0x5d8] sm:$0xff]
    %v284 = vld [vmem:[%s1 + $0x5e0] sm:$0xff]
    %v285 = vld [vmem:[%s1 + $0x5e8] sm:$0xff]
    %v286 = vld [vmem:[%s1 + $0x5f0] sm:$0xff]
    %v287 = vld [vmem:[%s1 + $0x5f8] sm:$0xff]
    %v288 = vld [vmem:[%s1 + $0x600] sm:$0xff]
    %v289 = vld [vmem:[%s1 + $0x608] sm:$0xff]
    %v290 = vld [vmem:[%s1 + $0x610] sm:$0xff]
    %v291 = vld [vmem:[%s1 + $0x618] sm:$0xff]
    %v292 = vld [vmem:[%s2] sm:$0xf]
    %v294 = vlaneseq
    %v295 = vshrl.u32 %v294, 7
    %v296 = vsub.s32 0, %v295
    %v297 = vrot.slane %v292, %v296
    %v298 = vlaneseq
    %v299 = vshrl.u32 %v298, 7
    %v300 = vsub.s32 1, %v299
    %v301 = vrot.slane %v292, %v300
    %v302 = vlaneseq
    %v303 = vshrl.u32 %v302, 7
    %v304 = vsub.s32 2, %v303
    %v305 = vrot.slane %v292, %v304
    %v306 = vlaneseq
    %v307 = vshrl.u32 %v306, 7
    %v308 = vsub.s32 3, %v307
    %v309 = vrot.slane %v292, %v308
    %v510 = vunpack.c.l.b16 %v96
    %v511 = vunpack.c.h.b16 %v96
    %v512 = vunpack.c.l.b16 %v97
    %v513 = vunpack.c.h.b16 %v97
    %v514 = vunpack.c.l.b16 %v98
    %v515 = vunpack.c.h.b16 %v98
    %v516 = vunpack.c.l.b16 %v99
    %v517 = vunpack.c.h.b16 %v99
    %v518 = vunpack.c.l.b16 %v100
    %v519 = vunpack.c.h.b16 %v100
    %v520 = vunpack.c.l.b16 %v101
    %v521 = vunpack.c.h.b16 %v101
    %v522 = vunpack.c.l.b16 %v102
    %v523 = vunpack.c.h.b16 %v102
    %v524 = vunpack.c.l.b16 %v103
    %v525 = vunpack.c.h.b16 %v103
    %v526 = vunpack.c.l.b16 %v104
    %v527 = vunpack.c.h.b16 %v104
    %v528 = vunpack.c.l.b16 %v105
    %v529 = vunpack.c.h.b16 %v105
    %v530 = vunpack.c.l.b16 %v106
    %v531 = vunpack.c.h.b16 %v106
    %v532 = vunpack.c.l.b16 %v107
    %v533 = vunpack.c.h.b16 %v107
    %v534 = vunpack.c.l.b16 %v108
    %v535 = vunpack.c.h.b16 %v108
    %v536 = vunpack.c.l.b16 %v109
    %v537 = vunpack.c.h.b16 %v109
    %v538 = vunpack.c.l.b16 %v110
    %v539 = vunpack.c.h.b16 %v110
    %v540 = vunpack.c.l.b16 %v111
    %v541 = vunpack.c.h.b16 %v111
    %v542 = vunpack.c.l.b16 %v112
    %v543 = vunpack.c.h.b16 %v112
    %v544 = vunpack.c.l.b16 %v113
    %v545 = vunpack.c.h.b16 %v113
    %v546 = vunpack.c.l.b16 %v114
    %v547 = vunpack.c.h.b16 %v114
    %v548 = vunpack.c.l.b16 %v115
    %v549 = vunpack.c.h.b16 %v115
    %v550 = vunpack.c.l.b16 %v116
    %v551 = vunpack.c.h.b16 %v116
    %v552 = vunpack.c.l.b16 %v117
    %v553 = vunpack.c.h.b16 %v117
    %v554 = vunpack.c.l.b16 %v118
    %v555 = vunpack.c.h.b16 %v118
    %v556 = vunpack.c.l.b16 %v119
    %v557 = vunpack.c.h.b16 %v119
    %v558 = vunpack.c.l.b16 %v120
    %v559 = vunpack.c.h.b16 %v120
    %v560 = vunpack.c.l.b16 %v121
    %v561 = vunpack.c.h.b16 %v121
    %v562 = vunpack.c.l.b16 %v122
    %v563 = vunpack.c.h.b16 %v122
    %v564 = vunpack.c.l.b16 %v123
    %v565 = vunpack.c.h.b16 %v123
    %v566 = vunpack.c.l.b16 %v124
    %v567 = vunpack.c.h.b16 %v124
    %v568 = vunpack.c.l.b16 %v125
    %v569 = vunpack.c.h.b16 %v125
    %v570 = vunpack.c.l.b16 %v126
    %v571 = vunpack.c.h.b16 %v126
    %v572 = vunpack.c.l.b16 %v127
    %v573 = vunpack.c.h.b16 %v127
    %v574 = vunpack.c.l.b16 %v128
    %v575 = vunpack.c.h.b16 %v128
    %v576 = vunpack.c.l.b16 %v129
    %v577 = vunpack.c.h.b16 %v129
    %v578 = vunpack.c.l.b16 %v130
    %v579 = vunpack.c.h.b16 %v130
    %v580 = vunpack.c.l.b16 %v131
    %v581 = vunpack.c.h.b16 %v131
    %v582 = vunpack.c.l.b16 %v132
    %v583 = vunpack.c.h.b16 %v132
    %v584 = vunpack.c.l.b16 %v133
    %v585 = vunpack.c.h.b16 %v133
    %v586 = vunpack.c.l.b16 %v134
    %v587 = vunpack.c.h.b16 %v134
    %v588 = vunpack.c.l.b16 %v135
    %v589 = vunpack.c.h.b16 %v135
    %v590 = vunpack.c.l.b16 %v136
    %v591 = vunpack.c.h.b16 %v136
    %v592 = vunpack.c.l.b16 %v137
    %v593 = vunpack.c.h.b16 %v137
    %v594 = vunpack.c.l.b16 %v138
    %v595 = vunpack.c.h.b16 %v138
    %v596 = vunpack.c.l.b16 %v139
    %v597 = vunpack.c.h.b16 %v139
    %v598 = vunpack.c.l.b16 %v140
    %v599 = vunpack.c.h.b16 %v140
    %v600 = vunpack.c.l.b16 %v141
    %v601 = vunpack.c.h.b16 %v141
    %v602 = vunpack.c.l.b16 %v142
    %v603 = vunpack.c.h.b16 %v142
    %v604 = vunpack.c.l.b16 %v143
    %v605 = vunpack.c.h.b16 %v143
    %v606 = vunpack.c.l.b16 %v144
    %v607 = vunpack.c.h.b16 %v144
    %v608 = vunpack.c.l.b16 %v145
    %v609 = vunpack.c.h.b16 %v145
    %v610 = vunpack.c.l.b16 %v146
    %v611 = vunpack.c.h.b16 %v146
    %v612 = vunpack.c.l.b16 %v147
    %v613 = vunpack.c.h.b16 %v147
    %v614 = vunpack.c.l.b16 %v148
    %v615 = vunpack.c.h.b16 %v148
    %v616 = vunpack.c.l.b16 %v149
    %v617 = vunpack.c.h.b16 %v149
    %v618 = vunpack.c.l.b16 %v150
    %v619 = vunpack.c.h.b16 %v150
    %v620 = vunpack.c.l.b16 %v151
    %v621 = vunpack.c.h.b16 %v151
    %v622 = vunpack.c.l.b16 %v152
    %v623 = vunpack.c.h.b16 %v152
    %v624 = vunpack.c.l.b16 %v153
    %v625 = vunpack.c.h.b16 %v153
    %v626 = vunpack.c.l.b16 %v154
    %v627 = vunpack.c.h.b16 %v154
    %v628 = vunpack.c.l.b16 %v155
    %v629 = vunpack.c.h.b16 %v155
    %v630 = vunpack.c.l.b16 %v156
    %v631 = vunpack.c.h.b16 %v156
    %v632 = vunpack.c.l.b16 %v157
    %v633 = vunpack.c.h.b16 %v157
    %v634 = vunpack.c.l.b16 %v158
    %v635 = vunpack.c.h.b16 %v158
    %v636 = vunpack.c.l.b16 %v159
    %v637 = vunpack.c.h.b16 %v159
    %v638 = vunpack.c.l.b16 %v160
    %v639 = vunpack.c.h.b16 %v160
    %v640 = vunpack.c.l.b16 %v161
    %v641 = vunpack.c.h.b16 %v161
    %v642 = vunpack.c.l.b16 %v162
    %v643 = vunpack.c.h.b16 %v162
    %v644 = vunpack.c.l.b16 %v163
    %v645 = vunpack.c.h.b16 %v163
    %v646 = vunpack.c.l.b16 %v164
    %v647 = vunpack.c.h.b16 %v164
    %v648 = vunpack.c.l.b16 %v165
    %v649 = vunpack.c.h.b16 %v165
    %v650 = vunpack.c.l.b16 %v166
    %v651 = vunpack.c.h.b16 %v166
    %v652 = vunpack.c.l.b16 %v167
    %v653 = vunpack.c.h.b16 %v167
    %v654 = vunpack.c.l.b16 %v168
    %v655 = vunpack.c.h.b16 %v168
    %v656 = vunpack.c.l.b16 %v169
    %v657 = vunpack.c.h.b16 %v169
    %v658 = vunpack.c.l.b16 %v170
    %v659 = vunpack.c.h.b16 %v170
    %v660 = vunpack.c.l.b16 %v171
    %v661 = vunpack.c.h.b16 %v171
    %v662 = vunpack.c.l.b16 %v172
    %v663 = vunpack.c.h.b16 %v172
    %v664 = vunpack.c.l.b16 %v173
    %v665 = vunpack.c.h.b16 %v173
    %v666 = vunpack.c.l.b16 %v174
    %v667 = vunpack.c.h.b16 %v174
    %v668 = vunpack.c.l.b16 %v175
    %v669 = vunpack.c.h.b16 %v175
    %v670 = vunpack.c.l.b16 %v176
    %v671 = vunpack.c.h.b16 %v176
    %v672 = vunpack.c.l.b16 %v177
    %v673 = vunpack.c.h.b16 %v177
    %v674 = vunpack.c.l.b16 %v178
    %v675 = vunpack.c.h.b16 %v178
    %v676 = vunpack.c.l.b16 %v179
    %v677 = vunpack.c.h.b16 %v179
    %v678 = vunpack.c.l.b16 %v180
    %v679 = vunpack.c.h.b16 %v180
    %v680 = vunpack.c.l.b16 %v181
    %v681 = vunpack.c.h.b16 %v181
    %v682 = vunpack.c.l.b16 %v182
    %v683 = vunpack.c.h.b16 %v182
    %v684 = vunpack.c.l.b16 %v183
    %v685 = vunpack.c.h.b16 %v183
    %v686 = vunpack.c.l.b16 %v184
    %v687 = vunpack.c.h.b16 %v184
    %v688 = vunpack.c.l.b16 %v185
    %v689 = vunpack.c.h.b16 %v185
    %v690 = vunpack.c.l.b16 %v186
    %v691 = vunpack.c.h.b16 %v186
    %v692 = vunpack.c.l.b16 %v187
    %v693 = vunpack.c.h.b16 %v187
    %v694 = vunpack.c.l.b16 %v188
    %v695 = vunpack.c.h.b16 %v188
    %v696 = vunpack.c.l.b16 %v189
    %v697 = vunpack.c.h.b16 %v189
    %v698 = vunpack.c.l.b16 %v190
    %v699 = vunpack.c.h.b16 %v190
    %v700 = vunpack.c.l.b16 %v191
    %v701 = vunpack.c.h.b16 %v191
    %v702 = vunpack.c.l.b16 %v192
    %v703 = vunpack.c.h.b16 %v192
    %v704 = vunpack.c.l.b16 %v193
    %v705 = vunpack.c.h.b16 %v193
    %v706 = vunpack.c.l.b16 %v194
    %v707 = vunpack.c.h.b16 %v194
    %v708 = vunpack.c.l.b16 %v195
    %v709 = vunpack.c.h.b16 %v195
    %v710 = vunpack.c.l.b16 %v196
    %v711 = vunpack.c.h.b16 %v196
    %v712 = vunpack.c.l.b16 %v197
    %v713 = vunpack.c.h.b16 %v197
    %v714 = vunpack.c.l.b16 %v198
    %v715 = vunpack.c.h.b16 %v198
    %v716 = vunpack.c.l.b16 %v199
    %v717 = vunpack.c.h.b16 %v199
    %v718 = vunpack.c.l.b16 %v200
    %v719 = vunpack.c.h.b16 %v200
    %v720 = vunpack.c.l.b16 %v201
    %v721 = vunpack.c.h.b16 %v201
    %v722 = vunpack.c.l.b16 %v202
    %v723 = vunpack.c.h.b16 %v202
    %v724 = vunpack.c.l.b16 %v203
    %v725 = vunpack.c.h.b16 %v203
    %v726 = vunpack.c.l.b16 %v204
    %v727 = vunpack.c.h.b16 %v204
    %v728 = vunpack.c.l.b16 %v205
    %v729 = vunpack.c.h.b16 %v205
    %v730 = vunpack.c.l.b16 %v206
    %v731 = vunpack.c.h.b16 %v206
    %v732 = vunpack.c.l.b16 %v207
    %v733 = vunpack.c.h.b16 %v207
    %v734 = vunpack.c.l.b16 %v208
    %v735 = vunpack.c.h.b16 %v208
    %v736 = vunpack.c.l.b16 %v209
    %v737 = vunpack.c.h.b16 %v209
    %v738 = vunpack.c.l.b16 %v210
    %v739 = vunpack.c.h.b16 %v210
    %v740 = vunpack.c.l.b16 %v211
    %v741 = vunpack.c.h.b16 %v211
    %v742 = vunpack.c.l.b16 %v212
    %v743 = vunpack.c.h.b16 %v212
    %v744 = vunpack.c.l.b16 %v213
    %v745 = vunpack.c.h.b16 %v213
    %v746 = vunpack.c.l.b16 %v214
    %v747 = vunpack.c.h.b16 %v214
    %v748 = vunpack.c.l.b16 %v215
    %v749 = vunpack.c.h.b16 %v215
    %v750 = vunpack.c.l.b16 %v216
    %v751 = vunpack.c.h.b16 %v216
    %v752 = vunpack.c.l.b16 %v217
    %v753 = vunpack.c.h.b16 %v217
    %v754 = vunpack.c.l.b16 %v218
    %v755 = vunpack.c.h.b16 %v218
    %v756 = vunpack.c.l.b16 %v219
    %v757 = vunpack.c.h.b16 %v219
    %v758 = vunpack.c.l.b16 %v220
    %v759 = vunpack.c.h.b16 %v220
    %v760 = vunpack.c.l.b16 %v221
    %v761 = vunpack.c.h.b16 %v221
    %v762 = vunpack.c.l.b16 %v222
    %v763 = vunpack.c.h.b16 %v222
    %v764 = vunpack.c.l.b16 %v223
    %v765 = vunpack.c.h.b16 %v223
    %v766 = vunpack.c.l.b16 %v224
    %v767 = vunpack.c.h.b16 %v224
    %v768 = vunpack.c.l.b16 %v225
    %v769 = vunpack.c.h.b16 %v225
    %v770 = vunpack.c.l.b16 %v226
    %v771 = vunpack.c.h.b16 %v226
    %v772 = vunpack.c.l.b16 %v227
    %v773 = vunpack.c.h.b16 %v227
    %v774 = vunpack.c.l.b16 %v228
    %v775 = vunpack.c.h.b16 %v228
    %v776 = vunpack.c.l.b16 %v229
    %v777 = vunpack.c.h.b16 %v229
    %v778 = vunpack.c.l.b16 %v230
    %v779 = vunpack.c.h.b16 %v230
    %v780 = vunpack.c.l.b16 %v231
    %v781 = vunpack.c.h.b16 %v231
    %v782 = vunpack.c.l.b16 %v232
    %v783 = vunpack.c.h.b16 %v232
    %v784 = vunpack.c.l.b16 %v233
    %v785 = vunpack.c.h.b16 %v233
    %v786 = vunpack.c.l.b16 %v234
    %v787 = vunpack.c.h.b16 %v234
    %v788 = vunpack.c.l.b16 %v235
    %v789 = vunpack.c.h.b16 %v235
    %v790 = vunpack.c.l.b16 %v236
    %v791 = vunpack.c.h.b16 %v236
    %v792 = vunpack.c.l.b16 %v237
    %v793 = vunpack.c.h.b16 %v237
    %v794 = vunpack.c.l.b16 %v238
    %v795 = vunpack.c.h.b16 %v238
    %v796 = vunpack.c.l.b16 %v239
    %v797 = vunpack.c.h.b16 %v239
    %v798 = vunpack.c.l.b16 %v240
    %v799 = vunpack.c.h.b16 %v240
    %v800 = vunpack.c.l.b16 %v241
    %v801 = vunpack.c.h.b16 %v241
    %v802 = vunpack.c.l.b16 %v242
    %v803 = vunpack.c.h.b16 %v242
    %v804 = vunpack.c.l.b16 %v243
    %v805 = vunpack.c.h.b16 %v243
    %v806 = vunpack.c.l.b16 %v244
    %v807 = vunpack.c.h.b16 %v244
    %v808 = vunpack.c.l.b16 %v245
    %v809 = vunpack.c.h.b16 %v245
    %v810 = vunpack.c.l.b16 %v246
    %v811 = vunpack.c.h.b16 %v246
    %v812 = vunpack.c.l.b16 %v247
    %v813 = vunpack.c.h.b16 %v247
    %v814 = vunpack.c.l.b16 %v248
    %v815 = vunpack.c.h.b16 %v248
    %v816 = vunpack.c.l.b16 %v249
    %v817 = vunpack.c.h.b16 %v249
    %v818 = vunpack.c.l.b16 %v250
    %v819 = vunpack.c.h.b16 %v250
    %v820 = vunpack.c.l.b16 %v251
    %v821 = vunpack.c.h.b16 %v251
    %v822 = vunpack.c.l.b16 %v252
    %v823 = vunpack.c.h.b16 %v252
    %v824 = vunpack.c.l.b16 %v253
    %v825 = vunpack.c.h.b16 %v253
    %v826 = vunpack.c.l.b16 %v254
    %v827 = vunpack.c.h.b16 %v254
    %v828 = vunpack.c.l.b16 %v255
    %v829 = vunpack.c.h.b16 %v255
    %v830 = vunpack.c.l.b16 %v256
    %v831 = vunpack.c.h.b16 %v256
    %v832 = vunpack.c.l.b16 %v257
    %v833 = vunpack.c.h.b16 %v257
    %v834 = vunpack.c.l.b16 %v258
    %v835 = vunpack.c.h.b16 %v258
    %v836 = vunpack.c.l.b16 %v259
    %v837 = vunpack.c.h.b16 %v259
    %v838 = vunpack.c.l.b16 %v260
    %v839 = vunpack.c.h.b16 %v260
    %v840 = vunpack.c.l.b16 %v261
    %v841 = vunpack.c.h.b16 %v261
    %v842 = vunpack.c.l.b16 %v262
    %v843 = vunpack.c.h.b16 %v262
    %v844 = vunpack.c.l.b16 %v263
    %v845 = vunpack.c.h.b16 %v263
    %v846 = vunpack.c.l.b16 %v264
    %v847 = vunpack.c.h.b16 %v264
    %v848 = vunpack.c.l.b16 %v265
    %v849 = vunpack.c.h.b16 %v265
    %v850 = vunpack.c.l.b16 %v266
    %v851 = vunpack.c.h.b16 %v266
    %v852 = vunpack.c.l.b16 %v267
    %v853 = vunpack.c.h.b16 %v267
    %v854 = vunpack.c.l.b16 %v268
    %v855 = vunpack.c.h.b16 %v268
    %v856 = vunpack.c.l.b16 %v269
    %v857 = vunpack.c.h.b16 %v269
    %v858 = vunpack.c.l.b16 %v270
    %v859 = vunpack.c.h.b16 %v270
    %v860 = vunpack.c.l.b16 %v271
    %v861 = vunpack.c.h.b16 %v271
    %v862 = vunpack.c.l.b16 %v272
    %v863 = vunpack.c.h.b16 %v272
    %v864 = vunpack.c.l.b16 %v273
    %v865 = vunpack.c.h.b16 %v273
    %v866 = vunpack.c.l.b16 %v274
    %v867 = vunpack.c.h.b16 %v274
    %v868 = vunpack.c.l.b16 %v275
    %v869 = vunpack.c.h.b16 %v275
    %v870 = vunpack.c.l.b16 %v276
    %v871 = vunpack.c.h.b16 %v276
    %v872 = vunpack.c.l.b16 %v277
    %v873 = vunpack.c.h.b16 %v277
    %v874 = vunpack.c.l.b16 %v278
    %v875 = vunpack.c.h.b16 %v278
    %v876 = vunpack.c.l.b16 %v279
    %v877 = vunpack.c.h.b16 %v279
    %v878 = vunpack.c.l.b16 %v280
    %v879 = vunpack.c.h.b16 %v280
    %v880 = vunpack.c.l.b16 %v281
    %v881 = vunpack.c.h.b16 %v281
    %v882 = vunpack.c.l.b16 %v282
    %v883 = vunpack.c.h.b16 %v282
    %v884 = vunpack.c.l.b16 %v283
    %v885 = vunpack.c.h.b16 %v283
    %v886 = vunpack.c.l.b16 %v284
    %v887 = vunpack.c.h.b16 %v284
    %v888 = vunpack.c.l.b16 %v285
    %v889 = vunpack.c.h.b16 %v285
    %v890 = vunpack.c.l.b16 %v286
    %v891 = vunpack.c.h.b16 %v286
    %v892 = vunpack.c.l.b16 %v287
    %v893 = vunpack.c.h.b16 %v287
    %v894 = vunpack.c.l.b16 %v288
    %v895 = vunpack.c.h.b16 %v288
    %v896 = vunpack.c.l.b16 %v289
    %v897 = vunpack.c.h.b16 %v289
    %v898 = vunpack.c.l.b16 %v290
    %v899 = vunpack.c.h.b16 %v290
    %v900 = vunpack.c.l.b16 %v291
    %v901 = vunpack.c.h.b16 %v291
    %v902 = vpack.c.b16 %v514, %v510
    %v903 = vpack.c.b16 %v515, %v511
    %v904 = vpack.c.b16 %v516, %v512
    %v905 = vpack.c.b16 %v517, %v513
    %v906 = vpack.c.b16 %v522, %v518
    %v907 = vpack.c.b16 %v523, %v519
    %v908 = vpack.c.b16 %v524, %v520
    %v909 = vpack.c.b16 %v525, %v521
    %v910 = vpack.c.b16 %v530, %v526
    %v911 = vpack.c.b16 %v531, %v527
    %v912 = vpack.c.b16 %v532, %v528
    %v913 = vpack.c.b16 %v533, %v529
    %v914 = vpack.c.b16 %v538, %v534
    %v915 = vpack.c.b16 %v539, %v535
    %v916 = vpack.c.b16 %v540, %v536
    %v917 = vpack.c.b16 %v541, %v537
    %v918 = vpack.c.b16 %v546, %v542
    %v919 = vpack.c.b16 %v547, %v543
    %v920 = vpack.c.b16 %v548, %v544
    %v921 = vpack.c.b16 %v549, %v545
    %v922 = vpack.c.b16 %v554, %v550
    %v923 = vpack.c.b16 %v555, %v551
    %v924 = vpack.c.b16 %v556, %v552
    %v925 = vpack.c.b16 %v557, %v553
    %v926 = vpack.c.b16 %v562, %v558
    %v927 = vpack.c.b16 %v563, %v559
    %v928 = vpack.c.b16 %v564, %v560
    %v929 = vpack.c.b16 %v565, %v561
    %v930 = vpack.c.b16 %v570, %v566
    %v931 = vpack.c.b16 %v571, %v567
    %v932 = vpack.c.b16 %v572, %v568
    %v933 = vpack.c.b16 %v573, %v569
    %v934 = vpack.c.b16 %v578, %v574
    %v935 = vpack.c.b16 %v579, %v575
    %v936 = vpack.c.b16 %v580, %v576
    %v937 = vpack.c.b16 %v581, %v577
    %v938 = vpack.c.b16 %v586, %v582
    %v939 = vpack.c.b16 %v587, %v583
    %v940 = vpack.c.b16 %v588, %v584
    %v941 = vpack.c.b16 %v589, %v585
    %v942 = vpack.c.b16 %v594, %v590
    %v943 = vpack.c.b16 %v595, %v591
    %v944 = vpack.c.b16 %v596, %v592
    %v945 = vpack.c.b16 %v597, %v593
    %v946 = vpack.c.b16 %v602, %v598
    %v947 = vpack.c.b16 %v603, %v599
    %v948 = vpack.c.b16 %v604, %v600
    %v949 = vpack.c.b16 %v605, %v601
    %v950 = vpack.c.b16 %v610, %v606
    %v951 = vpack.c.b16 %v611, %v607
    %v952 = vpack.c.b16 %v612, %v608
    %v953 = vpack.c.b16 %v613, %v609
    %v954 = vpack.c.b16 %v618, %v614
    %v955 = vpack.c.b16 %v619, %v615
    %v956 = vpack.c.b16 %v620, %v616
    %v957 = vpack.c.b16 %v621, %v617
    %v958 = vpack.c.b16 %v626, %v622
    %v959 = vpack.c.b16 %v627, %v623
    %v960 = vpack.c.b16 %v628, %v624
    %v961 = vpack.c.b16 %v629, %v625
    %v962 = vpack.c.b16 %v634, %v630
    %v963 = vpack.c.b16 %v635, %v631
    %v964 = vpack.c.b16 %v636, %v632
    %v965 = vpack.c.b16 %v637, %v633
    %v966 = vpack.c.b16 %v642, %v638
    %v967 = vpack.c.b16 %v643, %v639
    %v968 = vpack.c.b16 %v644, %v640
    %v969 = vpack.c.b16 %v645, %v641
    %v970 = vpack.c.b16 %v650, %v646
    %v971 = vpack.c.b16 %v651, %v647
    %v972 = vpack.c.b16 %v652, %v648
    %v973 = vpack.c.b16 %v653, %v649
    %v974 = vpack.c.b16 %v658, %v654
    %v975 = vpack.c.b16 %v659, %v655
    %v976 = vpack.c.b16 %v660, %v656
    %v977 = vpack.c.b16 %v661, %v657
    %v978 = vpack.c.b16 %v666, %v662
    %v979 = vpack.c.b16 %v667, %v663
    %v980 = vpack.c.b16 %v668, %v664
    %v981 = vpack.c.b16 %v669, %v665
    %v982 = vpack.c.b16 %v674, %v670
    %v983 = vpack.c.b16 %v675, %v671
    %v984 = vpack.c.b16 %v676, %v672
    %v985 = vpack.c.b16 %v677, %v673
    %v986 = vpack.c.b16 %v682, %v678
    %v987 = vpack.c.b16 %v683, %v679
    %v988 = vpack.c.b16 %v684, %v680
    %v989 = vpack.c.b16 %v685, %v681
    %v990 = vpack.c.b16 %v690, %v686
    %v991 = vpack.c.b16 %v691, %v687
    %v992 = vpack.c.b16 %v692, %v688
    %v993 = vpack.c.b16 %v693, %v689
    %v994 = vpack.c.b16 %v698, %v694
    %v995 = vpack.c.b16 %v699, %v695
    %v996 = vpack.c.b16 %v700, %v696
    %v997 = vpack.c.b16 %v701, %v697
    %v998 = vpack.c.b16 %v706, %v702
    %v999 = vpack.c.b16 %v707, %v703
    %v1000 = vpack.c.b16 %v708, %v704
    %v1001 = vpack.c.b16 %v709, %v705
    %v1002 = vpack.c.b16 %v714, %v710
    %v1003 = vpack.c.b16 %v715, %v711
    %v1004 = vpack.c.b16 %v716, %v712
    %v1005 = vpack.c.b16 %v717, %v713
    %v1006 = vpack.c.b16 %v722, %v718
    %v1007 = vpack.c.b16 %v723, %v719
    %v1008 = vpack.c.b16 %v724, %v720
    %v1009 = vpack.c.b16 %v725, %v721
    %v1010 = vpack.c.b16 %v730, %v726
    %v1011 = vpack.c.b16 %v731, %v727
    %v1012 = vpack.c.b16 %v732, %v728
    %v1013 = vpack.c.b16 %v733, %v729
    %v1014 = vpack.c.b16 %v738, %v734
    %v1015 = vpack.c.b16 %v739, %v735
    %v1016 = vpack.c.b16 %v740, %v736
    %v1017 = vpack.c.b16 %v741, %v737
    %v1018 = vpack.c.b16 %v746, %v742
    %v1019 = vpack.c.b16 %v747, %v743
    %v1020 = vpack.c.b16 %v748, %v744
    %v1021 = vpack.c.b16 %v749, %v745
    %v1022 = vpack.c.b16 %v754, %v750
    %v1023 = vpack.c.b16 %v755, %v751
    %v1024 = vpack.c.b16 %v756, %v752
    %v1025 = vpack.c.b16 %v757, %v753
    %v1026 = vpack.c.b16 %v762, %v758
    %v1027 = vpack.c.b16 %v763, %v759
    %v1028 = vpack.c.b16 %v764, %v760
    %v1029 = vpack.c.b16 %v765, %v761
    %v1030 = vpack.c.b16 %v770, %v766
    %v1031 = vpack.c.b16 %v771, %v767
    %v1032 = vpack.c.b16 %v772, %v768
    %v1033 = vpack.c.b16 %v773, %v769
    %v1034 = vpack.c.b16 %v778, %v774
    %v1035 = vpack.c.b16 %v779, %v775
    %v1036 = vpack.c.b16 %v780, %v776
    %v1037 = vpack.c.b16 %v781, %v777
    %v1038 = vpack.c.b16 %v786, %v782
    %v1039 = vpack.c.b16 %v787, %v783
    %v1040 = vpack.c.b16 %v788, %v784
    %v1041 = vpack.c.b16 %v789, %v785
    %v1042 = vpack.c.b16 %v794, %v790
    %v1043 = vpack.c.b16 %v795, %v791
    %v1044 = vpack.c.b16 %v796, %v792
    %v1045 = vpack.c.b16 %v797, %v793
    %v1046 = vpack.c.b16 %v802, %v798
    %v1047 = vpack.c.b16 %v803, %v799
    %v1048 = vpack.c.b16 %v804, %v800
    %v1049 = vpack.c.b16 %v805, %v801
    %v1050 = vpack.c.b16 %v810, %v806
    %v1051 = vpack.c.b16 %v811, %v807
    %v1052 = vpack.c.b16 %v812, %v808
    %v1053 = vpack.c.b16 %v813, %v809
    %v1054 = vpack.c.b16 %v818, %v814
    %v1055 = vpack.c.b16 %v819, %v815
    %v1056 = vpack.c.b16 %v820, %v816
    %v1057 = vpack.c.b16 %v821, %v817
    %v1058 = vpack.c.b16 %v826, %v822
    %v1059 = vpack.c.b16 %v827, %v823
    %v1060 = vpack.c.b16 %v828, %v824
    %v1061 = vpack.c.b16 %v829, %v825
    %v1062 = vpack.c.b16 %v834, %v830
    %v1063 = vpack.c.b16 %v835, %v831
    %v1064 = vpack.c.b16 %v836, %v832
    %v1065 = vpack.c.b16 %v837, %v833
    %v1066 = vpack.c.b16 %v842, %v838
    %v1067 = vpack.c.b16 %v843, %v839
    %v1068 = vpack.c.b16 %v844, %v840
    %v1069 = vpack.c.b16 %v845, %v841
    %v1070 = vpack.c.b16 %v850, %v846
    %v1071 = vpack.c.b16 %v851, %v847
    %v1072 = vpack.c.b16 %v852, %v848
    %v1073 = vpack.c.b16 %v853, %v849
    %v1074 = vpack.c.b16 %v858, %v854
    %v1075 = vpack.c.b16 %v859, %v855
    %v1076 = vpack.c.b16 %v860, %v856
    %v1077 = vpack.c.b16 %v861, %v857
    %v1078 = vpack.c.b16 %v866, %v862
    %v1079 = vpack.c.b16 %v867, %v863
    %v1080 = vpack.c.b16 %v868, %v864
    %v1081 = vpack.c.b16 %v869, %v865
    %v1082 = vpack.c.b16 %v874, %v870
    %v1083 = vpack.c.b16 %v875, %v871
    %v1084 = vpack.c.b16 %v876, %v872
    %v1085 = vpack.c.b16 %v877, %v873
    %v1086 = vpack.c.b16 %v882, %v878
    %v1087 = vpack.c.b16 %v883, %v879
    %v1088 = vpack.c.b16 %v884, %v880
    %v1089 = vpack.c.b16 %v885, %v881
    %v1090 = vpack.c.b16 %v890, %v886
    %v1091 = vpack.c.b16 %v891, %v887
    %v1092 = vpack.c.b16 %v892, %v888
    %v1093 = vpack.c.b16 %v893, %v889
    %v1094 = vpack.c.b16 %v898, %v894
    %v1095 = vpack.c.b16 %v899, %v895
    %v1096 = vpack.c.b16 %v900, %v896
    %v1097 = vpack.c.b16 %v901, %v897
    %vm1294 = vcmask 130048
    %v1296 = vsel %vm1294, %v95, 0
    %1298 = vmatprep.subr.bf16.mxu0 %v903
    %1299 = vmatpush1.bf16.msra.mxu0 %v902
    %1300 = vmatprep.subr.bf16.mxu0 %v907
    %1301 = vmatpush1.bf16.msra.mxu0 %v906
    %1302 = vmatprep.subr.bf16.mxu0 %v911
    %1303 = vmatpush1.bf16.msra.mxu0 %v910
    %1304 = vmatprep.subr.bf16.mxu0 %v915
    %1305 = vmatpush1.bf16.msra.mxu0 %v914
    %1306 = vmatprep.subr.bf16.mxu0 %v919
    %1307 = vmatpush1.bf16.msra.mxu0 %v918
    %1308 = vmatprep.subr.bf16.mxu0 %v923
    %1309 = vmatpush1.bf16.msra.mxu0 %v922
    %1310 = vmatprep.subr.bf16.mxu0 %v927
    %1311 = vmatpush1.bf16.msra.mxu0 %v926
    %1312 = vmatprep.subr.bf16.mxu0 %v931
    %1313 = vmatpush1.bf16.msra.mxu0 %v930
    %1314 = vmatprep.subr.bf16.mxu0 %v935
    %1315 = vmatpush1.bf16.msra.mxu0 %v934
    %1316 = vmatprep.subr.bf16.mxu0 %v939
    %1317 = vmatpush1.bf16.msra.mxu0 %v938
    %1318 = vmatprep.subr.bf16.mxu0 %v943
    %1319 = vmatpush1.bf16.msra.mxu0 %v942
    %1320 = vmatprep.subr.bf16.mxu0 %v947
    %1321 = vmatpush1.bf16.msra.mxu0 %v946
    %1322 = vmatprep.subr.bf16.mxu0 %v951
    %1323 = vmatpush1.bf16.msra.mxu0 %v950
    %1324 = vmatprep.subr.bf16.mxu0 %v955
    %1325 = vmatpush1.bf16.msra.mxu0 %v954
    %1326 = vmatprep.subr.bf16.mxu0 %v959
    %1327 = vmatpush1.bf16.msra.mxu0 %v958
    %1328 = vmatprep.subr.bf16.mxu0 %v963
    %1329 = vmatpush1.bf16.msra.mxu0 %v962
    %1330 = vmatprep.mubr.bf16.mxu0 %v90
    %1331 = vmatmul.mubr.bf16.gmra.mrb[0].mxu0 %v89
    %v1332 = vpop.f32.mrb[0].mxu0
    %v1333 = vadd.f32 %v297, %v1332
    %v1334 = vpop.f32.mrb[0].mxu0
    %v1335 = vadd.f32 %v301, %v1334
    %v1336 = vpop.f32.mrb[0].mxu0
    %v1337 = vadd.f32 %v297, %v1336
    %v1338 = vpop.f32.mrb[0].mxu0
    %v1339 = vadd.f32 %v301, %v1338
    %1340 = vdwg.mxu0
    %1341 = vmatprep.subr.bf16.mxu0 %v967
    %1342 = vmatpush1.bf16.msra.mxu0 %v966
    %1343 = vmatprep.subr.bf16.mxu0 %v971
    %1344 = vmatpush1.bf16.msra.mxu0 %v970
    %1345 = vmatprep.subr.bf16.mxu0 %v975
    %1346 = vmatpush1.bf16.msra.mxu0 %v974
    %1347 = vmatprep.subr.bf16.mxu0 %v979
    %1348 = vmatpush1.bf16.msra.mxu0 %v978
    %1349 = vmatprep.subr.bf16.mxu0 %v983
    %1350 = vmatpush1.bf16.msra.mxu0 %v982
    %1351 = vmatprep.subr.bf16.mxu0 %v987
    %1352 = vmatpush1.bf16.msra.mxu0 %v986
    %1353 = vmatprep.subr.bf16.mxu0 %v991
    %1354 = vmatpush1.bf16.msra.mxu0 %v990
    %1355 = vmatprep.subr.bf16.mxu0 %v995
    %1356 = vmatpush1.bf16.msra.mxu0 %v994
    %1357 = vmatprep.subr.bf16.mxu0 %v999
    %1358 = vmatpush1.bf16.msra.mxu0 %v998
    %1359 = vmatprep.subr.bf16.mxu0 %v1003
    %1360 = vmatpush1.bf16.msra.mxu0 %v1002
    %1361 = vmatprep.subr.bf16.mxu0 %v1007
    %1362 = vmatpush1.bf16.msra.mxu0 %v1006
    %1363 = vmatprep.subr.bf16.mxu0 %v1011
    %1364 = vmatpush1.bf16.msra.mxu0 %v1010
    %1365 = vmatprep.subr.bf16.mxu0 %v1015
    %1366 = vmatpush1.bf16.msra.mxu0 %v1014
    %1367 = vmatprep.subr.bf16.mxu0 %v1019
    %1368 = vmatpush1.bf16.msra.mxu0 %v1018
    %1369 = vmatprep.subr.bf16.mxu0 %v1023
    %1370 = vmatpush1.bf16.msra.mxu0 %v1022
    %1371 = vmatprep.subr.bf16.mxu0 %v1027
    %1372 = vmatpush1.bf16.msra.mxu0 %v1026
    %1373 = vmatprep.mubr.bf16.mxu0 %v92
    %1374 = vmatmul.mubr.bf16.gmra.mrb[0].mxu0 %v91
    %v1375 = vpop.f32.mrb[0].mxu0
    %v1376 = vadd.f32 %v1333, %v1375
    %v1377 = vpop.f32.mrb[0].mxu0
    %v1378 = vadd.f32 %v1335, %v1377
    %v1379 = vpop.f32.mrb[0].mxu0
    %v1380 = vadd.f32 %v1337, %v1379
    %v1381 = vpop.f32.mrb[0].mxu0
    %v1382 = vadd.f32 %v1339, %v1381
    %1383 = vdwg.mxu0
    %1384 = vmatprep.subr.bf16.mxu0 %v1031
    %1385 = vmatpush1.bf16.msra.mxu0 %v1030
    %1386 = vmatprep.subr.bf16.mxu0 %v1035
    %1387 = vmatpush1.bf16.msra.mxu0 %v1034
    %1388 = vmatprep.subr.bf16.mxu0 %v1039
    %1389 = vmatpush1.bf16.msra.mxu0 %v1038
    %1390 = vmatprep.subr.bf16.mxu0 %v1043
    %1391 = vmatpush1.bf16.msra.mxu0 %v1042
    %1392 = vmatprep.subr.bf16.mxu0 %v1047
    %1393 = vmatpush1.bf16.msra.mxu0 %v1046
    %1394 = vmatprep.subr.bf16.mxu0 %v1051
    %1395 = vmatpush1.bf16.msra.mxu0 %v1050
    %1396 = vmatprep.subr.bf16.mxu0 %v1055
    %1397 = vmatpush1.bf16.msra.mxu0 %v1054
    %1398 = vmatprep.subr.bf16.mxu0 %v1059
    %1399 = vmatpush1.bf16.msra.mxu0 %v1058
    %1400 = vmatprep.subr.bf16.mxu0 %v1063
    %1401 = vmatpush1.bf16.msra.mxu0 %v1062
    %1402 = vmatprep.subr.bf16.mxu0 %v1067
    %1403 = vmatpush1.bf16.msra.mxu0 %v1066
    %1404 = vmatprep.subr.bf16.mxu0 %v1071
    %1405 = vmatpush1.bf16.msra.mxu0 %v1070
    %1406 = vmatprep.subr.bf16.mxu0 %v1075
    %1407 = vmatpush1.bf16.msra.mxu0 %v1074
    %1408 = vmatprep.subr.bf16.mxu0 %v1079
    %1409 = vmatpush1.bf16.msra.mxu0 %v1078
    %1410 = vmatprep.subr.bf16.mxu0 %v1083
    %1411 = vmatpush1.bf16.msra.mxu0 %v1082
    %1412 = vmatprep.subr.bf16.mxu0 %v1087
    %1413 = vmatpush1.bf16.msra.mxu0 %v1086
    %1414 = vmatprep.subr.bf16.mxu0 %v1091
    %1415 = vmatpush1.bf16.msra.mxu0 %v1090
    %1416 = vmatprep.mubr.bf16.mxu0 %v94
    %1417 = vmatmul.mubr.bf16.gmra.mrb[0].mxu0 %v93
    %v1418 = vpop.f32.mrb[0].mxu0
    %v1419 = vadd.f32 %v1376, %v1418
    %v1420 = vpop.f32.mrb[0].mxu0
    %v1421 = vadd.f32 %v1378, %v1420
    %v1422 = vpop.f32.mrb[0].mxu0
    %v1423 = vadd.f32 %v1380, %v1422
    %v1424 = vpop.f32.mrb[0].mxu0
    %v1425 = vadd.f32 %v1382, %v1424
    %1426 = vdwg.mxu0
    %1427 = vmatprep.subr.bf16.mxu0 %v1095
    %1428 = vmatpush1.bf16.msra.mxu0 %v1094
    %1429 = vmatprep.subr.bf16.mxu0 0
    %1430 = vmatpush1.bf16.msra.mxu0 0
    %1431 = vmatprep.subr.bf16.mxu0 0
    %1432 = vmatpush1.bf16.msra.mxu0 0
    %1433 = vmatprep.subr.bf16.mxu0 0
    %1434 = vmatpush1.bf16.msra.mxu0 0
    %1435 = vmatprep.subr.bf16.mxu0 0
    %1436 = vmatpush1.bf16.msra.mxu0 0
    %1437 = vmatprep.subr.bf16.mxu0 0
    %1438 = vmatpush1.bf16.msra.mxu0 0
    %1439 = vmatprep.subr.bf16.mxu0 0
    %1440 = vmatpush1.bf16.msra.mxu0 0
    %1441 = vmatprep.subr.bf16.mxu0 0
    %1442 = vmatpush1.bf16.msra.mxu0 0
    %1443 = vmatprep.subr.bf16.mxu0 0
    %1444 = vmatpush1.bf16.msra.mxu0 0
    %1445 = vmatprep.subr.bf16.mxu0 0
    %1446 = vmatpush1.bf16.msra.mxu0 0
    %1447 = vmatprep.subr.bf16.mxu0 0
    %1448 = vmatpush1.bf16.msra.mxu0 0
    %1449 = vmatprep.subr.bf16.mxu0 0
    %1450 = vmatpush1.bf16.msra.mxu0 0
    %1451 = vmatprep.subr.bf16.mxu0 0
    %1452 = vmatpush1.bf16.msra.mxu0 0
    %1453 = vmatprep.subr.bf16.mxu0 0
    %1454 = vmatpush1.bf16.msra.mxu0 0
    %1455 = vmatprep.subr.bf16.mxu0 0
    %1456 = vmatpush1.bf16.msra.mxu0 0
    %1457 = vmatprep.subr.bf16.mxu0 0
    %1458 = vmatpush1.bf16.msra.mxu0 0
    %1459 = vmatprep.mubr.bf16.mxu0 0
    %1460 = vmatmul.mubr.bf16.gmra.mrb[0].mxu0 %v1296
    %v1461 = vpop.f32.mrb[0].mxu0
    %v1462 = vadd.f32 %v1419, %v1461
    %v1463 = vpop.f32.mrb[0].mxu0
    %v1464 = vadd.f32 %v1421, %v1463
    %v1465 = vpop.f32.mrb[0].mxu0
    %v1466 = vadd.f32 %v1423, %v1465
    %v1467 = vpop.f32.mrb[0].mxu0
    %v1468 = vadd.f32 %v1425, %v1467
    %1469 = vdwg.mxu0
    %1470 = vmatprep.subr.bf16.mxu0 %v905
    %1471 = vmatpush1.bf16.msra.mxu0 %v904
    %1472 = vmatprep.subr.bf16.mxu0 %v909
    %1473 = vmatpush1.bf16.msra.mxu0 %v908
    %1474 = vmatprep.subr.bf16.mxu0 %v913
    %1475 = vmatpush1.bf16.msra.mxu0 %v912
    %1476 = vmatprep.subr.bf16.mxu0 %v917
    %1477 = vmatpush1.bf16.msra.mxu0 %v916
    %1478 = vmatprep.subr.bf16.mxu0 %v921
    %1479 = vmatpush1.bf16.msra.mxu0 %v920
    %1480 = vmatprep.subr.bf16.mxu0 %v925
    %1481 = vmatpush1.bf16.msra.mxu0 %v924
    %1482 = vmatprep.subr.bf16.mxu0 %v929
    %1483 = vmatpush1.bf16.msra.mxu0 %v928
    %1484 = vmatprep.subr.bf16.mxu0 %v933
    %1485 = vmatpush1.bf16.msra.mxu0 %v932
    %1486 = vmatprep.subr.bf16.mxu0 %v937
    %1487 = vmatpush1.bf16.msra.mxu0 %v936
    %1488 = vmatprep.subr.bf16.mxu0 %v941
    %1489 = vmatpush1.bf16.msra.mxu0 %v940
    %1490 = vmatprep.subr.bf16.mxu0 %v945
    %1491 = vmatpush1.bf16.msra.mxu0 %v944
    %1492 = vmatprep.subr.bf16.mxu0 %v949
    %1493 = vmatpush1.bf16.msra.mxu0 %v948
    %1494 = vmatprep.subr.bf16.mxu0 %v953
    %1495 = vmatpush1.bf16.msra.mxu0 %v952
    %1496 = vmatprep.subr.bf16.mxu0 %v957
    %1497 = vmatpush1.bf16.msra.mxu0 %v956
    %1498 = vmatprep.subr.bf16.mxu0 %v961
    %1499 = vmatpush1.bf16.msra.mxu0 %v960
    %1500 = vmatprep.subr.bf16.mxu0 %v965
    %1501 = vmatpush1.bf16.msra.mxu0 %v964
    %1502 = vmatprep.mubr.bf16.mxu0 %v90
    %1503 = vmatmul.mubr.bf16.gmra.mrb[0].mxu0 %v89
    %v1504 = vpop.f32.mrb[0].mxu0
    %v1505 = vadd.f32 %v305, %v1504
    %v1506 = vpop.f32.mrb[0].mxu0
    %v1507 = vadd.f32 %v309, %v1506
    %v1508 = vpop.f32.mrb[0].mxu0
    %v1509 = vadd.f32 %v305, %v1508
    %v1510 = vpop.f32.mrb[0].mxu0
    %v1511 = vadd.f32 %v309, %v1510
    %1512 = vdwg.mxu0
    %1513 = vmatprep.subr.bf16.mxu0 %v969
    %1514 = vmatpush1.bf16.msra.mxu0 %v968
    %1515 = vmatprep.subr.bf16.mxu0 %v973
    %1516 = vmatpush1.bf16.msra.mxu0 %v972
    %1517 = vmatprep.subr.bf16.mxu0 %v977
    %1518 = vmatpush1.bf16.msra.mxu0 %v976
    %1519 = vmatprep.subr.bf16.mxu0 %v981
    %1520 = vmatpush1.bf16.msra.mxu0 %v980
    %1521 = vmatprep.subr.bf16.mxu0 %v985
    %1522 = vmatpush1.bf16.msra.mxu0 %v984
    %1523 = vmatprep.subr.bf16.mxu0 %v989
    %1524 = vmatpush1.bf16.msra.mxu0 %v988
    %1525 = vmatprep.subr.bf16.mxu0 %v993
    %1526 = vmatpush1.bf16.msra.mxu0 %v992
    %1527 = vmatprep.subr.bf16.mxu0 %v997
    %1528 = vmatpush1.bf16.msra.mxu0 %v996
    %1529 = vmatprep.subr.bf16.mxu0 %v1001
    %1530 = vmatpush1.bf16.msra.mxu0 %v1000
    %1531 = vmatprep.subr.bf16.mxu0 %v1005
    %1532 = vmatpush1.bf16.msra.mxu0 %v1004
    %1533 = vmatprep.subr.bf16.mxu0 %v1009
    %1534 = vmatpush1.bf16.msra.mxu0 %v1008
    %1535 = vmatprep.subr.bf16.mxu0 %v1013
    %1536 = vmatpush1.bf16.msra.mxu0 %v1012
    %1537 = vmatprep.subr.bf16.mxu0 %v1017
    %1538 = vmatpush1.bf16.msra.mxu0 %v1016
    %1539 = vmatprep.subr.bf16.mxu0 %v1021
    %1540 = vmatpush1.bf16.msra.mxu0 %v1020
    %1541 = vmatprep.subr.bf16.mxu0 %v1025
    %1542 = vmatpush1.bf16.msra.mxu0 %v1024
    %1543 = vmatprep.subr.bf16.mxu0 %v1029
    %1544 = vmatpush1.bf16.msra.mxu0 %v1028
    %1545 = vmatprep.mubr.bf16.mxu0 %v92
    %1546 = vmatmul.mubr.bf16.gmra.mrb[0].mxu0 %v91
    %v1547 = vpop.f32.mrb[0].mxu0
    %v1548 = vadd.f32 %v1505, %v1547
    %v1549 = vpop.f32.mrb[0].mxu0
    %v1550 = vadd.f32 %v1507, %v1549
    %v1551 = vpop.f32.mrb[0].mxu0
    %v1552 = vadd.f32 %v1509, %v1551
    %v1553 = vpop.f32.mrb[0].mxu0
    %v1554 = vadd.f32 %v1511, %v1553
    %1555 = vdwg.mxu0
    %1556 = vmatprep.subr.bf16.mxu0 %v1033
    %1557 = vmatpush1.bf16.msra.mxu0 %v1032
    %1558 = vmatprep.subr.bf16.mxu0 %v1037
    %1559 = vmatpush1.bf16.msra.mxu0 %v1036
    %1560 = vmatprep.subr.bf16.mxu0 %v1041
    %1561 = vmatpush1.bf16.msra.mxu0 %v1040
    %1562 = vmatprep.subr.bf16.mxu0 %v1045
    %1563 = vmatpush1.bf16.msra.mxu0 %v1044
    %1564 = vmatprep.subr.bf16.mxu0 %v1049
    %1565 = vmatpush1.bf16.msra.mxu0 %v1048
    %1566 = vmatprep.subr.bf16.mxu0 %v1053
    %1567 = vmatpush1.bf16.msra.mxu0 %v1052
    %1568 = vmatprep.subr.bf16.mxu0 %v1057
    %1569 = vmatpush1.bf16.msra.mxu0 %v1056
    %1570 = vmatprep.subr.bf16.mxu0 %v1061
    %1571 = vmatpush1.bf16.msra.mxu0 %v1060
    %1572 = vmatprep.subr.bf16.mxu0 %v1065
    %1573 = vmatpush1.bf16.msra.mxu0 %v1064
    %1574 = vmatprep.subr.bf16.mxu0 %v1069
    %1575 = vmatpush1.bf16.msra.mxu0 %v1068
    %1576 = vmatprep.subr.bf16.mxu0 %v1073
    %1577 = vmatpush1.bf16.msra.mxu0 %v1072
    %1578 = vmatprep.subr.bf16.mxu0 %v1077
    %1579 = vmatpush1.bf16.msra.mxu0 %v1076
    %1580 = vmatprep.subr.bf16.mxu0 %v1081
    %1581 = vmatpush1.bf16.msra.mxu0 %v1080
    %1582 = vmatprep.subr.bf16.mxu0 %v1085
    %1583 = vmatpush1.bf16.msra.mxu0 %v1084
    %1584 = vmatprep.subr.bf16.mxu0 %v1089
    %1585 = vmatpush1.bf16.msra.mxu0 %v1088
    %1586 = vmatprep.subr.bf16.mxu0 %v1093
    %1587 = vmatpush1.bf16.msra.mxu0 %v1092
    %1588 = vmatprep.mubr.bf16.mxu0 %v94
    %1589 = vmatmul.mubr.bf16.gmra.mrb[0].mxu0 %v93
    %v1590 = vpop.f32.mrb[0].mxu0
    %v1591 = vadd.f32 %v1548, %v1590
    %v1592 = vpop.f32.mrb[0].mxu0
    %v1593 = vadd.f32 %v1550, %v1592
    %v1594 = vpop.f32.mrb[0].mxu0
    %v1595 = vadd.f32 %v1552, %v1594
    %v1596 = vpop.f32.mrb[0].mxu0
    %v1597 = vadd.f32 %v1554, %v1596
    %1598 = vdwg.mxu0
    %1599 = vmatprep.subr.bf16.mxu0 %v1097
    %1600 = vmatpush1.bf16.msra.mxu0 %v1096
    %1601 = vmatprep.subr.bf16.mxu0 0
    %1602 = vmatpush1.bf16.msra.mxu0 0
    %1603 = vmatprep.subr.bf16.mxu0 0
    %1604 = vmatpush1.bf16.msra.mxu0 0
    %1605 = vmatprep.subr.bf16.mxu0 0
    %1606 = vmatpush1.bf16.msra.mxu0 0
    %1607 = vmatprep.subr.bf16.mxu0 0
    %1608 = vmatpush1.bf16.msra.mxu0 0
    %1609 = vmatprep.subr.bf16.mxu0 0
    %1610 = vmatpush1.bf16.msra.mxu0 0
    %1611 = vmatprep.subr.bf16.mxu0 0
    %1612 = vmatpush1.bf16.msra.mxu0 0
    %1613 = vmatprep.subr.bf16.mxu0 0
    %1614 = vmatpush1.bf16.msra.mxu0 0
    %1615 = vmatprep.subr.bf16.mxu0 0
    %1616 = vmatpush1.bf16.msra.mxu0 0
    %1617 = vmatprep.subr.bf16.mxu0 0
    %1618 = vmatpush1.bf16.msra.mxu0 0
    %1619 = vmatprep.subr.bf16.mxu0 0
    %1620 = vmatpush1.bf16.msra.mxu0 0
    %1621 = vmatprep.subr.bf16.mxu0 0
    %1622 = vmatpush1.bf16.msra.mxu0 0
    %1623 = vmatprep.subr.bf16.mxu0 0
    %1624 = vmatpush1.bf16.msra.mxu0 0
    %1625 = vmatprep.subr.bf16.mxu0 0
    %1626 = vmatpush1.bf16.msra.mxu0 0
    %1627 = vmatprep.subr.bf16.mxu0 0
    %1628 = vmatpush1.bf16.msra.mxu0 0
    %1629 = vmatprep.subr.bf16.mxu0 0
    %1630 = vmatpush1.bf16.msra.mxu0 0
    %1631 = vmatprep.mubr.bf16.mxu0 0
    %1632 = vmatmul.mubr.bf16.gmra.mrb[0].mxu0 %v1296
    %v1633 = vpop.f32.mrb[0].mxu0
    %v1634 = vadd.f32 %v1591, %v1633
    %v1635 = vpop.f32.mrb[0].mxu0
    %v1636 = vadd.f32 %v1593, %v1635
    %v1637 = vpop.f32.mrb[0].mxu0
    %v1638 = vadd.f32 %v1595, %v1637
    %v1639 = vpop.f32.mrb[0].mxu0
    %v1640 = vadd.f32 %v1597, %v1639
    %1641 = vdwg.mxu0
    %v1642 = vmax.f32 %v1462, 0.0
    %v1643 = vmax.f32 %v1464, 0.0
    %v1644 = vmax.f32 %v1634, 0.0
    %v1645 = vmax.f32 %v1636, 0.0
    %v1646 = vmax.f32 %v1466, 0.0
    %v1647 = vmax.f32 %v1468, 0.0
    %v1648 = vmax.f32 %v1638, 0.0
    %v1649 = vmax.f32 %v1640, 0.0
    %v1650 = vpack.c.bf16 %v1646, %v1642
    %v1651 = vpack.c.bf16 %v1647, %v1643
    %v1652 = vpack.c.bf16 %v1648, %v1644
    %v1653 = vpack.c.bf16 %v1649, %v1645
    %v1654 = vld [vmem:[#allocation2] sm:$0xff]
    %v1655 = vld [vmem:[#allocation2 + $0x8] sm:$0xff]
    %v1656 = vld [vmem:[#allocation2 + $0x10] sm:$0xff]
    %v1657 = vld [vmem:[#allocation2 + $0x18] sm:$0xff]
    %v1658 = vld [vmem:[#allocation2 + $0x20] sm:$0xff]
    %v1659 = vld [vmem:[#allocation2 + $0x28] sm:$0xff]
    %v1660 = vld [vmem:[#allocation2 + $0x30] sm:$0xff]
    %v1661 = vld [vmem:[#allocation2 + $0x38] sm:$0xff]
    %v1662 = vld [vmem:[#allocation2 + $0x40] sm:$0xff]
    %v1663 = vld [vmem:[#allocation2 + $0x48] sm:$0xff]
    %v1664 = vld [vmem:[#allocation2 + $0x50] sm:$0xff]
    %v1665 = vld [vmem:[#allocation2 + $0x58] sm:$0xff]
    %v1666 = vld [vmem:[#allocation2 + $0x60] sm:$0xff]
    %v1667 = vld [vmem:[#allocation2 + $0x68] sm:$0xff]
    %v1668 = vld [vmem:[#allocation2 + $0x70] sm:$0xff]
    %v1669 = vld [vmem:[#allocation2 + $0x78] sm:$0xff]
    %v1670 = vld [vmem:[#allocation2 + $0x80] sm:$0xff]
    %v1671 = vld [vmem:[#allocation2 + $0x88] sm:$0xff]
    %v1672 = vld [vmem:[#allocation2 + $0x90] sm:$0xff]
    %v1673 = vld [vmem:[#allocation2 + $0x98] sm:$0xff]
    %v1674 = vld [vmem:[#allocation2 + $0xa0] sm:$0xff]
    %v1675 = vld [vmem:[#allocation2 + $0xa8] sm:$0xff]
    %v1676 = vld [vmem:[#allocation2 + $0xb0] sm:$0xff]
    %v1677 = vld [vmem:[#allocation2 + $0xb8] sm:$0xff]
    %v1678 = vld [vmem:[#allocation2 + $0xc0] sm:$0xff]
    %v1679 = vld [vmem:[#allocation2 + $0xc8] sm:$0xff]
    %v1680 = vld [vmem:[#allocation2 + $0xd0] sm:$0xff]
    %v1681 = vld [vmem:[#allocation2 + $0xd8] sm:$0xff]
    %v1682 = vld [vmem:[#allocation2 + $0xe0] sm:$0xff]
    %v1683 = vld [vmem:[#allocation2 + $0xe8] sm:$0xff]
    %v1684 = vld [vmem:[#allocation2 + $0xf0] sm:$0xff]
    %v1685 = vld [vmem:[#allocation2 + $0xf8] sm:$0xff]
    %v1686 = vld [vmem:[#allocation2 + $0x100] sm:$0xff]
    %v1687 = vld [vmem:[#allocation2 + $0x108] sm:$0xff]
    %v1688 = vld [vmem:[#allocation2 + $0x110] sm:$0xff]
    %v1689 = vld [vmem:[#allocation2 + $0x118] sm:$0xff]
    %v1690 = vld [vmem:[#allocation2 + $0x120] sm:$0xff]
    %v1691 = vld [vmem:[#allocation2 + $0x128] sm:$0xff]
    %v1692 = vld [vmem:[#allocation2 + $0x130] sm:$0xff]
    %v1693 = vld [vmem:[#allocation2 + $0x138] sm:$0xff]
    %v1694 = vld [vmem:[#allocation2 + $0x140] sm:$0xff]
    %v1695 = vld [vmem:[#allocation2 + $0x148] sm:$0xff]
    %v1696 = vld [vmem:[#allocation2 + $0x150] sm:$0xff]
    %v1697 = vld [vmem:[#allocation2 + $0x158] sm:$0xff]
    %v1698 = vld [vmem:[#allocation2 + $0x160] sm:$0xff]
    %v1699 = vld [vmem:[#allocation2 + $0x168] sm:$0xff]
    %v1700 = vld [vmem:[#allocation2 + $0x170] sm:$0xff]
    %v1701 = vld [vmem:[#allocation2 + $0x178] sm:$0xff]
    %v1702 = vld [vmem:[#allocation2 + $0x180] sm:$0xff]
    %v1703 = vld [vmem:[#allocation2 + $0x188] sm:$0xff]
    %v1704 = vld [vmem:[#allocation2 + $0x190] sm:$0xff]
    %v1705 = vld [vmem:[#allocation2 + $0x198] sm:$0xff]
    %v1706 = vld [vmem:[#allocation2 + $0x1a0] sm:$0xff]
    %v1707 = vld [vmem:[#allocation2 + $0x1a8] sm:$0xff]
    %v1708 = vld [vmem:[#allocation2 + $0x1b0] sm:$0xff]
    %v1709 = vld [vmem:[#allocation2 + $0x1b8] sm:$0xff]
    %v1710 = vld [vmem:[#allocation2 + $0x1c0] sm:$0xff]
    %v1711 = vld [vmem:[#allocation2 + $0x1c8] sm:$0xff]
    %v1712 = vld [vmem:[#allocation2 + $0x1d0] sm:$0xff]
    %v1713 = vld [vmem:[#allocation2 + $0x1d8] sm:$0xff]
    %v1714 = vld [vmem:[#allocation2 + $0x1e0] sm:$0xff]
    %v1715 = vld [vmem:[#allocation2 + $0x1e8] sm:$0xff]
    %v1716 = vld [vmem:[#allocation2 + $0x1f0] sm:$0xff]
    %v1717 = vld [vmem:[#allocation2 + $0x1f8] sm:$0xff]
    %v1718 = vld [vmem:[#allocation2 + $0x200] sm:$0xff]
    %v1719 = vld [vmem:[#allocation2 + $0x208] sm:$0xff]
    %v1720 = vld [vmem:[#allocation2 + $0x210] sm:$0xff]
    %v1721 = vld [vmem:[#allocation2 + $0x218] sm:$0xff]
    %v1722 = vld [vmem:[#allocation2 + $0x220] sm:$0xff]
    %v1723 = vld [vmem:[#allocation2 + $0x228] sm:$0xff]
    %v1724 = vld [vmem:[#allocation2 + $0x230] sm:$0xff]
    %v1725 = vld [vmem:[#allocation2 + $0x238] sm:$0xff]
    %v1726 = vld [vmem:[#allocation2 + $0x240] sm:$0xff]
    %v1727 = vld [vmem:[#allocation2 + $0x248] sm:$0xff]
    %v1728 = vld [vmem:[#allocation2 + $0x250] sm:$0xff]
    %v1729 = vld [vmem:[#allocation2 + $0x258] sm:$0xff]
    %v1730 = vld [vmem:[#allocation2 + $0x260] sm:$0xff]
    %v1731 = vld [vmem:[#allocation2 + $0x268] sm:$0xff]
    %v1732 = vld [vmem:[#allocation2 + $0x270] sm:$0xff]
    %v1733 = vld [vmem:[#allocation2 + $0x278] sm:$0xff]
    %v1734 = vld [vmem:[#allocation2 + $0x280] sm:$0xff]
    %v1735 = vld [vmem:[#allocation2 + $0x288] sm:$0xff]
    %v1736 = vld [vmem:[#allocation2 + $0x290] sm:$0xff]
    %v1737 = vld [vmem:[#allocation2 + $0x298] sm:$0xff]
    %v1738 = vld [vmem:[#allocation2 + $0x2a0] sm:$0xff]
    %v1739 = vld [vmem:[#allocation2 + $0x2a8] sm:$0xff]
    %v1740 = vld [vmem:[#allocation2 + $0x2b0] sm:$0xff]
    %v1741 = vld [vmem:[#allocation2 + $0x2b8] sm:$0xff]
    %v1742 = vld [vmem:[#allocation2 + $0x2c0] sm:$0xff]
    %v1743 = vld [vmem:[#allocation2 + $0x2c8] sm:$0xff]
    %v1744 = vld [vmem:[#allocation2 + $0x2d0] sm:$0xff]
    %v1745 = vld [vmem:[#allocation2 + $0x2d8] sm:$0xff]
    %v1746 = vld [vmem:[#allocation2 + $0x2e0] sm:$0xff]
    %v1747 = vld [vmem:[#allocation2 + $0x2e8] sm:$0xff]
    %v1748 = vld [vmem:[#allocation2 + $0x2f0] sm:$0xff]
    %v1749 = vld [vmem:[#allocation2 + $0x2f8] sm:$0xff]
    %v1750 = vld [vmem:[#allocation2 + $0x300] sm:$0xff]
    %v1751 = vld [vmem:[#allocation2 + $0x308] sm:$0xff]
    %v1752 = vld [vmem:[#allocation2 + $0x310] sm:$0xff]
    %v1753 = vld [vmem:[#allocation2 + $0x318] sm:$0xff]
    %v1754 = vld [vmem:[#allocation2 + $0x320] sm:$0xff]
    %v1755 = vld [vmem:[#allocation2 + $0x328] sm:$0xff]
    %v1756 = vld [vmem:[#allocation2 + $0x330] sm:$0xff]
    %v1757 = vld [vmem:[#allocation2 + $0x338] sm:$0xff]
    %v1758 = vld [vmem:[#allocation2 + $0x340] sm:$0xff]
    %v1759 = vld [vmem:[#allocation2 + $0x348] sm:$0xff]
    %v1760 = vld [vmem:[#allocation2 + $0x350] sm:$0xff]
    %v1761 = vld [vmem:[#allocation2 + $0x358] sm:$0xff]
    %v1762 = vld [vmem:[#allocation2 + $0x360] sm:$0xff]
    %v1763 = vld [vmem:[#allocation2 + $0x368] sm:$0xff]
    %v1764 = vld [vmem:[#allocation2 + $0x370] sm:$0xff]
    %v1765 = vld [vmem:[#allocation2 + $0x378] sm:$0xff]
    %v1766 = vld [vmem:[#allocation2 + $0x380] sm:$0xff]
    %v1767 = vld [vmem:[#allocation2 + $0x388] sm:$0xff]
    %v1768 = vld [vmem:[#allocation2 + $0x390] sm:$0xff]
    %v1769 = vld [vmem:[#allocation2 + $0x398] sm:$0xff]
    %v1770 = vld [vmem:[#allocation2 + $0x3a0] sm:$0xff]
    %v1771 = vld [vmem:[#allocation2 + $0x3a8] sm:$0xff]
    %v1772 = vld [vmem:[#allocation2 + $0x3b0] sm:$0xff]
    %v1773 = vld [vmem:[#allocation2 + $0x3b8] sm:$0xff]
    %v1774 = vld [vmem:[#allocation2 + $0x3c0] sm:$0xff]
    %v1775 = vld [vmem:[#allocation2 + $0x3c8] sm:$0xff]
    %v1776 = vld [vmem:[#allocation2 + $0x3d0] sm:$0xff]
    %v1777 = vld [vmem:[#allocation2 + $0x3d8] sm:$0xff]
    %v1778 = vld [vmem:[#allocation2 + $0x3e0] sm:$0xff]
    %v1779 = vld [vmem:[#allocation2 + $0x3e8] sm:$0xff]
    %v1780 = vld [vmem:[#allocation2 + $0x3f0] sm:$0xff]
    %v1781 = vld [vmem:[#allocation2 + $0x3f8] sm:$0xff]
    %v1782 = vld [vmem:[%s4] sm:$0xf]
    %v1784 = vlaneseq
    %v1785 = vshrl.u32 %v1784, 7
    %v1786 = vsub.s32 0, %v1785
    %v1787 = vrot.slane %v1782, %v1786
    %v1788 = vlaneseq
    %v1789 = vshrl.u32 %v1788, 7
    %v1790 = vsub.s32 1, %v1789
    %v1791 = vrot.slane %v1782, %v1790
    %v1792 = vlaneseq
    %v1793 = vshrl.u32 %v1792, 7
    %v1794 = vsub.s32 2, %v1793
    %v1795 = vrot.slane %v1782, %v1794
    %v1796 = vlaneseq
    %v1797 = vshrl.u32 %v1796, 7
    %v1798 = vsub.s32 3, %v1797
    %v1799 = vrot.slane %v1782, %v1798
    %v1932 = vunpack.c.l.b16 %v1654
    %v1933 = vunpack.c.h.b16 %v1654
    %v1934 = vunpack.c.l.b16 %v1655
    %v1935 = vunpack.c.h.b16 %v1655
    %v1936 = vunpack.c.l.b16 %v1656
    %v1937 = vunpack.c.h.b16 %v1656
    %v1938 = vunpack.c.l.b16 %v1657
    %v1939 = vunpack.c.h.b16 %v1657
    %v1940 = vunpack.c.l.b16 %v1658
    %v1941 = vunpack.c.h.b16 %v1658
    %v1942 = vunpack.c.l.b16 %v1659
    %v1943 = vunpack.c.h.b16 %v1659
    %v1944 = vunpack.c.l.b16 %v1660
    %v1945 = vunpack.c.h.b16 %v1660
    %v1946 = vunpack.c.l.b16 %v1661
    %v1947 = vunpack.c.h.b16 %v1661
    %v1948 = vunpack.c.l.b16 %v1662
    %v1949 = vunpack.c.h.b16 %v1662
    %v1950 = vunpack.c.l.b16 %v1663
    %v1951 = vunpack.c.h.b16 %v1663
    %v1952 = vunpack.c.l.b16 %v1664
    %v1953 = vunpack.c.h.b16 %v1664
    %v1954 = vunpack.c.l.b16 %v1665
    %v1955 = vunpack.c.h.b16 %v1665
    %v1956 = vunpack.c.l.b16 %v1666
    %v1957 = vunpack.c.h.b16 %v1666
    %v1958 = vunpack.c.l.b16 %v1667
    %v1959 = vunpack.c.h.b16 %v1667
    %v1960 = vunpack.c.l.b16 %v1668
    %v1961 = vunpack.c.h.b16 %v1668
    %v1962 = vunpack.c.l.b16 %v1669
    %v1963 = vunpack.c.h.b16 %v1669
    %v1964 = vunpack.c.l.b16 %v1670
    %v1965 = vunpack.c.h.b16 %v1670
    %v1966 = vunpack.c.l.b16 %v1671
    %v1967 = vunpack.c.h.b16 %v1671
    %v1968 = vunpack.c.l.b16 %v1672
    %v1969 = vunpack.c.h.b16 %v1672
    %v1970 = vunpack.c.l.b16 %v1673
    %v1971 = vunpack.c.h.b16 %v1673
    %v1972 = vunpack.c.l.b16 %v1674
    %v1973 = vunpack.c.h.b16 %v1674
    %v1974 = vunpack.c.l.b16 %v1675
    %v1975 = vunpack.c.h.b16 %v1675
    %v1976 = vunpack.c.l.b16 %v1676
    %v1977 = vunpack.c.h.b16 %v1676
    %v1978 = vunpack.c.l.b16 %v1677
    %v1979 = vunpack.c.h.b16 %v1677
    %v1980 = vunpack.c.l.b16 %v1678
    %v1981 = vunpack.c.h.b16 %v1678
    %v1982 = vunpack.c.l.b16 %v1679
    %v1983 = vunpack.c.h.b16 %v1679
    %v1984 = vunpack.c.l.b16 %v1680
    %v1985 = vunpack.c.h.b16 %v1680
    %v1986 = vunpack.c.l.b16 %v1681
    %v1987 = vunpack.c.h.b16 %v1681
    %v1988 = vunpack.c.l.b16 %v1682
    %v1989 = vunpack.c.h.b16 %v1682
    %v1990 = vunpack.c.l.b16 %v1683
    %v1991 = vunpack.c.h.b16 %v1683
    %v1992 = vunpack.c.l.b16 %v1684
    %v1993 = vunpack.c.h.b16 %v1684
    %v1994 = vunpack.c.l.b16 %v1685
    %v1995 = vunpack.c.h.b16 %v1685
    %v1996 = vunpack.c.l.b16 %v1686
    %v1997 = vunpack.c.h.b16 %v1686
    %v1998 = vunpack.c.l.b16 %v1687
    %v1999 = vunpack.c.h.b16 %v1687
    %v2000 = vunpack.c.l.b16 %v1688
    %v2001 = vunpack.c.h.b16 %v1688
    %v2002 = vunpack.c.l.b16 %v1689
    %v2003 = vunpack.c.h.b16 %v1689
    %v2004 = vunpack.c.l.b16 %v1690
    %v2005 = vunpack.c.h.b16 %v1690
    %v2006 = vunpack.c.l.b16 %v1691
    %v2007 = vunpack.c.h.b16 %v1691
    %v2008 = vunpack.c.l.b16 %v1692
    %v2009 = vunpack.c.h.b16 %v1692
    %v2010 = vunpack.c.l.b16 %v1693
    %v2011 = vunpack.c.h.b16 %v1693
    %v2012 = vunpack.c.l.b16 %v1694
    %v2013 = vunpack.c.h.b16 %v1694
    %v2014 = vunpack.c.l.b16 %v1695
    %v2015 = vunpack.c.h.b16 %v1695
    %v2016 = vunpack.c.l.b16 %v1696
    %v2017 = vunpack.c.h.b16 %v1696
    %v2018 = vunpack.c.l.b16 %v1697
    %v2019 = vunpack.c.h.b16 %v1697
    %v2020 = vunpack.c.l.b16 %v1698
    %v2021 = vunpack.c.h.b16 %v1698
    %v2022 = vunpack.c.l.b16 %v1699
    %v2023 = vunpack.c.h.b16 %v1699
    %v2024 = vunpack.c.l.b16 %v1700
    %v2025 = vunpack.c.h.b16 %v1700
    %v2026 = vunpack.c.l.b16 %v1701
    %v2027 = vunpack.c.h.b16 %v1701
    %v2028 = vunpack.c.l.b16 %v1702
    %v2029 = vunpack.c.h.b16 %v1702
    %v2030 = vunpack.c.l.b16 %v1703
    %v2031 = vunpack.c.h.b16 %v1703
    %v2032 = vunpack.c.l.b16 %v1704
    %v2033 = vunpack.c.h.b16 %v1704
    %v2034 = vunpack.c.l.b16 %v1705
    %v2035 = vunpack.c.h.b16 %v1705
    %v2036 = vunpack.c.l.b16 %v1706
    %v2037 = vunpack.c.h.b16 %v1706
    %v2038 = vunpack.c.l.b16 %v1707
    %v2039 = vunpack.c.h.b16 %v1707
    %v2040 = vunpack.c.l.b16 %v1708
    %v2041 = vunpack.c.h.b16 %v1708
    %v2042 = vunpack.c.l.b16 %v1709
    %v2043 = vunpack.c.h.b16 %v1709
    %v2044 = vunpack.c.l.b16 %v1710
    %v2045 = vunpack.c.h.b16 %v1710
    %v2046 = vunpack.c.l.b16 %v1711
    %v2047 = vunpack.c.h.b16 %v1711
    %v2048 = vunpack.c.l.b16 %v1712
    %v2049 = vunpack.c.h.b16 %v1712
    %v2050 = vunpack.c.l.b16 %v1713
    %v2051 = vunpack.c.h.b16 %v1713
    %v2052 = vunpack.c.l.b16 %v1714
    %v2053 = vunpack.c.h.b16 %v1714
    %v2054 = vunpack.c.l.b16 %v1715
    %v2055 = vunpack.c.h.b16 %v1715
    %v2056 = vunpack.c.l.b16 %v1716
    %v2057 = vunpack.c.h.b16 %v1716
    %v2058 = vunpack.c.l.b16 %v1717
    %v2059 = vunpack.c.h.b16 %v1717
    %v2060 = vunpack.c.l.b16 %v1718
    %v2061 = vunpack.c.h.b16 %v1718
    %v2062 = vunpack.c.l.b16 %v1719
    %v2063 = vunpack.c.h.b16 %v1719
    %v2064 = vunpack.c.l.b16 %v1720
    %v2065 = vunpack.c.h.b16 %v1720
    %v2066 = vunpack.c.l.b16 %v1721
    %v2067 = vunpack.c.h.b16 %v1721
    %v2068 = vunpack.c.l.b16 %v1722
    %v2069 = vunpack.c.h.b16 %v1722
    %v2070 = vunpack.c.l.b16 %v1723
    %v2071 = vunpack.c.h.b16 %v1723
    %v2072 = vunpack.c.l.b16 %v1724
    %v2073 = vunpack.c.h.b16 %v1724
    %v2074 = vunpack.c.l.b16 %v1725
    %v2075 = vunpack.c.h.b16 %v1725
    %v2076 = vunpack.c.l.b16 %v1726
    %v2077 = vunpack.c.h.b16 %v1726
    %v2078 = vunpack.c.l.b16 %v1727
    %v2079 = vunpack.c.h.b16 %v1727
    %v2080 = vunpack.c.l.b16 %v1728
    %v2081 = vunpack.c.h.b16 %v1728
    %v2082 = vunpack.c.l.b16 %v1729
    %v2083 = vunpack.c.h.b16 %v1729
    %v2084 = vunpack.c.l.b16 %v1730
    %v2085 = vunpack.c.h.b16 %v1730
    %v2086 = vunpack.c.l.b16 %v1731
    %v2087 = vunpack.c.h.b16 %v1731
    %v2088 = vunpack.c.l.b16 %v1732
    %v2089 = vunpack.c.h.b16 %v1732
    %v2090 = vunpack.c.l.b16 %v1733
    %v2091 = vunpack.c.h.b16 %v1733
    %v2092 = vunpack.c.l.b16 %v1734
    %v2093 = vunpack.c.h.b16 %v1734
    %v2094 = vunpack.c.l.b16 %v1735
    %v2095 = vunpack.c.h.b16 %v1735
    %v2096 = vunpack.c.l.b16 %v1736
    %v2097 = vunpack.c.h.b16 %v1736
    %v2098 = vunpack.c.l.b16 %v1737
    %v2099 = vunpack.c.h.b16 %v1737
    %v2100 = vunpack.c.l.b16 %v1738
    %v2101 = vunpack.c.h.b16 %v1738
    %v2102 = vunpack.c.l.b16 %v1739
    %v2103 = vunpack.c.h.b16 %v1739
    %v2104 = vunpack.c.l.b16 %v1740
    %v2105 = vunpack.c.h.b16 %v1740
    %v2106 = vunpack.c.l.b16 %v1741
    %v2107 = vunpack.c.h.b16 %v1741
    %v2108 = vunpack.c.l.b16 %v1742
    %v2109 = vunpack.c.h.b16 %v1742
    %v2110 = vunpack.c.l.b16 %v1743
    %v2111 = vunpack.c.h.b16 %v1743
    %v2112 = vunpack.c.l.b16 %v1744
    %v2113 = vunpack.c.h.b16 %v1744
    %v2114 = vunpack.c.l.b16 %v1745
    %v2115 = vunpack.c.h.b16 %v1745
    %v2116 = vunpack.c.l.b16 %v1746
    %v2117 = vunpack.c.h.b16 %v1746
    %v2118 = vunpack.c.l.b16 %v1747
    %v2119 = vunpack.c.h.b16 %v1747
    %v2120 = vunpack.c.l.b16 %v1748
    %v2121 = vunpack.c.h.b16 %v1748
    %v2122 = vunpack.c.l.b16 %v1749
    %v2123 = vunpack.c.h.b16 %v1749
    %v2124 = vunpack.c.l.b16 %v1750
    %v2125 = vunpack.c.h.b16 %v1750
    %v2126 = vunpack.c.l.b16 %v1751
    %v2127 = vunpack.c.h.b16 %v1751
    %v2128 = vunpack.c.l.b16 %v1752
    %v2129 = vunpack.c.h.b16 %v1752
    %v2130 = vunpack.c.l.b16 %v1753
    %v2131 = vunpack.c.h.b16 %v1753
    %v2132 = vunpack.c.l.b16 %v1754
    %v2133 = vunpack.c.h.b16 %v1754
    %v2134 = vunpack.c.l.b16 %v1755
    %v2135 = vunpack.c.h.b16 %v1755
    %v2136 = vunpack.c.l.b16 %v1756
    %v2137 = vunpack.c.h.b16 %v1756
    %v2138 = vunpack.c.l.b16 %v1757
    %v2139 = vunpack.c.h.b16 %v1757
    %v2140 = vunpack.c.l.b16 %v1758
    %v2141 = vunpack.c.h.b16 %v1758
    %v2142 = vunpack.c.l.b16 %v1759
    %v2143 = vunpack.c.h.b16 %v1759
    %v2144 = vunpack.c.l.b16 %v1760
    %v2145 = vunpack.c.h.b16 %v1760
    %v2146 = vunpack.c.l.b16 %v1761
    %v2147 = vunpack.c.h.b16 %v1761
    %v2148 = vunpack.c.l.b16 %v1762
    %v2149 = vunpack.c.h.b16 %v1762
    %v2150 = vunpack.c.l.b16 %v1763
    %v2151 = vunpack.c.h.b16 %v1763
    %v2152 = vunpack.c.l.b16 %v1764
    %v2153 = vunpack.c.h.b16 %v1764
    %v2154 = vunpack.c.l.b16 %v1765
    %v2155 = vunpack.c.h.b16 %v1765
    %v2156 = vunpack.c.l.b16 %v1766
    %v2157 = vunpack.c.h.b16 %v1766
    %v2158 = vunpack.c.l.b16 %v1767
    %v2159 = vunpack.c.h.b16 %v1767
    %v2160 = vunpack.c.l.b16 %v1768
    %v2161 = vunpack.c.h.b16 %v1768
    %v2162 = vunpack.c.l.b16 %v1769
    %v2163 = vunpack.c.h.b16 %v1769
    %v2164 = vunpack.c.l.b16 %v1770
    %v2165 = vunpack.c.h.b16 %v1770
    %v2166 = vunpack.c.l.b16 %v1771
    %v2167 = vunpack.c.h.b16 %v1771
    %v2168 = vunpack.c.l.b16 %v1772
    %v2169 = vunpack.c.h.b16 %v1772
    %v2170 = vunpack.c.l.b16 %v1773
    %v2171 = vunpack.c.h.b16 %v1773
    %v2172 = vunpack.c.l.b16 %v1774
    %v2173 = vunpack.c.h.b16 %v1774
    %v2174 = vunpack.c.l.b16 %v1775
    %v2175 = vunpack.c.h.b16 %v1775
    %v2176 = vunpack.c.l.b16 %v1776
    %v2177 = vunpack.c.h.b16 %v1776
    %v2178 = vunpack.c.l.b16 %v1777
    %v2179 = vunpack.c.h.b16 %v1777
    %v2180 = vunpack.c.l.b16 %v1778
    %v2181 = vunpack.c.h.b16 %v1778
    %v2182 = vunpack.c.l.b16 %v1779
    %v2183 = vunpack.c.h.b16 %v1779
    %v2184 = vunpack.c.l.b16 %v1780
    %v2185 = vunpack.c.h.b16 %v1780
    %v2186 = vunpack.c.l.b16 %v1781
    %v2187 = vunpack.c.h.b16 %v1781
    %v2188 = vpack.c.b16 %v1936, %v1932
    %v2189 = vpack.c.b16 %v1937, %v1933
    %v2190 = vpack.c.b16 %v1938, %v1934
    %v2191 = vpack.c.b16 %v1939, %v1935
    %v2192 = vpack.c.b16 %v1944, %v1940
    %v2193 = vpack.c.b16 %v1945, %v1941
    %v2194 = vpack.c.b16 %v1946, %v1942
    %v2195 = vpack.c.b16 %v1947, %v1943
    %v2196 = vpack.c.b16 %v1952, %v1948
    %v2197 = vpack.c.b16 %v1953, %v1949
    %v2198 = vpack.c.b16 %v1954, %v1950
    %v2199 = vpack.c.b16 %v1955, %v1951
    %v2200 = vpack.c.b16 %v1960, %v1956
    %v2201 = vpack.c.b16 %v1961, %v1957
    %v2202 = vpack.c.b16 %v1962, %v1958
    %v2203 = vpack.c.b16 %v1963, %v1959
    %v2204 = vpack.c.b16 %v1968, %v1964
    %v2205 = vpack.c.b16 %v1969, %v1965
    %v2206 = vpack.c.b16 %v1970, %v1966
    %v2207 = vpack.c.b16 %v1971, %v1967
    %v2208 = vpack.c.b16 %v1976, %v1972
    %v2209 = vpack.c.b16 %v1977, %v1973
    %v2210 = vpack.c.b16 %v1978, %v1974
    %v2211 = vpack.c.b16 %v1979, %v1975
    %v2212 = vpack.c.b16 %v1984, %v1980
    %v2213 = vpack.c.b16 %v1985, %v1981
    %v2214 = vpack.c.b16 %v1986, %v1982
    %v2215 = vpack.c.b16 %v1987, %v1983
    %v2216 = vpack.c.b16 %v1992, %v1988
    %v2217 = vpack.c.b16 %v1993, %v1989
    %v2218 = vpack.c.b16 %v1994, %v1990
    %v2219 = vpack.c.b16 %v1995, %v1991
    %v2220 = vpack.c.b16 %v2000, %v1996
    %v2221 = vpack.c.b16 %v2001, %v1997
    %v2222 = vpack.c.b16 %v2002, %v1998
    %v2223 = vpack.c.b16 %v2003, %v1999
    %v2224 = vpack.c.b16 %v2008, %v2004
    %v2225 = vpack.c.b16 %v2009, %v2005
    %v2226 = vpack.c.b16 %v2010, %v2006
    %v2227 = vpack.c.b16 %v2011, %v2007
    %v2228 = vpack.c.b16 %v2016, %v2012
    %v2229 = vpack.c.b16 %v2017, %v2013
    %v2230 = vpack.c.b16 %v2018, %v2014
    %v2231 = vpack.c.b16 %v2019, %v2015
    %v2232 = vpack.c.b16 %v2024, %v2020
    %v2233 = vpack.c.b16 %v2025, %v2021
    %v2234 = vpack.c.b16 %v2026, %v2022
    %v2235 = vpack.c.b16 %v2027, %v2023
    %v2236 = vpack.c.b16 %v2032, %v2028
    %v2237 = vpack.c.b16 %v2033, %v2029
    %v2238 = vpack.c.b16 %v2034, %v2030
    %v2239 = vpack.c.b16 %v2035, %v2031
    %v2240 = vpack.c.b16 %v2040, %v2036
    %v2241 = vpack.c.b16 %v2041, %v2037
    %v2242 = vpack.c.b16 %v2042, %v2038
    %v2243 = vpack.c.b16 %v2043, %v2039
    %v2244 = vpack.c.b16 %v2048, %v2044
    %v2245 = vpack.c.b16 %v2049, %v2045
    %v2246 = vpack.c.b16 %v2050, %v2046
    %v2247 = vpack.c.b16 %v2051, %v2047
    %v2248 = vpack.c.b16 %v2056, %v2052
    %v2249 = vpack.c.b16 %v2057, %v2053
    %v2250 = vpack.c.b16 %v2058, %v2054
    %v2251 = vpack.c.b16 %v2059, %v2055
    %v2252 = vpack.c.b16 %v2064, %v2060
    %v2253 = vpack.c.b16 %v2065, %v2061
    %v2254 = vpack.c.b16 %v2066, %v2062
    %v2255 = vpack.c.b16 %v2067, %v2063
    %v2256 = vpack.c.b16 %v2072, %v2068
    %v2257 = vpack.c.b16 %v2073, %v2069
    %v2258 = vpack.c.b16 %v2074, %v2070
    %v2259 = vpack.c.b16 %v2075, %v2071
    %v2260 = vpack.c.b16 %v2080, %v2076
    %v2261 = vpack.c.b16 %v2081, %v2077
    %v2262 = vpack.c.b16 %v2082, %v2078
    %v2263 = vpack.c.b16 %v2083, %v2079
    %v2264 = vpack.c.b16 %v2088, %v2084
    %v2265 = vpack.c.b16 %v2089, %v2085
    %v2266 = vpack.c.b16 %v2090, %v2086
    %v2267 = vpack.c.b16 %v2091, %v2087
    %v2268 = vpack.c.b16 %v2096, %v2092
    %v2269 = vpack.c.b16 %v2097, %v2093
    %v2270 = vpack.c.b16 %v2098, %v2094
    %v2271 = vpack.c.b16 %v2099, %v2095
    %v2272 = vpack.c.b16 %v2104, %v2100
    %v2273 = vpack.c.b16 %v2105, %v2101
    %v2274 = vpack.c.b16 %v2106, %v2102
    %v2275 = vpack.c.b16 %v2107, %v2103
    %v2276 = vpack.c.b16 %v2112, %v2108
    %v2277 = vpack.c.b16 %v2113, %v2109
    %v2278 = vpack.c.b16 %v2114, %v2110
    %v2279 = vpack.c.b16 %v2115, %v2111
    %v2280 = vpack.c.b16 %v2120, %v2116
    %v2281 = vpack.c.b16 %v2121, %v2117
    %v2282 = vpack.c.b16 %v2122, %v2118
    %v2283 = vpack.c.b16 %v2123, %v2119
    %v2284 = vpack.c.b16 %v2128, %v2124
    %v2285 = vpack.c.b16 %v2129, %v2125
    %v2286 = vpack.c.b16 %v2130, %v2126
    %v2287 = vpack.c.b16 %v2131, %v2127
    %v2288 = vpack.c.b16 %v2136, %v2132
    %v2289 = vpack.c.b16 %v2137, %v2133
    %v2290 = vpack.c.b16 %v2138, %v2134
    %v2291 = vpack.c.b16 %v2139, %v2135
    %v2292 = vpack.c.b16 %v2144, %v2140
    %v2293 = vpack.c.b16 %v2145, %v2141
    %v2294 = vpack.c.b16 %v2146, %v2142
    %v2295 = vpack.c.b16 %v2147, %v2143
    %v2296 = vpack.c.b16 %v2152, %v2148
    %v2297 = vpack.c.b16 %v2153, %v2149
    %v2298 = vpack.c.b16 %v2154, %v2150
    %v2299 = vpack.c.b16 %v2155, %v2151
    %v2300 = vpack.c.b16 %v2160, %v2156
    %v2301 = vpack.c.b16 %v2161, %v2157
    %v2302 = vpack.c.b16 %v2162, %v2158
    %v2303 = vpack.c.b16 %v2163, %v2159
    %v2304 = vpack.c.b16 %v2168, %v2164
    %v2305 = vpack.c.b16 %v2169, %v2165
    %v2306 = vpack.c.b16 %v2170, %v2166
    %v2307 = vpack.c.b16 %v2171, %v2167
    %v2308 = vpack.c.b16 %v2176, %v2172
    %v2309 = vpack.c.b16 %v2177, %v2173
    %v2310 = vpack.c.b16 %v2178, %v2174
    %v2311 = vpack.c.b16 %v2179, %v2175
    %v2312 = vpack.c.b16 %v2184, %v2180
    %v2313 = vpack.c.b16 %v2185, %v2181
    %v2314 = vpack.c.b16 %v2186, %v2182
    %v2315 = vpack.c.b16 %v2187, %v2183
    %2444 = vmatprep.subr.bf16.mxu0 %v2189
    %2445 = vmatpush1.bf16.msra.mxu0 %v2188
    %2446 = vmatprep.subr.bf16.mxu0 %v2193
    %2447 = vmatpush1.bf16.msra.mxu0 %v2192
    %2448 = vmatprep.subr.bf16.mxu0 %v2197
    %2449 = vmatpush1.bf16.msra.mxu0 %v2196
    %2450 = vmatprep.subr.bf16.mxu0 %v2201
    %2451 = vmatpush1.bf16.msra.mxu0 %v2200
    %2452 = vmatprep.subr.bf16.mxu0 %v2205
    %2453 = vmatpush1.bf16.msra.mxu0 %v2204
    %2454 = vmatprep.subr.bf16.mxu0 %v2209
    %2455 = vmatpush1.bf16.msra.mxu0 %v2208
    %2456 = vmatprep.subr.bf16.mxu0 %v2213
    %2457 = vmatpush1.bf16.msra.mxu0 %v2212
    %2458 = vmatprep.subr.bf16.mxu0 %v2217
    %2459 = vmatpush1.bf16.msra.mxu0 %v2216
    %2460 = vmatprep.subr.bf16.mxu0 %v2221
    %2461 = vmatpush1.bf16.msra.mxu0 %v2220
    %2462 = vmatprep.subr.bf16.mxu0 %v2225
    %2463 = vmatpush1.bf16.msra.mxu0 %v2224
    %2464 = vmatprep.subr.bf16.mxu0 %v2229
    %2465 = vmatpush1.bf16.msra.mxu0 %v2228
    %2466 = vmatprep.subr.bf16.mxu0 %v2233
    %2467 = vmatpush1.bf16.msra.mxu0 %v2232
    %2468 = vmatprep.subr.bf16.mxu0 %v2237
    %2469 = vmatpush1.bf16.msra.mxu0 %v2236
    %2470 = vmatprep.subr.bf16.mxu0 %v2241
    %2471 = vmatpush1.bf16.msra.mxu0 %v2240
    %2472 = vmatprep.subr.bf16.mxu0 %v2245
    %2473 = vmatpush1.bf16.msra.mxu0 %v2244
    %2474 = vmatprep.subr.bf16.mxu0 %v2249
    %2475 = vmatpush1.bf16.msra.mxu0 %v2248
    %2476 = vmatprep.mubr.bf16.mxu0 %v1651
    %2477 = vmatmul.mubr.bf16.gmra.mrb[0].mxu0 %v1650
    %v2478 = vpop.f32.mrb[0].mxu0
    %v2479 = vadd.f32 %v1787, %v2478
    %v2480 = vpop.f32.mrb[0].mxu0
    %v2481 = vadd.f32 %v1791, %v2480
    %v2482 = vpop.f32.mrb[0].mxu0
    %v2483 = vadd.f32 %v1787, %v2482
    %v2484 = vpop.f32.mrb[0].mxu0
    %v2485 = vadd.f32 %v1791, %v2484
    %2486 = vdwg.mxu0
    %2487 = vmatprep.subr.bf16.mxu0 %v2253
    %2488 = vmatpush1.bf16.msra.mxu0 %v2252
    %2489 = vmatprep.subr.bf16.mxu0 %v2257
    %2490 = vmatpush1.bf16.msra.mxu0 %v2256
    %2491 = vmatprep.subr.bf16.mxu0 %v2261
    %2492 = vmatpush1.bf16.msra.mxu0 %v2260
    %2493 = vmatprep.subr.bf16.mxu0 %v2265
    %2494 = vmatpush1.bf16.msra.mxu0 %v2264
    %2495 = vmatprep.subr.bf16.mxu0 %v2269
    %2496 = vmatpush1.bf16.msra.mxu0 %v2268
    %2497 = vmatprep.subr.bf16.mxu0 %v2273
    %2498 = vmatpush1.bf16.msra.mxu0 %v2272
    %2499 = vmatprep.subr.bf16.mxu0 %v2277
    %2500 = vmatpush1.bf16.msra.mxu0 %v2276
    %2501 = vmatprep.subr.bf16.mxu0 %v2281
    %2502 = vmatpush1.bf16.msra.mxu0 %v2280
    %2503 = vmatprep.subr.bf16.mxu0 %v2285
    %2504 = vmatpush1.bf16.msra.mxu0 %v2284
    %2505 = vmatprep.subr.bf16.mxu0 %v2289
    %2506 = vmatpush1.bf16.msra.mxu0 %v2288
    %2507 = vmatprep.subr.bf16.mxu0 %v2293
    %2508 = vmatpush1.bf16.msra.mxu0 %v2292
    %2509 = vmatprep.subr.bf16.mxu0 %v2297
    %2510 = vmatpush1.bf16.msra.mxu0 %v2296
    %2511 = vmatprep.subr.bf16.mxu0 %v2301
    %2512 = vmatpush1.bf16.msra.mxu0 %v2300
    %2513 = vmatprep.subr.bf16.mxu0 %v2305
    %2514 = vmatpush1.bf16.msra.mxu0 %v2304
    %2515 = vmatprep.subr.bf16.mxu0 %v2309
    %2516 = vmatpush1.bf16.msra.mxu0 %v2308
    %2517 = vmatprep.subr.bf16.mxu0 %v2313
    %2518 = vmatpush1.bf16.msra.mxu0 %v2312
    %2519 = vmatprep.mubr.bf16.mxu0 %v1653
    %2520 = vmatmul.mubr.bf16.gmra.mrb[0].mxu0 %v1652
    %v2521 = vpop.f32.mrb[0].mxu0
    %v2522 = vadd.f32 %v2479, %v2521
    %v2523 = vpop.f32.mrb[0].mxu0
    %v2524 = vadd.f32 %v2481, %v2523
    %v2525 = vpop.f32.mrb[0].mxu0
    %v2526 = vadd.f32 %v2483, %v2525
    %v2527 = vpop.f32.mrb[0].mxu0
    %v2528 = vadd.f32 %v2485, %v2527
    %2529 = vdwg.mxu0
    %2530 = vmatprep.subr.bf16.mxu0 %v2191
    %2531 = vmatpush1.bf16.msra.mxu0 %v2190
    %2532 = vmatprep.subr.bf16.mxu0 %v2195
    %2533 = vmatpush1.bf16.msra.mxu0 %v2194
    %2534 = vmatprep.subr.bf16.mxu0 %v2199
    %2535 = vmatpush1.bf16.msra.mxu0 %v2198
    %2536 = vmatprep.subr.bf16.mxu0 %v2203
    %2537 = vmatpush1.bf16.msra.mxu0 %v2202
    %2538 = vmatprep.subr.bf16.mxu0 %v2207
    %2539 = vmatpush1.bf16.msra.mxu0 %v2206
    %2540 = vmatprep.subr.bf16.mxu0 %v2211
    %2541 = vmatpush1.bf16.msra.mxu0 %v2210
    %2542 = vmatprep.subr.bf16.mxu0 %v2215
    %2543 = vmatpush1.bf16.msra.mxu0 %v2214
    %2544 = vmatprep.subr.bf16.mxu0 %v2219
    %2545 = vmatpush1.bf16.msra.mxu0 %v2218
    %2546 = vmatprep.subr.bf16.mxu0 %v2223
    %2547 = vmatpush1.bf16.msra.mxu0 %v2222
    %2548 = vmatprep.subr.bf16.mxu0 %v2227
    %2549 = vmatpush1.bf16.msra.mxu0 %v2226
    %2550 = vmatprep.subr.bf16.mxu0 %v2231
    %2551 = vmatpush1.bf16.msra.mxu0 %v2230
    %2552 = vmatprep.subr.bf16.mxu0 %v2235
    %2553 = vmatpush1.bf16.msra.mxu0 %v2234
    %2554 = vmatprep.subr.bf16.mxu0 %v2239
    %2555 = vmatpush1.bf16.msra.mxu0 %v2238
    %2556 = vmatprep.subr.bf16.mxu0 %v2243
    %2557 = vmatpush1.bf16.msra.mxu0 %v2242
    %2558 = vmatprep.subr.bf16.mxu0 %v2247
    %2559 = vmatpush1.bf16.msra.mxu0 %v2246
    %2560 = vmatprep.subr.bf16.mxu0 %v2251
    %2561 = vmatpush1.bf16.msra.mxu0 %v2250
    %2562 = vmatprep.mubr.bf16.mxu0 %v1651
    %2563 = vmatmul.mubr.bf16.gmra.mrb[0].mxu0 %v1650
    %v2564 = vpop.f32.mrb[0].mxu0
    %v2565 = vadd.f32 %v1795, %v2564
    %v2566 = vpop.f32.mrb[0].mxu0
    %v2567 = vadd.f32 %v1799, %v2566
    %v2568 = vpop.f32.mrb[0].mxu0
    %v2569 = vadd.f32 %v1795, %v2568
    %v2570 = vpop.f32.mrb[0].mxu0
    %v2571 = vadd.f32 %v1799, %v2570
    %2572 = vdwg.mxu0
    %2573 = vmatprep.subr.bf16.mxu0 %v2255
    %2574 = vmatpush1.bf16.msra.mxu0 %v2254
    %2575 = vmatprep.subr.bf16.mxu0 %v2259
    %2576 = vmatpush1.bf16.msra.mxu0 %v2258
    %2577 = vmatprep.subr.bf16.mxu0 %v2263
    %2578 = vmatpush1.bf16.msra.mxu0 %v2262
    %2579 = vmatprep.subr.bf16.mxu0 %v2267
    %2580 = vmatpush1.bf16.msra.mxu0 %v2266
    %2581 = vmatprep.subr.bf16.mxu0 %v2271
    %2582 = vmatpush1.bf16.msra.mxu0 %v2270
    %2583 = vmatprep.subr.bf16.mxu0 %v2275
    %2584 = vmatpush1.bf16.msra.mxu0 %v2274
    %2585 = vmatprep.subr.bf16.mxu0 %v2279
    %2586 = vmatpush1.bf16.msra.mxu0 %v2278
    %2587 = vmatprep.subr.bf16.mxu0 %v2283
    %2588 = vmatpush1.bf16.msra.mxu0 %v2282
    %2589 = vmatprep.subr.bf16.mxu0 %v2287
    %2590 = vmatpush1.bf16.msra.mxu0 %v2286
    %2591 = vmatprep.subr.bf16.mxu0 %v2291
    %2592 = vmatpush1.bf16.msra.mxu0 %v2290
    %2593 = vmatprep.subr.bf16.mxu0 %v2295
    %2594 = vmatpush1.bf16.msra.mxu0 %v2294
    %2595 = vmatprep.subr.bf16.mxu0 %v2299
    %2596 = vmatpush1.bf16.msra.mxu0 %v2298
    %2597 = vmatprep.subr.bf16.mxu0 %v2303
    %2598 = vmatpush1.bf16.msra.mxu0 %v2302
    %2599 = vmatprep.subr.bf16.mxu0 %v2307
    %2600 = vmatpush1.bf16.msra.mxu0 %v2306
    %2601 = vmatprep.subr.bf16.mxu0 %v2311
    %2602 = vmatpush1.bf16.msra.mxu0 %v2310
    %2603 = vmatprep.subr.bf16.mxu0 %v2315
    %2604 = vmatpush1.bf16.msra.mxu0 %v2314
    %2605 = vmatprep.mubr.bf16.mxu0 %v1653
    %2606 = vmatmul.mubr.bf16.gmra.mrb[0].mxu0 %v1652
    %v2607 = vpop.f32.mrb[0].mxu0
    %v2608 = vadd.f32 %v2565, %v2607
    %v2609 = vpop.f32.mrb[0].mxu0
    %v2610 = vadd.f32 %v2567, %v2609
    %v2611 = vpop.f32.mrb[0].mxu0
    %v2612 = vadd.f32 %v2569, %v2611
    %v2613 = vpop.f32.mrb[0].mxu0
    %v2614 = vadd.f32 %v2571, %v2613
    %2615 = vdwg.mxu0
    %v2616 = vmax.f32 %v2522, 0.0
    %v2617 = vmax.f32 %v2524, 0.0
    %v2618 = vmax.f32 %v2608, 0.0
    %v2619 = vmax.f32 %v2610, 0.0
    %v2620 = vmax.f32 %v2526, 0.0
    %v2621 = vmax.f32 %v2528, 0.0
    %v2622 = vmax.f32 %v2612, 0.0
    %v2623 = vmax.f32 %v2614, 0.0
    %v2624 = vpack.c.bf16 %v2620, %v2616
    %v2625 = vpack.c.bf16 %v2621, %v2617
    %v2626 = vpack.c.bf16 %v2622, %v2618
    %v2627 = vpack.c.bf16 %v2623, %v2619
    %v2628 = vld [vmem:[#allocation5] sm:$0xff]
    %v2629 = vld [vmem:[#allocation5 + $0x8] sm:$0xff]
    %v2630 = vld [vmem:[#allocation5 + $0x10] sm:$0xff]
    %v2631 = vld [vmem:[#allocation5 + $0x18] sm:$0xff]
    %v2632 = vld [vmem:[#allocation5 + $0x20] sm:$0xff]
    %v2633 = vld [vmem:[#allocation5 + $0x28] sm:$0xff]
    %v2634 = vld [vmem:[#allocation5 + $0x30] sm:$0xff]
    %v2635 = vld [vmem:[#allocation5 + $0x38] sm:$0xff]
    %v2636 = vld [vmem:[#allocation5 + $0x40] sm:$0xff]
    %v2637 = vld [vmem:[#allocation5 + $0x48] sm:$0xff]
    %v2638 = vld [vmem:[#allocation5 + $0x50] sm:$0xff]
    %v2639 = vld [vmem:[#allocation5 + $0x58] sm:$0xff]
    %v2640 = vld [vmem:[#allocation5 + $0x60] sm:$0xff]
    %v2641 = vld [vmem:[#allocation5 + $0x68] sm:$0xff]
    %v2642 = vld [vmem:[#allocation5 + $0x70] sm:$0xff]
    %v2643 = vld [vmem:[#allocation5 + $0x78] sm:$0xff]
    %v2644 = vld [vmem:[#allocation5 + $0x80] sm:$0xff]
    %v2645 = vld [vmem:[#allocation5 + $0x88] sm:$0xff]
    %v2646 = vld [vmem:[#allocation5 + $0x90] sm:$0xff]
    %v2647 = vld [vmem:[#allocation5 + $0x98] sm:$0xff]
    %v2648 = vld [vmem:[#allocation5 + $0xa0] sm:$0xff]
    %v2649 = vld [vmem:[#allocation5 + $0xa8] sm:$0xff]
    %v2650 = vld [vmem:[#allocation5 + $0xb0] sm:$0xff]
    %v2651 = vld [vmem:[#allocation5 + $0xb8] sm:$0xff]
    %v2652 = vld [vmem:[#allocation5 + $0xc0] sm:$0xff]
    %v2653 = vld [vmem:[#allocation5 + $0xc8] sm:$0xff]
    %v2654 = vld [vmem:[#allocation5 + $0xd0] sm:$0xff]
    %v2655 = vld [vmem:[#allocation5 + $0xd8] sm:$0xff]
    %v2656 = vld [vmem:[#allocation5 + $0xe0] sm:$0xff]
    %v2657 = vld [vmem:[#allocation5 + $0xe8] sm:$0xff]
    %v2658 = vld [vmem:[#allocation5 + $0xf0] sm:$0xff]
    %v2659 = vld [vmem:[#allocation5 + $0xf8] sm:$0xff]
    %v2660 = vld [vmem:[#allocation5 + $0x100] sm:$0xff]
    %v2661 = vld [vmem:[#allocation5 + $0x108] sm:$0xff]
    %v2662 = vld [vmem:[#allocation5 + $0x110] sm:$0xff]
    %v2663 = vld [vmem:[#allocation5 + $0x118] sm:$0xff]
    %v2664 = vld [vmem:[#allocation5 + $0x120] sm:$0xff]
    %v2665 = vld [vmem:[#allocation5 + $0x128] sm:$0xff]
    %v2666 = vld [vmem:[#allocation5 + $0x130] sm:$0xff]
    %v2667 = vld [vmem:[#allocation5 + $0x138] sm:$0xff]
    %v2668 = vld [vmem:[#allocation5 + $0x140] sm:$0xff]
    %v2669 = vld [vmem:[#allocation5 + $0x148] sm:$0xff]
    %v2670 = vld [vmem:[#allocation5 + $0x150] sm:$0xff]
    %v2671 = vld [vmem:[#allocation5 + $0x158] sm:$0xff]
    %v2672 = vld [vmem:[#allocation5 + $0x160] sm:$0xff]
    %v2673 = vld [vmem:[#allocation5 + $0x168] sm:$0xff]
    %v2674 = vld [vmem:[#allocation5 + $0x170] sm:$0xff]
    %v2675 = vld [vmem:[#allocation5 + $0x178] sm:$0xff]
    %v2676 = vld [vmem:[#allocation5 + $0x180] sm:$0xff]
    %v2677 = vld [vmem:[#allocation5 + $0x188] sm:$0xff]
    %v2678 = vld [vmem:[#allocation5 + $0x190] sm:$0xff]
    %v2679 = vld [vmem:[#allocation5 + $0x198] sm:$0xff]
    %v2680 = vld [vmem:[#allocation5 + $0x1a0] sm:$0xff]
    %v2681 = vld [vmem:[#allocation5 + $0x1a8] sm:$0xff]
    %v2682 = vld [vmem:[#allocation5 + $0x1b0] sm:$0xff]
    %v2683 = vld [vmem:[#allocation5 + $0x1b8] sm:$0xff]
    %v2684 = vld [vmem:[#allocation5 + $0x1c0] sm:$0xff]
    %v2685 = vld [vmem:[#allocation5 + $0x1c8] sm:$0xff]
    %v2686 = vld [vmem:[#allocation5 + $0x1d0] sm:$0xff]
    %v2687 = vld [vmem:[#allocation5 + $0x1d8] sm:$0xff]
    %v2688 = vld [vmem:[#allocation5 + $0x1e0] sm:$0xff]
    %v2689 = vld [vmem:[#allocation5 + $0x1e8] sm:$0xff]
    %v2690 = vld [vmem:[#allocation5 + $0x1f0] sm:$0xff]
    %v2691 = vld [vmem:[#allocation5 + $0x1f8] sm:$0xff]
    %v2692 = vld [vmem:[#allocation5 + $0x200] sm:$0xff]
    %v2693 = vld [vmem:[#allocation5 + $0x208] sm:$0xff]
    %v2694 = vld [vmem:[#allocation5 + $0x210] sm:$0xff]
    %v2695 = vld [vmem:[#allocation5 + $0x218] sm:$0xff]
    %v2696 = vld [vmem:[#allocation5 + $0x220] sm:$0xff]
    %v2697 = vld [vmem:[#allocation5 + $0x228] sm:$0xff]
    %v2698 = vld [vmem:[#allocation5 + $0x230] sm:$0xff]
    %v2699 = vld [vmem:[#allocation5 + $0x238] sm:$0xff]
    %v2700 = vld [vmem:[#allocation5 + $0x240] sm:$0xff]
    %v2701 = vld [vmem:[#allocation5 + $0x248] sm:$0xff]
    %v2702 = vld [vmem:[#allocation5 + $0x250] sm:$0xff]
    %v2703 = vld [vmem:[#allocation5 + $0x258] sm:$0xff]
    %v2704 = vld [vmem:[#allocation5 + $0x260] sm:$0xff]
    %v2705 = vld [vmem:[#allocation5 + $0x268] sm:$0xff]
    %v2706 = vld [vmem:[#allocation5 + $0x270] sm:$0xff]
    %v2707 = vld [vmem:[#allocation5 + $0x278] sm:$0xff]
    %v2708 = vld [vmem:[#allocation5 + $0x280] sm:$0xff]
    %v2709 = vld [vmem:[#allocation5 + $0x288] sm:$0xff]
    %v2710 = vld [vmem:[#allocation5 + $0x290] sm:$0xff]
    %v2711 = vld [vmem:[#allocation5 + $0x298] sm:$0xff]
    %v2712 = vld [vmem:[#allocation5 + $0x2a0] sm:$0xff]
    %v2713 = vld [vmem:[#allocation5 + $0x2a8] sm:$0xff]
    %v2714 = vld [vmem:[#allocation5 + $0x2b0] sm:$0xff]
    %v2715 = vld [vmem:[#allocation5 + $0x2b8] sm:$0xff]
    %v2716 = vld [vmem:[#allocation5 + $0x2c0] sm:$0xff]
    %v2717 = vld [vmem:[#allocation5 + $0x2c8] sm:$0xff]
    %v2718 = vld [vmem:[#allocation5 + $0x2d0] sm:$0xff]
    %v2719 = vld [vmem:[#allocation5 + $0x2d8] sm:$0xff]
    %v2720 = vld [vmem:[#allocation5 + $0x2e0] sm:$0xff]
    %v2721 = vld [vmem:[#allocation5 + $0x2e8] sm:$0xff]
    %v2722 = vld [vmem:[#allocation5 + $0x2f0] sm:$0xff]
    %v2723 = vld [vmem:[#allocation5 + $0x2f8] sm:$0xff]
    %v2724 = vld [vmem:[#allocation5 + $0x300] sm:$0xff]
    %v2725 = vld [vmem:[#allocation5 + $0x308] sm:$0xff]
    %v2726 = vld [vmem:[#allocation5 + $0x310] sm:$0xff]
    %v2727 = vld [vmem:[#allocation5 + $0x318] sm:$0xff]
    %v2728 = vld [vmem:[#allocation5 + $0x320] sm:$0xff]
    %v2729 = vld [vmem:[#allocation5 + $0x328] sm:$0xff]
    %v2730 = vld [vmem:[#allocation5 + $0x330] sm:$0xff]
    %v2731 = vld [vmem:[#allocation5 + $0x338] sm:$0xff]
    %v2732 = vld [vmem:[#allocation5 + $0x340] sm:$0xff]
    %v2733 = vld [vmem:[#allocation5 + $0x348] sm:$0xff]
    %v2734 = vld [vmem:[#allocation5 + $0x350] sm:$0xff]
    %v2735 = vld [vmem:[#allocation5 + $0x358] sm:$0xff]
    %v2736 = vld [vmem:[#allocation5 + $0x360] sm:$0xff]
    %v2737 = vld [vmem:[#allocation5 + $0x368] sm:$0xff]
    %v2738 = vld [vmem:[#allocation5 + $0x370] sm:$0xff]
    %v2739 = vld [vmem:[#allocation5 + $0x378] sm:$0xff]
    %v2740 = vld [vmem:[#allocation5 + $0x380] sm:$0xff]
    %v2741 = vld [vmem:[#allocation5 + $0x388] sm:$0xff]
    %v2742 = vld [vmem:[#allocation5 + $0x390] sm:$0xff]
    %v2743 = vld [vmem:[#allocation5 + $0x398] sm:$0xff]
    %v2744 = vld [vmem:[#allocation5 + $0x3a0] sm:$0xff]
    %v2745 = vld [vmem:[#allocation5 + $0x3a8] sm:$0xff]
    %v2746 = vld [vmem:[#allocation5 + $0x3b0] sm:$0xff]
    %v2747 = vld [vmem:[#allocation5 + $0x3b8] sm:$0xff]
    %v2748 = vld [vmem:[#allocation5 + $0x3c0] sm:$0xff]
    %v2749 = vld [vmem:[#allocation5 + $0x3c8] sm:$0xff]
    %v2750 = vld [vmem:[#allocation5 + $0x3d0] sm:$0xff]
    %v2751 = vld [vmem:[#allocation5 + $0x3d8] sm:$0xff]
    %v2752 = vld [vmem:[#allocation5 + $0x3e0] sm:$0xff]
    %v2753 = vld [vmem:[#allocation5 + $0x3e8] sm:$0xff]
    %v2754 = vld [vmem:[#allocation5 + $0x3f0] sm:$0xff]
    %v2755 = vld [vmem:[#allocation5 + $0x3f8] sm:$0xff]
    %v2756 = vld [vmem:[%s6] sm:$0xf]
    %v2758 = vlaneseq
    %v2759 = vshrl.u32 %v2758, 7
    %v2760 = vsub.s32 0, %v2759
    %v2761 = vrot.slane %v2756, %v2760
    %v2762 = vlaneseq
    %v2763 = vshrl.u32 %v2762, 7
    %v2764 = vsub.s32 1, %v2763
    %v2765 = vrot.slane %v2756, %v2764
    %v2766 = vlaneseq
    %v2767 = vshrl.u32 %v2766, 7
    %v2768 = vsub.s32 2, %v2767
    %v2769 = vrot.slane %v2756, %v2768
    %v2770 = vlaneseq
    %v2771 = vshrl.u32 %v2770, 7
    %v2772 = vsub.s32 3, %v2771
    %v2773 = vrot.slane %v2756, %v2772
    %v2906 = vunpack.c.l.b16 %v2628
    %v2907 = vunpack.c.h.b16 %v2628
    %v2908 = vunpack.c.l.b16 %v2629
    %v2909 = vunpack.c.h.b16 %v2629
    %v2910 = vunpack.c.l.b16 %v2630
    %v2911 = vunpack.c.h.b16 %v2630
    %v2912 = vunpack.c.l.b16 %v2631
    %v2913 = vunpack.c.h.b16 %v2631
    %v2914 = vunpack.c.l.b16 %v2632
    %v2915 = vunpack.c.h.b16 %v2632
    %v2916 = vunpack.c.l.b16 %v2633
    %v2917 = vunpack.c.h.b16 %v2633
    %v2918 = vunpack.c.l.b16 %v2634
    %v2919 = vunpack.c.h.b16 %v2634
    %v2920 = vunpack.c.l.b16 %v2635
    %v2921 = vunpack.c.h.b16 %v2635
    %v2922 = vunpack.c.l.b16 %v2636
    %v2923 = vunpack.c.h.b16 %v2636
    %v2924 = vunpack.c.l.b16 %v2637
    %v2925 = vunpack.c.h.b16 %v2637
    %v2926 = vunpack.c.l.b16 %v2638
    %v2927 = vunpack.c.h.b16 %v2638
    %v2928 = vunpack.c.l.b16 %v2639
    %v2929 = vunpack.c.h.b16 %v2639
    %v2930 = vunpack.c.l.b16 %v2640
    %v2931 = vunpack.c.h.b16 %v2640
    %v2932 = vunpack.c.l.b16 %v2641
    %v2933 = vunpack.c.h.b16 %v2641
    %v2934 = vunpack.c.l.b16 %v2642
    %v2935 = vunpack.c.h.b16 %v2642
    %v2936 = vunpack.c.l.b16 %v2643
    %v2937 = vunpack.c.h.b16 %v2643
    %v2938 = vunpack.c.l.b16 %v2644
    %v2939 = vunpack.c.h.b16 %v2644
    %v2940 = vunpack.c.l.b16 %v2645
    %v2941 = vunpack.c.h.b16 %v2645
    %v2942 = vunpack.c.l.b16 %v2646
    %v2943 = vunpack.c.h.b16 %v2646
    %v2944 = vunpack.c.l.b16 %v2647
    %v2945 = vunpack.c.h.b16 %v2647
    %v2946 = vunpack.c.l.b16 %v2648
    %v2947 = vunpack.c.h.b16 %v2648
    %v2948 = vunpack.c.l.b16 %v2649
    %v2949 = vunpack.c.h.b16 %v2649
    %v2950 = vunpack.c.l.b16 %v2650
    %v2951 = vunpack.c.h.b16 %v2650
    %v2952 = vunpack.c.l.b16 %v2651
    %v2953 = vunpack.c.h.b16 %v2651
    %v2954 = vunpack.c.l.b16 %v2652
    %v2955 = vunpack.c.h.b16 %v2652
    %v2956 = vunpack.c.l.b16 %v2653
    %v2957 = vunpack.c.h.b16 %v2653
    %v2958 = vunpack.c.l.b16 %v2654
    %v2959 = vunpack.c.h.b16 %v2654
    %v2960 = vunpack.c.l.b16 %v2655
    %v2961 = vunpack.c.h.b16 %v2655
    %v2962 = vunpack.c.l.b16 %v2656
    %v2963 = vunpack.c.h.b16 %v2656
    %v2964 = vunpack.c.l.b16 %v2657
    %v2965 = vunpack.c.h.b16 %v2657
    %v2966 = vunpack.c.l.b16 %v2658
    %v2967 = vunpack.c.h.b16 %v2658
    %v2968 = vunpack.c.l.b16 %v2659
    %v2969 = vunpack.c.h.b16 %v2659
    %v2970 = vunpack.c.l.b16 %v2660
    %v2971 = vunpack.c.h.b16 %v2660
    %v2972 = vunpack.c.l.b16 %v2661
    %v2973 = vunpack.c.h.b16 %v2661
    %v2974 = vunpack.c.l.b16 %v2662
    %v2975 = vunpack.c.h.b16 %v2662
    %v2976 = vunpack.c.l.b16 %v2663
    %v2977 = vunpack.c.h.b16 %v2663
    %v2978 = vunpack.c.l.b16 %v2664
    %v2979 = vunpack.c.h.b16 %v2664
    %v2980 = vunpack.c.l.b16 %v2665
    %v2981 = vunpack.c.h.b16 %v2665
    %v2982 = vunpack.c.l.b16 %v2666
    %v2983 = vunpack.c.h.b16 %v2666
    %v2984 = vunpack.c.l.b16 %v2667
    %v2985 = vunpack.c.h.b16 %v2667
    %v2986 = vunpack.c.l.b16 %v2668
    %v2987 = vunpack.c.h.b16 %v2668
    %v2988 = vunpack.c.l.b16 %v2669
    %v2989 = vunpack.c.h.b16 %v2669
    %v2990 = vunpack.c.l.b16 %v2670
    %v2991 = vunpack.c.h.b16 %v2670
    %v2992 = vunpack.c.l.b16 %v2671
    %v2993 = vunpack.c.h.b16 %v2671
    %v2994 = vunpack.c.l.b16 %v2672
    %v2995 = vunpack.c.h.b16 %v2672
    %v2996 = vunpack.c.l.b16 %v2673
    %v2997 = vunpack.c.h.b16 %v2673
    %v2998 = vunpack.c.l.b16 %v2674
    %v2999 = vunpack.c.h.b16 %v2674
    %v3000 = vunpack.c.l.b16 %v2675
    %v3001 = vunpack.c.h.b16 %v2675
    %v3002 = vunpack.c.l.b16 %v2676
    %v3003 = vunpack.c.h.b16 %v2676
    %v3004 = vunpack.c.l.b16 %v2677
    %v3005 = vunpack.c.h.b16 %v2677
    %v3006 = vunpack.c.l.b16 %v2678
    %v3007 = vunpack.c.h.b16 %v2678
    %v3008 = vunpack.c.l.b16 %v2679
    %v3009 = vunpack.c.h.b16 %v2679
    %v3010 = vunpack.c.l.b16 %v2680
    %v3011 = vunpack.c.h.b16 %v2680
    %v3012 = vunpack.c.l.b16 %v2681
    %v3013 = vunpack.c.h.b16 %v2681
    %v3014 = vunpack.c.l.b16 %v2682
    %v3015 = vunpack.c.h.b16 %v2682
    %v3016 = vunpack.c.l.b16 %v2683
    %v3017 = vunpack.c.h.b16 %v2683
    %v3018 = vunpack.c.l.b16 %v2684
    %v3019 = vunpack.c.h.b16 %v2684
    %v3020 = vunpack.c.l.b16 %v2685
    %v3021 = vunpack.c.h.b16 %v2685
    %v3022 = vunpack.c.l.b16 %v2686
    %v3023 = vunpack.c.h.b16 %v2686
    %v3024 = vunpack.c.l.b16 %v2687
    %v3025 = vunpack.c.h.b16 %v2687
    %v3026 = vunpack.c.l.b16 %v2688
    %v3027 = vunpack.c.h.b16 %v2688
    %v3028 = vunpack.c.l.b16 %v2689
    %v3029 = vunpack.c.h.b16 %v2689
    %v3030 = vunpack.c.l.b16 %v2690
    %v3031 = vunpack.c.h.b16 %v2690
    %v3032 = vunpack.c.l.b16 %v2691
    %v3033 = vunpack.c.h.b16 %v2691
    %v3034 = vunpack.c.l.b16 %v2692
    %v3035 = vunpack.c.h.b16 %v2692
    %v3036 = vunpack.c.l.b16 %v2693
    %v3037 = vunpack.c.h.b16 %v2693
    %v3038 = vunpack.c.l.b16 %v2694
    %v3039 = vunpack.c.h.b16 %v2694
    %v3040 = vunpack.c.l.b16 %v2695
    %v3041 = vunpack.c.h.b16 %v2695
    %v3042 = vunpack.c.l.b16 %v2696
    %v3043 = vunpack.c.h.b16 %v2696
    %v3044 = vunpack.c.l.b16 %v2697
    %v3045 = vunpack.c.h.b16 %v2697
    %v3046 = vunpack.c.l.b16 %v2698
    %v3047 = vunpack.c.h.b16 %v2698
    %v3048 = vunpack.c.l.b16 %v2699
    %v3049 = vunpack.c.h.b16 %v2699
    %v3050 = vunpack.c.l.b16 %v2700
    %v3051 = vunpack.c.h.b16 %v2700
    %v3052 = vunpack.c.l.b16 %v2701
    %v3053 = vunpack.c.h.b16 %v2701
    %v3054 = vunpack.c.l.b16 %v2702
    %v3055 = vunpack.c.h.b16 %v2702
    %v3056 = vunpack.c.l.b16 %v2703
    %v3057 = vunpack.c.h.b16 %v2703
    %v3058 = vunpack.c.l.b16 %v2704
    %v3059 = vunpack.c.h.b16 %v2704
    %v3060 = vunpack.c.l.b16 %v2705
    %v3061 = vunpack.c.h.b16 %v2705
    %v3062 = vunpack.c.l.b16 %v2706
    %v3063 = vunpack.c.h.b16 %v2706
    %v3064 = vunpack.c.l.b16 %v2707
    %v3065 = vunpack.c.h.b16 %v2707
    %v3066 = vunpack.c.l.b16 %v2708
    %v3067 = vunpack.c.h.b16 %v2708
    %v3068 = vunpack.c.l.b16 %v2709
    %v3069 = vunpack.c.h.b16 %v2709
    %v3070 = vunpack.c.l.b16 %v2710
    %v3071 = vunpack.c.h.b16 %v2710
    %v3072 = vunpack.c.l.b16 %v2711
    %v3073 = vunpack.c.h.b16 %v2711
    %v3074 = vunpack.c.l.b16 %v2712
    %v3075 = vunpack.c.h.b16 %v2712
    %v3076 = vunpack.c.l.b16 %v2713
    %v3077 = vunpack.c.h.b16 %v2713
    %v3078 = vunpack.c.l.b16 %v2714
    %v3079 = vunpack.c.h.b16 %v2714
    %v3080 = vunpack.c.l.b16 %v2715
    %v3081 = vunpack.c.h.b16 %v2715
    %v3082 = vunpack.c.l.b16 %v2716
    %v3083 = vunpack.c.h.b16 %v2716
    %v3084 = vunpack.c.l.b16 %v2717
    %v3085 = vunpack.c.h.b16 %v2717
    %v3086 = vunpack.c.l.b16 %v2718
    %v3087 = vunpack.c.h.b16 %v2718
    %v3088 = vunpack.c.l.b16 %v2719
    %v3089 = vunpack.c.h.b16 %v2719
    %v3090 = vunpack.c.l.b16 %v2720
    %v3091 = vunpack.c.h.b16 %v2720
    %v3092 = vunpack.c.l.b16 %v2721
    %v3093 = vunpack.c.h.b16 %v2721
    %v3094 = vunpack.c.l.b16 %v2722
    %v3095 = vunpack.c.h.b16 %v2722
    %v3096 = vunpack.c.l.b16 %v2723
    %v3097 = vunpack.c.h.b16 %v2723
    %v3098 = vunpack.c.l.b16 %v2724
    %v3099 = vunpack.c.h.b16 %v2724
    %v3100 = vunpack.c.l.b16 %v2725
    %v3101 = vunpack.c.h.b16 %v2725
    %v3102 = vunpack.c.l.b16 %v2726
    %v3103 = vunpack.c.h.b16 %v2726
    %v3104 = vunpack.c.l.b16 %v2727
    %v3105 = vunpack.c.h.b16 %v2727
    %v3106 = vunpack.c.l.b16 %v2728
    %v3107 = vunpack.c.h.b16 %v2728
    %v3108 = vunpack.c.l.b16 %v2729
    %v3109 = vunpack.c.h.b16 %v2729
    %v3110 = vunpack.c.l.b16 %v2730
    %v3111 = vunpack.c.h.b16 %v2730
    %v3112 = vunpack.c.l.b16 %v2731
    %v3113 = vunpack.c.h.b16 %v2731
    %v3114 = vunpack.c.l.b16 %v2732
    %v3115 = vunpack.c.h.b16 %v2732
    %v3116 = vunpack.c.l.b16 %v2733
    %v3117 = vunpack.c.h.b16 %v2733
    %v3118 = vunpack.c.l.b16 %v2734
    %v3119 = vunpack.c.h.b16 %v2734
    %v3120 = vunpack.c.l.b16 %v2735
    %v3121 = vunpack.c.h.b16 %v2735
    %v3122 = vunpack.c.l.b16 %v2736
    %v3123 = vunpack.c.h.b16 %v2736
    %v3124 = vunpack.c.l.b16 %v2737
    %v3125 = vunpack.c.h.b16 %v2737
    %v3126 = vunpack.c.l.b16 %v2738
    %v3127 = vunpack.c.h.b16 %v2738
    %v3128 = vunpack.c.l.b16 %v2739
    %v3129 = vunpack.c.h.b16 %v2739
    %v3130 = vunpack.c.l.b16 %v2740
    %v3131 = vunpack.c.h.b16 %v2740
    %v3132 = vunpack.c.l.b16 %v2741
    %v3133 = vunpack.c.h.b16 %v2741
    %v3134 = vunpack.c.l.b16 %v2742
    %v3135 = vunpack.c.h.b16 %v2742
    %v3136 = vunpack.c.l.b16 %v2743
    %v3137 = vunpack.c.h.b16 %v2743
    %v3138 = vunpack.c.l.b16 %v2744
    %v3139 = vunpack.c.h.b16 %v2744
    %v3140 = vunpack.c.l.b16 %v2745
    %v3141 = vunpack.c.h.b16 %v2745
    %v3142 = vunpack.c.l.b16 %v2746
    %v3143 = vunpack.c.h.b16 %v2746
    %v3144 = vunpack.c.l.b16 %v2747
    %v3145 = vunpack.c.h.b16 %v2747
    %v3146 = vunpack.c.l.b16 %v2748
    %v3147 = vunpack.c.h.b16 %v2748
    %v3148 = vunpack.c.l.b16 %v2749
    %v3149 = vunpack.c.h.b16 %v2749
    %v3150 = vunpack.c.l.b16 %v2750
    %v3151 = vunpack.c.h.b16 %v2750
    %v3152 = vunpack.c.l.b16 %v2751
    %v3153 = vunpack.c.h.b16 %v2751
    %v3154 = vunpack.c.l.b16 %v2752
    %v3155 = vunpack.c.h.b16 %v2752
    %v3156 = vunpack.c.l.b16 %v2753
    %v3157 = vunpack.c.h.b16 %v2753
    %v3158 = vunpack.c.l.b16 %v2754
    %v3159 = vunpack.c.h.b16 %v2754
    %v3160 = vunpack.c.l.b16 %v2755
    %v3161 = vunpack.c.h.b16 %v2755
    %v3162 = vpack.c.b16 %v2910, %v2906
    %v3163 = vpack.c.b16 %v2911, %v2907
    %v3164 = vpack.c.b16 %v2912, %v2908
    %v3165 = vpack.c.b16 %v2913, %v2909
    %v3166 = vpack.c.b16 %v2918, %v2914
    %v3167 = vpack.c.b16 %v2919, %v2915
    %v3168 = vpack.c.b16 %v2920, %v2916
    %v3169 = vpack.c.b16 %v2921, %v2917
    %v3170 = vpack.c.b16 %v2926, %v2922
    %v3171 = vpack.c.b16 %v2927, %v2923
    %v3172 = vpack.c.b16 %v2928, %v2924
    %v3173 = vpack.c.b16 %v2929, %v2925
    %v3174 = vpack.c.b16 %v2934, %v2930
    %v3175 = vpack.c.b16 %v2935, %v2931
    %v3176 = vpack.c.b16 %v2936, %v2932
    %v3177 = vpack.c.b16 %v2937, %v2933
    %v3178 = vpack.c.b16 %v2942, %v2938
    %v3179 = vpack.c.b16 %v2943, %v2939
    %v3180 = vpack.c.b16 %v2944, %v2940
    %v3181 = vpack.c.b16 %v2945, %v2941
    %v3182 = vpack.c.b16 %v2950, %v2946
    %v3183 = vpack.c.b16 %v2951, %v2947
    %v3184 = vpack.c.b16 %v2952, %v2948
    %v3185 = vpack.c.b16 %v2953, %v2949
    %v3186 = vpack.c.b16 %v2958, %v2954
    %v3187 = vpack.c.b16 %v2959, %v2955
    %v3188 = vpack.c.b16 %v2960, %v2956
    %v3189 = vpack.c.b16 %v2961, %v2957
    %v3190 = vpack.c.b16 %v2966, %v2962
    %v3191 = vpack.c.b16 %v2967, %v2963
    %v3192 = vpack.c.b16 %v2968, %v2964
    %v3193 = vpack.c.b16 %v2969, %v2965
    %v3194 = vpack.c.b16 %v2974, %v2970
    %v3195 = vpack.c.b16 %v2975, %v2971
    %v3196 = vpack.c.b16 %v2976, %v2972
    %v3197 = vpack.c.b16 %v2977, %v2973
    %v3198 = vpack.c.b16 %v2982, %v2978
    %v3199 = vpack.c.b16 %v2983, %v2979
    %v3200 = vpack.c.b16 %v2984, %v2980
    %v3201 = vpack.c.b16 %v2985, %v2981
    %v3202 = vpack.c.b16 %v2990, %v2986
    %v3203 = vpack.c.b16 %v2991, %v2987
    %v3204 = vpack.c.b16 %v2992, %v2988
    %v3205 = vpack.c.b16 %v2993, %v2989
    %v3206 = vpack.c.b16 %v2998, %v2994
    %v3207 = vpack.c.b16 %v2999, %v2995
    %v3208 = vpack.c.b16 %v3000, %v2996
    %v3209 = vpack.c.b16 %v3001, %v2997
    %v3210 = vpack.c.b16 %v3006, %v3002
    %v3211 = vpack.c.b16 %v3007, %v3003
    %v3212 = vpack.c.b16 %v3008, %v3004
    %v3213 = vpack.c.b16 %v3009, %v3005
    %v3214 = vpack.c.b16 %v3014, %v3010
    %v3215 = vpack.c.b16 %v3015, %v3011
    %v3216 = vpack.c.b16 %v3016, %v3012
    %v3217 = vpack.c.b16 %v3017, %v3013
    %v3218 = vpack.c.b16 %v3022, %v3018
    %v3219 = vpack.c.b16 %v3023, %v3019
    %v3220 = vpack.c.b16 %v3024, %v3020
    %v3221 = vpack.c.b16 %v3025, %v3021
    %v3222 = vpack.c.b16 %v3030, %v3026
    %v3223 = vpack.c.b16 %v3031, %v3027
    %v3224 = vpack.c.b16 %v3032, %v3028
    %v3225 = vpack.c.b16 %v3033, %v3029
    %v3226 = vpack.c.b16 %v3038, %v3034
    %v3227 = vpack.c.b16 %v3039, %v3035
    %v3228 = vpack.c.b16 %v3040, %v3036
    %v3229 = vpack.c.b16 %v3041, %v3037
    %v3230 = vpack.c.b16 %v3046, %v3042
    %v3231 = vpack.c.b16 %v3047, %v3043
    %v3232 = vpack.c.b16 %v3048, %v3044
    %v3233 = vpack.c.b16 %v3049, %v3045
    %v3234 = vpack.c.b16 %v3054, %v3050
    %v3235 = vpack.c.b16 %v3055, %v3051
    %v3236 = vpack.c.b16 %v3056, %v3052
    %v3237 = vpack.c.b16 %v3057, %v3053
    %v3238 = vpack.c.b16 %v3062, %v3058
    %v3239 = vpack.c.b16 %v3063, %v3059
    %v3240 = vpack.c.b16 %v3064, %v3060
    %v3241 = vpack.c.b16 %v3065, %v3061
    %v3242 = vpack.c.b16 %v3070, %v3066
    %v3243 = vpack.c.b16 %v3071, %v3067
    %v3244 = vpack.c.b16 %v3072, %v3068
    %v3245 = vpack.c.b16 %v3073, %v3069
    %v3246 = vpack.c.b16 %v3078, %v3074
    %v3247 = vpack.c.b16 %v3079, %v3075
    %v3248 = vpack.c.b16 %v3080, %v3076
    %v3249 = vpack.c.b16 %v3081, %v3077
    %v3250 = vpack.c.b16 %v3086, %v3082
    %v3251 = vpack.c.b16 %v3087, %v3083
    %v3252 = vpack.c.b16 %v3088, %v3084
    %v3253 = vpack.c.b16 %v3089, %v3085
    %v3254 = vpack.c.b16 %v3094, %v3090
    %v3255 = vpack.c.b16 %v3095, %v3091
    %v3256 = vpack.c.b16 %v3096, %v3092
    %v3257 = vpack.c.b16 %v3097, %v3093
    %v3258 = vpack.c.b16 %v3102, %v3098
    %v3259 = vpack.c.b16 %v3103, %v3099
    %v3260 = vpack.c.b16 %v3104, %v3100
    %v3261 = vpack.c.b16 %v3105, %v3101
    %v3262 = vpack.c.b16 %v3110, %v3106
    %v3263 = vpack.c.b16 %v3111, %v3107
    %v3264 = vpack.c.b16 %v3112, %v3108
    %v3265 = vpack.c.b16 %v3113, %v3109
    %v3266 = vpack.c.b16 %v3118, %v3114
    %v3267 = vpack.c.b16 %v3119, %v3115
    %v3268 = vpack.c.b16 %v3120, %v3116
    %v3269 = vpack.c.b16 %v3121, %v3117
    %v3270 = vpack.c.b16 %v3126, %v3122
    %v3271 = vpack.c.b16 %v3127, %v3123
    %v3272 = vpack.c.b16 %v3128, %v3124
    %v3273 = vpack.c.b16 %v3129, %v3125
    %v3274 = vpack.c.b16 %v3134, %v3130
    %v3275 = vpack.c.b16 %v3135, %v3131
    %v3276 = vpack.c.b16 %v3136, %v3132
    %v3277 = vpack.c.b16 %v3137, %v3133
    %v3278 = vpack.c.b16 %v3142, %v3138
    %v3279 = vpack.c.b16 %v3143, %v3139
    %v3280 = vpack.c.b16 %v3144, %v3140
    %v3281 = vpack.c.b16 %v3145, %v3141
    %v3282 = vpack.c.b16 %v3150, %v3146
    %v3283 = vpack.c.b16 %v3151, %v3147
    %v3284 = vpack.c.b16 %v3152, %v3148
    %v3285 = vpack.c.b16 %v3153, %v3149
    %v3286 = vpack.c.b16 %v3158, %v3154
    %v3287 = vpack.c.b16 %v3159, %v3155
    %v3288 = vpack.c.b16 %v3160, %v3156
    %v3289 = vpack.c.b16 %v3161, %v3157
    %3418 = vmatprep.subr.bf16.mxu0 %v3163
    %3419 = vmatpush1.bf16.msra.mxu0 %v3162
    %3420 = vmatprep.subr.bf16.mxu0 %v3167
    %3421 = vmatpush1.bf16.msra.mxu0 %v3166
    %3422 = vmatprep.subr.bf16.mxu0 %v3171
    %3423 = vmatpush1.bf16.msra.mxu0 %v3170
    %3424 = vmatprep.subr.bf16.mxu0 %v3175
    %3425 = vmatpush1.bf16.msra.mxu0 %v3174
    %3426 = vmatprep.subr.bf16.mxu0 %v3179
    %3427 = vmatpush1.bf16.msra.mxu0 %v3178
    %3428 = vmatprep.subr.bf16.mxu0 %v3183
    %3429 = vmatpush1.bf16.msra.mxu0 %v3182
    %3430 = vmatprep.subr.bf16.mxu0 %v3187
    %3431 = vmatpush1.bf16.msra.mxu0 %v3186
    %3432 = vmatprep.subr.bf16.mxu0 %v3191
    %3433 = vmatpush1.bf16.msra.mxu0 %v3190
    %3434 = vmatprep.subr.bf16.mxu0 %v3195
    %3435 = vmatpush1.bf16.msra.mxu0 %v3194
    %3436 = vmatprep.subr.bf16.mxu0 %v3199
    %3437 = vmatpush1.bf16.msra.mxu0 %v3198
    %3438 = vmatprep.subr.bf16.mxu0 %v3203
    %3439 = vmatpush1.bf16.msra.mxu0 %v3202
    %3440 = vmatprep.subr.bf16.mxu0 %v3207
    %3441 = vmatpush1.bf16.msra.mxu0 %v3206
    %3442 = vmatprep.subr.bf16.mxu0 %v3211
    %3443 = vmatpush1.bf16.msra.mxu0 %v3210
    %3444 = vmatprep.subr.bf16.mxu0 %v3215
    %3445 = vmatpush1.bf16.msra.mxu0 %v3214
    %3446 = vmatprep.subr.bf16.mxu0 %v3219
    %3447 = vmatpush1.bf16.msra.mxu0 %v3218
    %3448 = vmatprep.subr.bf16.mxu0 %v3223
    %3449 = vmatpush1.bf16.msra.mxu0 %v3222
    %3450 = vmatprep.mubr.bf16.mxu0 %v2625
    %3451 = vmatmul.mubr.bf16.gmra.mrb[0].mxu0 %v2624
    %v3452 = vpop.f32.mrb[0].mxu0
    %v3453 = vadd.f32 %v2761, %v3452
    %v3454 = vpop.f32.mrb[0].mxu0
    %v3455 = vadd.f32 %v2765, %v3454
    %v3456 = vpop.f32.mrb[0].mxu0
    %v3457 = vadd.f32 %v2761, %v3456
    %v3458 = vpop.f32.mrb[0].mxu0
    %v3459 = vadd.f32 %v2765, %v3458
    %3460 = vdwg.mxu0
    %3461 = vmatprep.subr.bf16.mxu0 %v3227
    %3462 = vmatpush1.bf16.msra.mxu0 %v3226
    %3463 = vmatprep.subr.bf16.mxu0 %v3231
    %3464 = vmatpush1.bf16.msra.mxu0 %v3230
    %3465 = vmatprep.subr.bf16.mxu0 %v3235
    %3466 = vmatpush1.bf16.msra.mxu0 %v3234
    %3467 = vmatprep.subr.bf16.mxu0 %v3239
    %3468 = vmatpush1.bf16.msra.mxu0 %v3238
    %3469 = vmatprep.subr.bf16.mxu0 %v3243
    %3470 = vmatpush1.bf16.msra.mxu0 %v3242
    %3471 = vmatprep.subr.bf16.mxu0 %v3247
    %3472 = vmatpush1.bf16.msra.mxu0 %v3246
    %3473 = vmatprep.subr.bf16.mxu0 %v3251
    %3474 = vmatpush1.bf16.msra.mxu0 %v3250
    %3475 = vmatprep.subr.bf16.mxu0 %v3255
    %3476 = vmatpush1.bf16.msra.mxu0 %v3254
    %3477 = vmatprep.subr.bf16.mxu0 %v3259
    %3478 = vmatpush1.bf16.msra.mxu0 %v3258
    %3479 = vmatprep.subr.bf16.mxu0 %v3263
    %3480 = vmatpush1.bf16.msra.mxu0 %v3262
    %3481 = vmatprep.subr.bf16.mxu0 %v3267
    %3482 = vmatpush1.bf16.msra.mxu0 %v3266
    %3483 = vmatprep.subr.bf16.mxu0 %v3271
    %3484 = vmatpush1.bf16.msra.mxu0 %v3270
    %3485 = vmatprep.subr.bf16.mxu0 %v3275
    %3486 = vmatpush1.bf16.msra.mxu0 %v3274
    %3487 = vmatprep.subr.bf16.mxu0 %v3279
    %3488 = vmatpush1.bf16.msra.mxu0 %v3278
    %3489 = vmatprep.subr.bf16.mxu0 %v3283
    %3490 = vmatpush1.bf16.msra.mxu0 %v3282
    %3491 = vmatprep.subr.bf16.mxu0 %v3287
    %3492 = vmatpush1.bf16.msra.mxu0 %v3286
    %3493 = vmatprep.mubr.bf16.mxu0 %v2627
    %3494 = vmatmul.mubr.bf16.gmra.mrb[0].mxu0 %v2626
    %v3495 = vpop.f32.mrb[0].mxu0
    %v3496 = vadd.f32 %v3453, %v3495
    %v3497 = vpop.f32.mrb[0].mxu0
    %v3498 = vadd.f32 %v3455, %v3497
    %v3499 = vpop.f32.mrb[0].mxu0
    %v3500 = vadd.f32 %v3457, %v3499
    %v3501 = vpop.f32.mrb[0].mxu0
    %v3502 = vadd.f32 %v3459, %v3501
    %3503 = vdwg.mxu0
    %3504 = vmatprep.subr.bf16.mxu0 %v3165
    %3505 = vmatpush1.bf16.msra.mxu0 %v3164
    %3506 = vmatprep.subr.bf16.mxu0 %v3169
    %3507 = vmatpush1.bf16.msra.mxu0 %v3168
    %3508 = vmatprep.subr.bf16.mxu0 %v3173
    %3509 = vmatpush1.bf16.msra.mxu0 %v3172
    %3510 = vmatprep.subr.bf16.mxu0 %v3177
    %3511 = vmatpush1.bf16.msra.mxu0 %v3176
    %3512 = vmatprep.subr.bf16.mxu0 %v3181
    %3513 = vmatpush1.bf16.msra.mxu0 %v3180
    %3514 = vmatprep.subr.bf16.mxu0 %v3185
    %3515 = vmatpush1.bf16.msra.mxu0 %v3184
    %3516 = vmatprep.subr.bf16.mxu0 %v3189
    %3517 = vmatpush1.bf16.msra.mxu0 %v3188
    %3518 = vmatprep.subr.bf16.mxu0 %v3193
    %3519 = vmatpush1.bf16.msra.mxu0 %v3192
    %3520 = vmatprep.subr.bf16.mxu0 %v3197
    %3521 = vmatpush1.bf16.msra.mxu0 %v3196
    %3522 = vmatprep.subr.bf16.mxu0 %v3201
    %3523 = vmatpush1.bf16.msra.mxu0 %v3200
    %3524 = vmatprep.subr.bf16.mxu0 %v3205
    %3525 = vmatpush1.bf16.msra.mxu0 %v3204
    %3526 = vmatprep.subr.bf16.mxu0 %v3209
    %3527 = vmatpush1.bf16.msra.mxu0 %v3208
    %3528 = vmatprep.subr.bf16.mxu0 %v3213
    %3529 = vmatpush1.bf16.msra.mxu0 %v3212
    %3530 = vmatprep.subr.bf16.mxu0 %v3217
    %3531 = vmatpush1.bf16.msra.mxu0 %v3216
    %3532 = vmatprep.subr.bf16.mxu0 %v3221
    %3533 = vmatpush1.bf16.msra.mxu0 %v3220
    %3534 = vmatprep.subr.bf16.mxu0 %v3225
    %3535 = vmatpush1.bf16.msra.mxu0 %v3224
    %3536 = vmatprep.mubr.bf16.mxu0 %v2625
    %3537 = vmatmul.mubr.bf16.gmra.mrb[0].mxu0 %v2624
    %v3538 = vpop.f32.mrb[0].mxu0
    %v3539 = vadd.f32 %v2769, %v3538
    %v3540 = vpop.f32.mrb[0].mxu0
    %v3541 = vadd.f32 %v2773, %v3540
    %v3542 = vpop.f32.mrb[0].mxu0
    %v3543 = vadd.f32 %v2769, %v3542
    %v3544 = vpop.f32.mrb[0].mxu0
    %v3545 = vadd.f32 %v2773, %v3544
    %3546 = vdwg.mxu0
    %3547 = vmatprep.subr.bf16.mxu0 %v3229
    %3548 = vmatpush1.bf16.msra.mxu0 %v3228
    %3549 = vmatprep.subr.bf16.mxu0 %v3233
    %3550 = vmatpush1.bf16.msra.mxu0 %v3232
    %3551 = vmatprep.subr.bf16.mxu0 %v3237
    %3552 = vmatpush1.bf16.msra.mxu0 %v3236
    %3553 = vmatprep.subr.bf16.mxu0 %v3241
    %3554 = vmatpush1.bf16.msra.mxu0 %v3240
    %3555 = vmatprep.subr.bf16.mxu0 %v3245
    %3556 = vmatpush1.bf16.msra.mxu0 %v3244
    %3557 = vmatprep.subr.bf16.mxu0 %v3249
    %3558 = vmatpush1.bf16.msra.mxu0 %v3248
    %3559 = vmatprep.subr.bf16.mxu0 %v3253
    %3560 = vmatpush1.bf16.msra.mxu0 %v3252
    %3561 = vmatprep.subr.bf16.mxu0 %v3257
    %3562 = vmatpush1.bf16.msra.mxu0 %v3256
    %3563 = vmatprep.subr.bf16.mxu0 %v3261
    %3564 = vmatpush1.bf16.msra.mxu0 %v3260
    %3565 = vmatprep.subr.bf16.mxu0 %v3265
    %3566 = vmatpush1.bf16.msra.mxu0 %v3264
    %3567 = vmatprep.subr.bf16.mxu0 %v3269
    %3568 = vmatpush1.bf16.msra.mxu0 %v3268
    %3569 = vmatprep.subr.bf16.mxu0 %v3273
    %3570 = vmatpush1.bf16.msra.mxu0 %v3272
    %3571 = vmatprep.subr.bf16.mxu0 %v3277
    %3572 = vmatpush1.bf16.msra.mxu0 %v3276
    %3573 = vmatprep.subr.bf16.mxu0 %v3281
    %3574 = vmatpush1.bf16.msra.mxu0 %v3280
    %3575 = vmatprep.subr.bf16.mxu0 %v3285
    %3576 = vmatpush1.bf16.msra.mxu0 %v3284
    %3577 = vmatprep.subr.bf16.mxu0 %v3289
    %3578 = vmatpush1.bf16.msra.mxu0 %v3288
    %3579 = vmatprep.mubr.bf16.mxu0 %v2627
    %3580 = vmatmul.mubr.bf16.gmra.mrb[0].mxu0 %v2626
    %v3581 = vpop.f32.mrb[0].mxu0
    %v3582 = vadd.f32 %v3539, %v3581
    %v3583 = vpop.f32.mrb[0].mxu0
    %v3584 = vadd.f32 %v3541, %v3583
    %v3585 = vpop.f32.mrb[0].mxu0
    %v3586 = vadd.f32 %v3543, %v3585
    %v3587 = vpop.f32.mrb[0].mxu0
    %v3588 = vadd.f32 %v3545, %v3587
    %3589 = vdwg.mxu0
    %v3590 = vmax.f32 %v3496, 0.0
    %v3591 = vmax.f32 %v3498, 0.0
    %v3592 = vmax.f32 %v3582, 0.0
    %v3593 = vmax.f32 %v3584, 0.0
    %v3594 = vmax.f32 %v3500, 0.0
    %v3595 = vmax.f32 %v3502, 0.0
    %v3596 = vmax.f32 %v3586, 0.0
    %v3597 = vmax.f32 %v3588, 0.0
    %v3598 = vpack.c.bf16 %v3594, %v3590
    %v3599 = vpack.c.bf16 %v3595, %v3591
    %v3600 = vpack.c.bf16 %v3596, %v3592
    %v3601 = vpack.c.bf16 %v3597, %v3593
    %v3602 = vld [vmem:[#allocation7] sm:$0xf]
    %v3603 = vld [vmem:[#allocation7 + $0x4] sm:$0xf]
    %v3604 = vld [vmem:[#allocation7 + $0x8] sm:$0xf]
    %v3605 = vld [vmem:[#allocation7 + $0xc] sm:$0xf]
    %v3606 = vld [vmem:[#allocation7 + $0x10] sm:$0xf]
    %v3607 = vld [vmem:[#allocation7 + $0x14] sm:$0xf]
    %v3608 = vld [vmem:[#allocation7 + $0x18] sm:$0xf]
    %v3609 = vld [vmem:[#allocation7 + $0x1c] sm:$0xf]
    %v3610 = vld [vmem:[#allocation7 + $0x20] sm:$0xf]
    %v3611 = vld [vmem:[#allocation7 + $0x24] sm:$0xf]
    %v3612 = vld [vmem:[#allocation7 + $0x28] sm:$0xf]
    %v3613 = vld [vmem:[#allocation7 + $0x2c] sm:$0xf]
    %v3614 = vld [vmem:[#allocation7 + $0x30] sm:$0xf]
    %v3615 = vld [vmem:[#allocation7 + $0x34] sm:$0xf]
    %v3616 = vld [vmem:[#allocation7 + $0x38] sm:$0xf]
    %v3617 = vld [vmem:[#allocation7 + $0x3c] sm:$0xf]
    %v3618 = vld [vmem:[#allocation7 + $0x40] sm:$0xf]
    %v3619 = vld [vmem:[#allocation7 + $0x44] sm:$0xf]
    %v3620 = vld [vmem:[#allocation7 + $0x48] sm:$0xf]
    %v3621 = vld [vmem:[#allocation7 + $0x4c] sm:$0xf]
    %v3622 = vld [vmem:[#allocation7 + $0x50] sm:$0xf]
    %v3623 = vld [vmem:[#allocation7 + $0x54] sm:$0xf]
    %v3624 = vld [vmem:[#allocation7 + $0x58] sm:$0xf]
    %v3625 = vld [vmem:[#allocation7 + $0x5c] sm:$0xf]
    %v3626 = vld [vmem:[#allocation7 + $0x60] sm:$0xf]
    %v3627 = vld [vmem:[#allocation7 + $0x64] sm:$0xf]
    %v3628 = vld [vmem:[#allocation7 + $0x68] sm:$0xf]
    %v3629 = vld [vmem:[#allocation7 + $0x6c] sm:$0xf]
    %v3630 = vld [vmem:[#allocation7 + $0x70] sm:$0xf]
    %v3631 = vld [vmem:[#allocation7 + $0x74] sm:$0xf]
    %v3632 = vld [vmem:[#allocation7 + $0x78] sm:$0xf]
    %v3633 = vld [vmem:[#allocation7 + $0x7c] sm:$0xf]
    %v3634 = vld [vmem:[#allocation7 + $0x80] sm:$0xf]
    %v3635 = vld [vmem:[#allocation7 + $0x84] sm:$0xf]
    %v3636 = vld [vmem:[#allocation7 + $0x88] sm:$0xf]
    %v3637 = vld [vmem:[#allocation7 + $0x8c] sm:$0xf]
    %v3638 = vld [vmem:[#allocation7 + $0x90] sm:$0xf]
    %v3639 = vld [vmem:[#allocation7 + $0x94] sm:$0xf]
    %v3640 = vld [vmem:[#allocation7 + $0x98] sm:$0xf]
    %v3641 = vld [vmem:[#allocation7 + $0x9c] sm:$0xf]
    %v3642 = vld [vmem:[#allocation7 + $0xa0] sm:$0xf]
    %v3643 = vld [vmem:[#allocation7 + $0xa4] sm:$0xf]
    %v3644 = vld [vmem:[#allocation7 + $0xa8] sm:$0xf]
    %v3645 = vld [vmem:[#allocation7 + $0xac] sm:$0xf]
    %v3646 = vld [vmem:[#allocation7 + $0xb0] sm:$0xf]
    %v3647 = vld [vmem:[#allocation7 + $0xb4] sm:$0xf]
    %v3648 = vld [vmem:[#allocation7 + $0xb8] sm:$0xf]
    %v3649 = vld [vmem:[#allocation7 + $0xbc] sm:$0xf]
    %v3650 = vld [vmem:[#allocation7 + $0xc0] sm:$0xf]
    %v3651 = vld [vmem:[#allocation7 + $0xc4] sm:$0xf]
    %v3652 = vld [vmem:[#allocation7 + $0xc8] sm:$0xf]
    %v3653 = vld [vmem:[#allocation7 + $0xcc] sm:$0xf]
    %v3654 = vld [vmem:[#allocation7 + $0xd0] sm:$0xf]
    %v3655 = vld [vmem:[#allocation7 + $0xd4] sm:$0xf]
    %v3656 = vld [vmem:[#allocation7 + $0xd8] sm:$0xf]
    %v3657 = vld [vmem:[#allocation7 + $0xdc] sm:$0xf]
    %v3658 = vld [vmem:[#allocation7 + $0xe0] sm:$0xf]
    %v3659 = vld [vmem:[#allocation7 + $0xe4] sm:$0xf]
    %v3660 = vld [vmem:[#allocation7 + $0xe8] sm:$0xf]
    %v3661 = vld [vmem:[#allocation7 + $0xec] sm:$0xf]
    %v3662 = vld [vmem:[#allocation7 + $0xf0] sm:$0xf]
    %v3663 = vld [vmem:[#allocation7 + $0xf4] sm:$0xf]
    %v3664 = vld [vmem:[#allocation7 + $0xf8] sm:$0xf]
    %v3665 = vld [vmem:[#allocation7 + $0xfc] sm:$0xf]
    %v3666 = vld [vmem:[%s8] sm:$0x1]
    %v3668 = vlaneseq
    %v3669 = vshrl.u32 %v3668, 7
    %v3670 = vsub.s32 0, %v3669
    %v3671 = vrot.slane %v3666, %v3670
    %v3737 = vunpack.c.l.b16 %v3602
    %v3738 = vunpack.c.l.b16 %v3603
    %v3739 = vunpack.c.l.b16 %v3604
    %v3740 = vunpack.c.l.b16 %v3605
    %v3741 = vunpack.c.l.b16 %v3606
    %v3742 = vunpack.c.l.b16 %v3607
    %v3743 = vunpack.c.l.b16 %v3608
    %v3744 = vunpack.c.l.b16 %v3609
    %v3745 = vunpack.c.l.b16 %v3610
    %v3746 = vunpack.c.l.b16 %v3611
    %v3747 = vunpack.c.l.b16 %v3612
    %v3748 = vunpack.c.l.b16 %v3613
    %v3749 = vunpack.c.l.b16 %v3614
    %v3750 = vunpack.c.l.b16 %v3615
    %v3751 = vunpack.c.l.b16 %v3616
    %v3752 = vunpack.c.l.b16 %v3617
    %v3753 = vunpack.c.l.b16 %v3618
    %v3754 = vunpack.c.l.b16 %v3619
    %v3755 = vunpack.c.l.b16 %v3620
    %v3756 = vunpack.c.l.b16 %v3621
    %v3757 = vunpack.c.l.b16 %v3622
    %v3758 = vunpack.c.l.b16 %v3623
    %v3759 = vunpack.c.l.b16 %v3624
    %v3760 = vunpack.c.l.b16 %v3625
    %v3761 = vunpack.c.l.b16 %v3626
    %v3762 = vunpack.c.l.b16 %v3627
    %v3763 = vunpack.c.l.b16 %v3628
    %v3764 = vunpack.c.l.b16 %v3629
    %v3765 = vunpack.c.l.b16 %v3630
    %v3766 = vunpack.c.l.b16 %v3631
    %v3767 = vunpack.c.l.b16 %v3632
    %v3768 = vunpack.c.l.b16 %v3633
    %v3769 = vunpack.c.l.b16 %v3634
    %v3770 = vunpack.c.l.b16 %v3635
    %v3771 = vunpack.c.l.b16 %v3636
    %v3772 = vunpack.c.l.b16 %v3637
    %v3773 = vunpack.c.l.b16 %v3638
    %v3774 = vunpack.c.l.b16 %v3639
    %v3775 = vunpack.c.l.b16 %v3640
    %v3776 = vunpack.c.l.b16 %v3641
    %v3777 = vunpack.c.l.b16 %v3642
    %v3778 = vunpack.c.l.b16 %v3643
    %v3779 = vunpack.c.l.b16 %v3644
    %v3780 = vunpack.c.l.b16 %v3645
    %v3781 = vunpack.c.l.b16 %v3646
    %v3782 = vunpack.c.l.b16 %v3647
    %v3783 = vunpack.c.l.b16 %v3648
    %v3784 = vunpack.c.l.b16 %v3649
    %v3785 = vunpack.c.l.b16 %v3650
    %v3786 = vunpack.c.l.b16 %v3651
    %v3787 = vunpack.c.l.b16 %v3652
    %v3788 = vunpack.c.l.b16 %v3653
    %v3789 = vunpack.c.l.b16 %v3654
    %v3790 = vunpack.c.l.b16 %v3655
    %v3791 = vunpack.c.l.b16 %v3656
    %v3792 = vunpack.c.l.b16 %v3657
    %v3793 = vunpack.c.l.b16 %v3658
    %v3794 = vunpack.c.l.b16 %v3659
    %v3795 = vunpack.c.l.b16 %v3660
    %v3796 = vunpack.c.l.b16 %v3661
    %v3797 = vunpack.c.l.b16 %v3662
    %v3798 = vunpack.c.l.b16 %v3663
    %v3799 = vunpack.c.l.b16 %v3664
    %v3800 = vunpack.c.l.b16 %v3665
    %v3801 = vpack.c.b16 %v3738, %v3737
    %v3802 = vpack.c.b16 %v3740, %v3739
    %v3803 = vpack.c.b16 %v3742, %v3741
    %v3804 = vpack.c.b16 %v3744, %v3743
    %v3805 = vpack.c.b16 %v3746, %v3745
    %v3806 = vpack.c.b16 %v3748, %v3747
    %v3807 = vpack.c.b16 %v3750, %v3749
    %v3808 = vpack.c.b16 %v3752, %v3751
    %v3809 = vpack.c.b16 %v3754, %v3753
    %v3810 = vpack.c.b16 %v3756, %v3755
    %v3811 = vpack.c.b16 %v3758, %v3757
    %v3812 = vpack.c.b16 %v3760, %v3759
    %v3813 = vpack.c.b16 %v3762, %v3761
    %v3814 = vpack.c.b16 %v3764, %v3763
    %v3815 = vpack.c.b16 %v3766, %v3765
    %v3816 = vpack.c.b16 %v3768, %v3767
    %v3817 = vpack.c.b16 %v3770, %v3769
    %v3818 = vpack.c.b16 %v3772, %v3771
    %v3819 = vpack.c.b16 %v3774, %v3773
    %v3820 = vpack.c.b16 %v3776, %v3775
    %v3821 = vpack.c.b16 %v3778, %v3777
    %v3822 = vpack.c.b16 %v3780, %v3779
    %v3823 = vpack.c.b16 %v3782, %v3781
    %v3824 = vpack.c.b16 %v3784, %v3783
    %v3825 = vpack.c.b16 %v3786, %v3785
    %v3826 = vpack.c.b16 %v3788, %v3787
    %v3827 = vpack.c.b16 %v3790, %v3789
    %v3828 = vpack.c.b16 %v3792, %v3791
    %v3829 = vpack.c.b16 %v3794, %v3793
    %v3830 = vpack.c.b16 %v3796, %v3795
    %v3831 = vpack.c.b16 %v3798, %v3797
    %v3832 = vpack.c.b16 %v3800, %v3799
    %3865 = vmatprep.subr.bf16.mxu0 0
    %3866 = vmatpush1.bf16.msra.mxu0 %v3801
    %3867 = vmatprep.subr.bf16.mxu0 0
    %3868 = vmatpush1.bf16.msra.mxu0 %v3802
    %3869 = vmatprep.subr.bf16.mxu0 0
    %3870 = vmatpush1.bf16.msra.mxu0 %v3803
    %3871 = vmatprep.subr.bf16.mxu0 0
    %3872 = vmatpush1.bf16.msra.mxu0 %v3804
    %3873 = vmatprep.subr.bf16.mxu0 0
    %3874 = vmatpush1.bf16.msra.mxu0 %v3805
    %3875 = vmatprep.subr.bf16.mxu0 0
    %3876 = vmatpush1.bf16.msra.mxu0 %v3806
    %3877 = vmatprep.subr.bf16.mxu0 0
    %3878 = vmatpush1.bf16.msra.mxu0 %v3807
    %3879 = vmatprep.subr.bf16.mxu0 0
    %3880 = vmatpush1.bf16.msra.mxu0 %v3808
    %3881 = vmatprep.subr.bf16.mxu0 0
    %3882 = vmatpush1.bf16.msra.mxu0 %v3809
    %3883 = vmatprep.subr.bf16.mxu0 0
    %3884 = vmatpush1.bf16.msra.mxu0 %v3810
    %3885 = vmatprep.subr.bf16.mxu0 0
    %3886 = vmatpush1.bf16.msra.mxu0 %v3811
    %3887 = vmatprep.subr.bf16.mxu0 0
    %3888 = vmatpush1.bf16.msra.mxu0 %v3812
    %3889 = vmatprep.subr.bf16.mxu0 0
    %3890 = vmatpush1.bf16.msra.mxu0 %v3813
    %3891 = vmatprep.subr.bf16.mxu0 0
    %3892 = vmatpush1.bf16.msra.mxu0 %v3814
    %3893 = vmatprep.subr.bf16.mxu0 0
    %3894 = vmatpush1.bf16.msra.mxu0 %v3815
    %3895 = vmatprep.subr.bf16.mxu0 0
    %3896 = vmatpush1.bf16.msra.mxu0 %v3816
    %3897 = vmatprep.mubr.bf16.mxu0 %v3599
    %3898 = vmatmul.mubr.bf16.gmra.mrb[0].mxu0 %v3598
    %v3899 = vpop.f32.mrb[0].mxu0
    %v3900 = vadd.f32 %v3671, %v3899
    %v3901 = vpop.f32.mrb[0].mxu0
    %v3902 = vpop.f32.mrb[0].mxu0
    %v3903 = vadd.f32 %v3671, %v3902
    %v3904 = vpop.f32.mrb[0].mxu0
    %3905 = vdwg.mxu0
    %3906 = vmatprep.subr.bf16.mxu0 0
    %3907 = vmatpush1.bf16.msra.mxu0 %v3817
    %3908 = vmatprep.subr.bf16.mxu0 0
    %3909 = vmatpush1.bf16.msra.mxu0 %v3818
    %3910 = vmatprep.subr.bf16.mxu0 0
    %3911 = vmatpush1.bf16.msra.mxu0 %v3819
    %3912 = vmatprep.subr.bf16.mxu0 0
    %3913 = vmatpush1.bf16.msra.mxu0 %v3820
    %3914 = vmatprep.subr.bf16.mxu0 0
    %3915 = vmatpush1.bf16.msra.mxu0 %v3821
    %3916 = vmatprep.subr.bf16.mxu0 0
    %3917 = vmatpush1.bf16.msra.mxu0 %v3822
    %3918 = vmatprep.subr.bf16.mxu0 0
    %3919 = vmatpush1.bf16.msra.mxu0 %v3823
    %3920 = vmatprep.subr.bf16.mxu0 0
    %3921 = vmatpush1.bf16.msra.mxu0 %v3824
    %3922 = vmatprep.subr.bf16.mxu0 0
    %3923 = vmatpush1.bf16.msra.mxu0 %v3825
    %3924 = vmatprep.subr.bf16.mxu0 0
    %3925 = vmatpush1.bf16.msra.mxu0 %v3826
    %3926 = vmatprep.subr.bf16.mxu0 0
    %3927 = vmatpush1.bf16.msra.mxu0 %v3827
    %3928 = vmatprep.subr.bf16.mxu0 0
    %3929 = vmatpush1.bf16.msra.mxu0 %v3828
    %3930 = vmatprep.subr.bf16.mxu0 0
    %3931 = vmatpush1.bf16.msra.mxu0 %v3829
    %3932 = vmatprep.subr.bf16.mxu0 0
    %3933 = vmatpush1.bf16.msra.mxu0 %v3830
    %3934 = vmatprep.subr.bf16.mxu0 0
    %3935 = vmatpush1.bf16.msra.mxu0 %v3831
    %3936 = vmatprep.subr.bf16.mxu0 0
    %3937 = vmatpush1.bf16.msra.mxu0 %v3832
    %3938 = vmatprep.mubr.bf16.mxu0 %v3601
    %3939 = vmatmul.mubr.bf16.gmra.mrb[0].mxu0 %v3600
    %v3940 = vpop.f32.mrb[0].mxu0
    %v3941 = vadd.f32 %v3900, %v3940
    %v3942 = vpop.f32.mrb[0].mxu0
    %v3943 = vpop.f32.mrb[0].mxu0
    %v3944 = vadd.f32 %v3903, %v3943
    %v3945 = vpop.f32.mrb[0].mxu0
    %3946 = vdwg.mxu0
    %3947 = vst [vmem:[#allocation8] sm:$0xff] %v3941
    %3948 = vst [vmem:[#allocation8 + $0x8] sm:$0xff] %v3944
    // Predicated region
    $region50: #{medium_mlp_forward.1} parent=1 // pred_check
      _
    $region51: #{medium_mlp_forward.1} parent=1 // pred_check_branch
      %3950 = sbr.rel (0) target = $region53
    $region52: #{medium_mlp_forward.1} parent=1 // pred_region
      %s3952 = ssub.s32 256, 256
      %3953 = vsyncadd [#allocation4], %s3952
      %s3954 = sshll.u32 [#allocation8], 4
      %s3955 = int_to_ptr.vmem [resolvable:$true] %s3954
      %3960 = dma.vmem_to_hbm [thread:$0]  %s3955, 256, %s9, [#allocation4], 128, 128, 8
    $region53: #{medium_mlp_forward.1} parent=1 // pred_fallthru
      _
    // Predicated region
    $region54: #{medium_mlp_forward.1} parent=1 // pred_check
      _
    $region55: #{medium_mlp_forward.1} parent=1 // pred_check_branch
      %3962 = sbr.rel (0) target = $region57
    $region56: #{medium_mlp_forward.1} parent=1 // pred_region
      %3963 = dma.done [#allocation4], 256
    $region57: #{medium_mlp_forward.1} parent=1 // pred_fallthru
      _
    %3964 = vsyncpa [#allocation3], 1
    %3965 = vsyncpa [#allocation6], 1
    %3966 = vsyncpa [#allocation4], 1

</llo_original>
